<compile_context>
chip_gen: v7x
topology: tpu7x:2x2x1
jax: 0.10.0
libtpu: 0.0.40
codegen_flags: <defaults>
</compile_context>

<pallas_src>
import jax
import jax.numpy as jnp
from jax.experimental import pallas as pl
from jax.experimental.pallas import tpu as pltpu

B, T, D = 2, 16, 64
NHEADS = 4
HEAD_DIM = D // NHEADS
FFN_DIM = 4 * D
KCONV = 31                 # torchaudio conformer depthwise_conv_kernel_size
PAD = (KCONV - 1) // 2
EPS = 1e-5

# Padded depthwise-conv buffer: rows 0..15 zero | batch0 | zero | batch1 | zero
# Output row r = sum_k yp[r + k + 1] * w[k]; batch0 out rows 0..15 read rows
# 1..46, batch1 out rows 32..47 read rows 33..78  ->  NPAD = 80.
NPAD = 5 * T

# ---- packed parameter layout -------------------------------------------------
# vecs: (NVEC, FFN_DIM) row table of all LN scales / biases (zero padded)
(V_F1_LNW, V_F1_LNB, V_F1_B1, V_F1_B2,
 V_F2_LNW, V_F2_LNB, V_F2_B1, V_F2_B2,
 V_C_LNW, V_C_LNB, V_C_BP1V, V_C_BP1G, V_C_BDW, V_C_GNW, V_C_GNB, V_C_BP2,
 V_A_LNW, V_A_LNB, V_A_BQKV, V_A_BO,
 V_FL_W, V_FL_B) = range(22)
NVEC = 24                                    # pad to multiple of 8 sublanes

# w_in: (D, 704) = [ f1_w1 | f2_w1 | wqkv ] along columns (128-aligned starts)
C_F1W1, C_F2W1, C_WQKV = 0, FFN_DIM, 2 * FFN_DIM
# w_out: (512, D) = [ f1_w2 ; f2_w2 ] along rows
R_F1W2, R_F2W2 = 0, FFN_DIM
# w_sq: (288, D) = [ wp1_val ; wp1_gate ; wp2 ; wo ; wdw ; zero-pad ] along rows
R_WP1V, R_WP1G, R_WP2, R_WO, R_WDW = 0, D, 2 * D, 3 * D, 4 * D


# ------------------------- fused Pallas kernel -------------------------

def conformer_kernel(x_ref, vecs_ref, w_in_ref, w_out_ref, w_sq_ref, o_ref):
    """Full Conformer layer on the batch-folded (B*T, D) activation."""
    x = x_ref[...]                                         # (B*T, D)

    def vrow(i, w=D):
        return vecs_ref[i, :w]

    def layernorm(v, iw, ib):
        mu = jnp.mean(v, axis=-1, keepdims=True)
        var = jnp.mean((v - mu) ** 2, axis=-1, keepdims=True)
        return (v - mu) * jax.lax.rsqrt(var + EPS) * vrow(iw) + vrow(ib)

    def silu(v):
        return v * jax.nn.sigmoid(v)

    def ffn_half(v, col0, row0, ib1, ib2, ilnw, ilnb):
        """v + 0.5 * FFN(LN(v)) with SiLU activation."""
        vn = layernorm(v, ilnw, ilnb)
        h = jnp.dot(vn, w_in_ref[:, col0:col0 + FFN_DIM],
                    preferred_element_type=jnp.float32) + vecs_ref[ib1, :]
        h = silu(h)
        out = jnp.dot(h, w_out_ref[row0:row0 + FFN_DIM, :],
                      preferred_element_type=jnp.float32) + vrow(ib2)
        return v + 0.5 * out

    # ---------------- FFN1 (half-step residual) ----------------
    x = ffn_half(x, C_F1W1, R_F1W2, V_F1_B1, V_F1_B2, V_F1_LNW, V_F1_LNB)

    # ---------------- Convolution module ----------------
    # LN -> pointwise (two D->D matmuls = GLU halves) -> depthwise conv (K=31)
    #    -> GroupNorm(1 group, per batch) -> SiLU -> pointwise -> + residual
    xn = layernorm(x, V_C_LNW, V_C_LNB)
    val = jnp.dot(xn, w_sq_ref[R_WP1V:R_WP1V + D, :],
                  preferred_element_type=jnp.float32) + vrow(V_C_BP1V)
    gate = jnp.dot(xn, w_sq_ref[R_WP1G:R_WP1G + D, :],
                   preferred_element_type=jnp.float32) + vrow(V_C_BP1G)
    y = val * jax.nn.sigmoid(gate)                         # GLU, (B*T, D)

    # zero-separated padded buffer, all pieces 16-row (vreg) aligned
    z = jnp.zeros((T, D), jnp.float32)
    yp = jnp.concatenate([z, y[0:T], z, y[T:2 * T], z], axis=0)   # (NPAD, D)
    taps = w_sq_ref[R_WDW:R_WDW + KCONV, :]                # (KCONV, D), one load
    acc = jnp.zeros((NPAD, D), jnp.float32)
    for kk in range(KCONV):                                # static tap loop
        # shifted[r] = yp[r + kk + 1]  (XLU roll, no unaligned sublane slices)
        shifted = pltpu.roll(yp, NPAD - (kk + 1), 0)
        acc = acc + shifted * taps[kk]

    bdw, gnw, gnb = vrow(V_C_BDW), vrow(V_C_GNW), vrow(V_C_GNB)
    parts = []
    for b in range(B):                                     # per-batch GroupNorm stats
        yb = acc[b * 2 * T:b * 2 * T + T, :] + bdw         # aligned 16-row slices
        mu = jnp.mean(yb)
        var = jnp.mean((yb - mu) ** 2)
        parts.append((yb - mu) * jax.lax.rsqrt(var + EPS) * gnw + gnb)
    y = jnp.concatenate(parts, axis=0)                     # (B*T, D)
    y = silu(y)
    y = jnp.dot(y, w_sq_ref[R_WP2:R_WP2 + D, :],
                preferred_element_type=jnp.float32) + vrow(V_C_BP2)
    x = x + y

    # ---------------- MHSA ----------------
    xn = layernorm(x, V_A_LNW, V_A_LNB)
    qkv = jnp.dot(xn, w_in_ref[:, C_WQKV:C_WQKV + 3 * D],
                  preferred_element_type=jnp.float32) + vrow(V_A_BQKV, 3 * D)
    wo = w_sq_ref[R_WO:R_WO + D, :]                        # (D, D)
    scale = 1.0 / (HEAD_DIM ** 0.5)
    attn_parts = []
    for b in range(B):                                     # static batch loop
        r0 = b * T
        acc_b = jnp.zeros((T, D), jnp.float32)
        for h in range(NHEADS):                            # static head loop
            c0 = h * HEAD_DIM
            qh = qkv[r0:r0 + T, c0:c0 + HEAD_DIM]
            kh = qkv[r0:r0 + T, D + c0:D + c0 + HEAD_DIM]
            vh = qkv[r0:r0 + T, 2 * D + c0:2 * D + c0 + HEAD_DIM]
            # contract last dims directly (no kh.T relayout)
            s = jax.lax.dot_general(qh, kh, (((1,), (1,)), ((), ())),
                                    preferred_element_type=jnp.float32) * scale
            s = s - jnp.max(s, axis=-1, keepdims=True)
            p = jnp.exp(s)
            p = p * pl.reciprocal(jnp.sum(p, axis=-1, keepdims=True), approx=True)
            oh = jnp.dot(p, vh, preferred_element_type=jnp.float32)
            # per-head W_o accumulation against an aligned row slice (no concat)
            acc_b = acc_b + jnp.dot(oh, wo[c0:c0 + HEAD_DIM, :],
                                    preferred_element_type=jnp.float32)
        attn_parts.append(acc_b)
    x = x + jnp.concatenate(attn_parts, axis=0) + vrow(V_A_BO)

    # ---------------- FFN2 (half-step residual) ----------------
    x = ffn_half(x, C_F2W1, R_F2W2, V_F2_B1, V_F2_B2, V_F2_LNW, V_F2_LNB)

    # ---------------- Final LayerNorm ----------------
    o_ref[...] = layernorm(x, V_FL_W, V_FL_B)


# ------------------------- pallas_call wrapper -------------------------

def conformer_layer_pallas(x, packed):
    """x: (B, T, D).  packed = (vecs, w_in, w_out, w_sq)."""
    vecs, w_in, w_out, w_sq = packed
    x2 = x.reshape(B * T, D)                 # free wrapper-side reshape
    out = pl.pallas_call(
        conformer_kernel,
        out_shape=jax.ShapeDtypeStruct((B * T, D), jnp.float32),
        # single invocation, no grid: whole-array VMEM blocks, no pipeline
        # overhead and single-buffered weights.
    )(x2, vecs, w_in, w_out, w_sq)
    return out.reshape(B, T, D)


# ------------------------- parameter packing -------------------------

def pack_params(p):
    f1_lnw, f1_lnb, f1_w1, f1_b1, f1_w2, f1_b2 = p['ffn1']
    f2_lnw, f2_lnb, f2_w1, f2_b1, f2_w2, f2_b2 = p['ffn2']
    c_lnw, c_lnb, c_wp1, c_bp1, c_wdw, c_bdw, c_gnw, c_gnb, c_wp2, c_bp2 = p['conv']
    a_lnw, a_lnb, a_wqkv, a_bqkv, a_wo, a_bo = p['attn']
    fl_w, fl_b = p['final_ln']

    def row(v):                              # (1, W) -> (1, FFN_DIM) zero-padded
        return jnp.pad(v, ((0, 0), (0, FFN_DIM - v.shape[1])))

    vec_rows = [
        f1_lnw, f1_lnb, f1_b1, f1_b2,
        f2_lnw, f2_lnb, f2_b1, f2_b2,
        c_lnw, c_lnb, c_bp1[:, :D], c_bp1[:, D:], c_bdw, c_gnw, c_gnb, c_bp2,
        a_lnw, a_lnb, a_bqkv, a_bo,
        fl_w, fl_b,
    ]
    vecs = jnp.concatenate([row(v) for v in vec_rows], axis=0)
    vecs = jnp.pad(vecs, ((0, NVEC - vecs.shape[0]), (0, 0)))          # (24, 256)

    w_in = jnp.concatenate([f1_w1, f2_w1, a_wqkv], axis=1)             # (64, 704)
    w_out = jnp.concatenate([f1_w2, f2_w2], axis=0)                    # (512, 64)
    w_sq = jnp.concatenate(
        [c_wp1[:, :D], c_wp1[:, D:], c_wp2, a_wo, c_wdw,
         jnp.zeros((1, D), jnp.float32)], axis=0)                      # (288, 64)
    return vecs, w_in, w_out, w_sq


# ------------------------- deterministic param init -------------------------

def init_params(key):
    ks = iter(jax.random.split(key, 40))

    def dense(fan_in, fan_out, scale=0.05):
        w = jax.random.normal(next(ks), (fan_in, fan_out), jnp.float32) * scale
        b = jax.random.normal(next(ks), (1, fan_out), jnp.float32) * 0.01
        return w, b

    def ln():
        w = 1.0 + 0.1 * jax.random.normal(next(ks), (1, D), jnp.float32)
        b = 0.01 * jax.random.normal(next(ks), (1, D), jnp.float32)
        return w, b

    params = {}
    l1w, l1b = ln(); w1, b1 = dense(D, FFN_DIM); w2, b2 = dense(FFN_DIM, D)
    params['ffn1'] = (l1w, l1b, w1, b1, w2, b2)
    l2w, l2b = ln(); w3, b3 = dense(D, FFN_DIM); w4, b4 = dense(FFN_DIM, D)
    params['ffn2'] = (l2w, l2b, w3, b3, w4, b4)

    law, lab = ln()
    wq, bq = dense(D, D); wk, bk = dense(D, D)
    wv, bv = dense(D, D); wo, bo = dense(D, D)
    wqkv = jnp.concatenate([wq, wk, wv], axis=1)            # (D, 3D) fused QKV
    bqkv = jnp.concatenate([bq, bk, bv], axis=1)            # (1, 3D)
    params['attn'] = (law, lab, wqkv, bqkv, wo, bo)

    lcw, lcb = ln()
    wp1, bp1 = dense(D, 2 * D)
    wdw = jax.random.normal(next(ks), (KCONV, D), jnp.float32) * 0.05
    bdw = jax.random.normal(next(ks), (1, D), jnp.float32) * 0.01
    gnw, gnb = ln()
    wp2, bp2 = dense(D, D)
    params['conv'] = (lcw, lcb, wp1, bp1, wdw, bdw, gnw, gnb, wp2, bp2)

    lfw, lfb = ln()
    params['final_ln'] = (lfw, lfb)
    return params


# ------------------------- pure-JAX reference -------------------------

def ref_layer(x, p):
    def ln(x, w, b):
        mu = x.mean(-1, keepdims=True)
        var = ((x - mu) ** 2).mean(-1, keepdims=True)
        return (x - mu) / jnp.sqrt(var + EPS) * w[0] + b[0]

    def ffn(x, ps):
        lw, lb, w1, b1, w2, b2 = ps
        h = jax.nn.silu(ln(x, lw, lb) @ w1 + b1[0])
        return x + 0.5 * (h @ w2 + b2[0])

    def conv(x, ps):
        lw, lb, wp1, bp1, wdw, bdw, gnw, gnb, wp2, bp2 = ps
        y = ln(x, lw, lb) @ wp1 + bp1[0]
        y = y[..., :D] * jax.nn.sigmoid(y[..., D:])
        yp = jnp.pad(y, ((0, 0), (PAD, PAD), (0, 0)))
        dw = jnp.zeros_like(y)
        for kk in range(KCONV):
            dw = dw + yp[:, kk:kk + T, :] * wdw[kk]
        y = dw + bdw[0]
        mu = y.mean(axis=(1, 2), keepdims=True)
        var = ((y - mu) ** 2).mean(axis=(1, 2), keepdims=True)
        y = (y - mu) / jnp.sqrt(var + EPS) * gnw[0] + gnb[0]
        y = jax.nn.silu(y)
        return x + (y @ wp2 + bp2[0])

    def attn(x, ps):
        lw, lb, wqkv, bqkv, wo, bo = ps
        xn = ln(x, lw, lb)
        qkv = xn @ wqkv + bqkv[0]
        q = qkv[..., :D].reshape(B, T, NHEADS, HEAD_DIM)
        k = qkv[..., D:2 * D].reshape(B, T, NHEADS, HEAD_DIM)
        v = qkv[..., 2 * D:].reshape(B, T, NHEADS, HEAD_DIM)
        s = jnp.einsum('bthd,bshd->bhts', q, k) / jnp.sqrt(HEAD_DIM)
        pmat = jax.nn.softmax(s, axis=-1)
        o = jnp.einsum('bhts,bshd->bthd', pmat, v).reshape(B, T, D)
        return x + (o @ wo + bo[0])

    x = ffn(x, p['ffn1'])
    x = conv(x, p['conv'])
    x = attn(x, p['attn'])
    x = ffn(x, p['ffn2'])
    lw, lb = p['final_ln']
    return ln(x, lw, lb)


# ------------------------- main -------------------------

if __name__ == "__main__":
    key = jax.random.PRNGKey(0)
    kx, kp = jax.random.split(key)
    x = jax.random.normal(kx, (B, T, D), jnp.float32)
    params = init_params(kp)
    packed = pack_params(params)

    out = jax.jit(conformer_layer_pallas)(x, packed)
    out = jax.block_until_ready(out)

    ref = ref_layer(x, params)
    assert out.shape == (B, T, D)
    max_err = float(jnp.max(jnp.abs(out - ref)))
    assert jnp.allclose(out, ref, atol=2e-3, rtol=2e-3), f"max_err={max_err}"
    print("KERNEL_OK")
</pallas_src>

<mosaic_0001>
module attributes {stable_mosaic.version = 11 : i64} {
  func.func @conformer_kernel(%arg0: memref<32x64xf32, #tpu.memory_space<vmem>>, %arg1: memref<24x256xf32, #tpu.memory_space<vmem>>, %arg2: memref<64x704xf32, #tpu.memory_space<vmem>>, %arg3: memref<512x64xf32, #tpu.memory_space<vmem>>, %arg4: memref<288x64xf32, #tpu.memory_space<vmem>>, %arg5: memref<32x64xf32, #tpu.memory_space<vmem>>) attributes {dimension_semantics = [], scalar_prefetch = 0 : i64, scratch_operands = 0 : i64, tpu.core_type = #tpu.core_type<tc>} {
    %c0 = arith.constant 0 : index
    %c0_0 = arith.constant 0 : index
    %0 = vector.load %arg0[%c0, %c0_0] : memref<32x64xf32, #tpu.memory_space<vmem>>, vector<32x64xf32>
    %cst = arith.constant dense<0.000000e+00> : vector<32xf32>
    %1 = vector.multi_reduction <add>, %0, %cst [1] : vector<32x64xf32> to vector<32xf32>
    %2 = vector.shape_cast %1 : vector<32xf32> to vector<32x1xf32>
    %cst_1 = arith.constant 6.400000e+01 : f32
    %3 = vector.broadcast %cst_1 : f32 to vector<32x1xf32>
    %4 = arith.divf %2, %3 : vector<32x1xf32>
    %5 = vector.broadcast %4 : vector<32x1xf32> to vector<32x64xf32>
    %6 = arith.subf %0, %5 : vector<32x64xf32>
    %7 = arith.mulf %6, %6 : vector<32x64xf32>
    %cst_2 = arith.constant dense<0.000000e+00> : vector<32xf32>
    %8 = vector.multi_reduction <add>, %7, %cst_2 [1] : vector<32x64xf32> to vector<32xf32>
    %9 = vector.shape_cast %8 : vector<32xf32> to vector<32x1xf32>
    %cst_3 = arith.constant 6.400000e+01 : f32
    %10 = vector.broadcast %cst_3 : f32 to vector<32x1xf32>
    %11 = arith.divf %9, %10 : vector<32x1xf32>
    %12 = vector.broadcast %4 : vector<32x1xf32> to vector<32x64xf32>
    %13 = arith.subf %0, %12 : vector<32x64xf32>
    %cst_4 = arith.constant 9.99999974E-6 : f32
    %14 = vector.broadcast %cst_4 : f32 to vector<32x1xf32>
    %15 = arith.addf %11, %14 : vector<32x1xf32>
    %16 = math.rsqrt %15 : vector<32x1xf32>
    %17 = vector.broadcast %16 : vector<32x1xf32> to vector<32x64xf32>
    %18 = arith.mulf %13, %17 : vector<32x64xf32>
    %c0_5 = arith.constant 0 : index
    %c0_6 = arith.constant 0 : index
    %19 = vector.load %arg1[%c0_5, %c0_6] : memref<24x256xf32, #tpu.memory_space<vmem>>, vector<1x64xf32>
    %20 = vector.shape_cast %19 : vector<1x64xf32> to vector<64xf32>
    %21 = vector.shape_cast %20 : vector<64xf32> to vector<1x64xf32>
    %22 = vector.broadcast %21 : vector<1x64xf32> to vector<32x64xf32>
    %23 = arith.mulf %18, %22 : vector<32x64xf32>
    %c1 = arith.constant 1 : index
    %c0_7 = arith.constant 0 : index
    %24 = vector.load %arg1[%c1, %c0_7] : memref<24x256xf32, #tpu.memory_space<vmem>>, vector<1x64xf32>
    %25 = vector.shape_cast %24 : vector<1x64xf32> to vector<64xf32>
    %26 = vector.shape_cast %25 : vector<64xf32> to vector<1x64xf32>
    %27 = vector.broadcast %26 : vector<1x64xf32> to vector<32x64xf32>
    %28 = arith.addf %23, %27 : vector<32x64xf32>
    %c0_8 = arith.constant 0 : index
    %c0_9 = arith.constant 0 : index
    %29 = vector.load %arg2[%c0_8, %c0_9] : memref<64x704xf32, #tpu.memory_space<vmem>>, vector<64x256xf32>
    %cst_10 = arith.constant dense<0.000000e+00> : vector<32x256xf32>
    %30 = tpu.matmul %28, %29, %cst_10 {dimension_numbers = #tpu.dot_dimension_numbers<[1], [0], [0], [1], [0, 0, 1, 1], [], []>} : vector<32x64xf32>, vector<64x256xf32>, vector<32x256xf32> -> vector<32x256xf32>
    %c2 = arith.constant 2 : index
    %c0_11 = arith.constant 0 : index
    %31 = vector.load %arg1[%c2, %c0_11] : memref<24x256xf32, #tpu.memory_space<vmem>>, vector<1x256xf32>
    %32 = vector.shape_cast %31 : vector<1x256xf32> to vector<256xf32>
    %33 = vector.shape_cast %32 : vector<256xf32> to vector<1x256xf32>
    %34 = vector.broadcast %33 : vector<1x256xf32> to vector<32x256xf32>
    %35 = arith.addf %30, %34 : vector<32x256xf32>
    %36 = arith.negf %35 : vector<32x256xf32>
    %37 = math.exp %36 : vector<32x256xf32>
    %cst_12 = arith.constant 1.000000e+00 : f32
    %38 = vector.broadcast %cst_12 : f32 to vector<32x256xf32>
    %39 = arith.addf %38, %37 : vector<32x256xf32>
    %40 = arith.divf %38, %39 : vector<32x256xf32>
    %41 = arith.mulf %35, %40 : vector<32x256xf32>
    %c0_13 = arith.constant 0 : index
    %c0_14 = arith.constant 0 : index
    %42 = vector.load %arg3[%c0_13, %c0_14] : memref<512x64xf32, #tpu.memory_space<vmem>>, vector<256x64xf32>
    %cst_15 = arith.constant dense<0.000000e+00> : vector<32x64xf32>
    %43 = tpu.matmul %41, %42, %cst_15 {dimension_numbers = #tpu.dot_dimension_numbers<[1], [0], [0], [1], [0, 0, 1, 1], [], []>} : vector<32x256xf32>, vector<256x64xf32>, vector<32x64xf32> -> vector<32x64xf32>
    %c3 = arith.constant 3 : index
    %c0_16 = arith.constant 0 : index
    %44 = vector.load %arg1[%c3, %c0_16] : memref<24x256xf32, #tpu.memory_space<vmem>>, vector<1x64xf32>
    %45 = vector.shape_cast %44 : vector<1x64xf32> to vector<64xf32>
    %46 = vector.shape_cast %45 : vector<64xf32> to vector<1x64xf32>
    %47 = vector.broadcast %46 : vector<1x64xf32> to vector<32x64xf32>
    %48 = arith.addf %43, %47 : vector<32x64xf32>
    %cst_17 = arith.constant 5.000000e-01 : f32
    %49 = vector.broadcast %cst_17 : f32 to vector<32x64xf32>
    %50 = arith.mulf %49, %48 : vector<32x64xf32>
    %51 = arith.addf %0, %50 : vector<32x64xf32>
    %cst_18 = arith.constant dense<0.000000e+00> : vector<32xf32>
    %52 = vector.multi_reduction <add>, %51, %cst_18 [1] : vector<32x64xf32> to vector<32xf32>
    %53 = vector.shape_cast %52 : vector<32xf32> to vector<32x1xf32>
    %cst_19 = arith.constant 6.400000e+01 : f32
    %54 = vector.broadcast %cst_19 : f32 to vector<32x1xf32>
    %55 = arith.divf %53, %54 : vector<32x1xf32>
    %56 = vector.broadcast %55 : vector<32x1xf32> to vector<32x64xf32>
    %57 = arith.subf %51, %56 : vector<32x64xf32>
    %58 = arith.mulf %57, %57 : vector<32x64xf32>
    %cst_20 = arith.constant dense<0.000000e+00> : vector<32xf32>
    %59 = vector.multi_reduction <add>, %58, %cst_20 [1] : vector<32x64xf32> to vector<32xf32>
    %60 = vector.shape_cast %59 : vector<32xf32> to vector<32x1xf32>
    %cst_21 = arith.constant 6.400000e+01 : f32
    %61 = vector.broadcast %cst_21 : f32 to vector<32x1xf32>
    %62 = arith.divf %60, %61 : vector<32x1xf32>
    %63 = vector.broadcast %55 : vector<32x1xf32> to vector<32x64xf32>
    %64 = arith.subf %51, %63 : vector<32x64xf32>
    %cst_22 = arith.constant 9.99999974E-6 : f32
    %65 = vector.broadcast %cst_22 : f32 to vector<32x1xf32>
    %66 = arith.addf %62, %65 : vector<32x1xf32>
    %67 = math.rsqrt %66 : vector<32x1xf32>
    %68 = vector.broadcast %67 : vector<32x1xf32> to vector<32x64xf32>
    %69 = arith.mulf %64, %68 : vector<32x64xf32>
    %c8 = arith.constant 8 : index
    %c0_23 = arith.constant 0 : index
    %70 = vector.load %arg1[%c8, %c0_23] : memref<24x256xf32, #tpu.memory_space<vmem>>, vector<1x64xf32>
    %71 = vector.shape_cast %70 : vector<1x64xf32> to vector<64xf32>
    %72 = vector.shape_cast %71 : vector<64xf32> to vector<1x64xf32>
    %73 = vector.broadcast %72 : vector<1x64xf32> to vector<32x64xf32>
    %74 = arith.mulf %69, %73 : vector<32x64xf32>
    %c9 = arith.constant 9 : index
    %c0_24 = arith.constant 0 : index
    %75 = vector.load %arg1[%c9, %c0_24] : memref<24x256xf32, #tpu.memory_space<vmem>>, vector<1x64xf32>
    %76 = vector.shape_cast %75 : vector<1x64xf32> to vector<64xf32>
    %77 = vector.shape_cast %76 : vector<64xf32> to vector<1x64xf32>
    %78 = vector.broadcast %77 : vector<1x64xf32> to vector<32x64xf32>
    %79 = arith.addf %74, %78 : vector<32x64xf32>
    %c0_25 = arith.constant 0 : index
    %c0_26 = arith.constant 0 : index
    %80 = vector.load %arg4[%c0_25, %c0_26] : memref<288x64xf32, #tpu.memory_space<vmem>>, vector<64x64xf32>
    %cst_27 = arith.constant dense<0.000000e+00> : vector<32x64xf32>
    %81 = tpu.matmul %79, %80, %cst_27 {dimension_numbers = #tpu.dot_dimension_numbers<[1], [0], [0], [1], [0, 0, 1, 1], [], []>} : vector<32x64xf32>, vector<64x64xf32>, vector<32x64xf32> -> vector<32x64xf32>
    %c10 = arith.constant 10 : index
    %c0_28 = arith.constant 0 : index
    %82 = vector.load %arg1[%c10, %c0_28] : memref<24x256xf32, #tpu.memory_space<vmem>>, vector<1x64xf32>
    %83 = vector.shape_cast %82 : vector<1x64xf32> to vector<64xf32>
    %84 = vector.shape_cast %83 : vector<64xf32> to vector<1x64xf32>
    %85 = vector.broadcast %84 : vector<1x64xf32> to vector<32x64xf32>
    %86 = arith.addf %81, %85 : vector<32x64xf32>
    %c64 = arith.constant 64 : index
    %c0_29 = arith.constant 0 : index
    %87 = vector.load %arg4[%c64, %c0_29] : memref<288x64xf32, #tpu.memory_space<vmem>>, vector<64x64xf32>
    %cst_30 = arith.constant dense<0.000000e+00> : vector<32x64xf32>
    %88 = tpu.matmul %79, %87, %cst_30 {dimension_numbers = #tpu.dot_dimension_numbers<[1], [0], [0], [1], [0, 0, 1, 1], [], []>} : vector<32x64xf32>, vector<64x64xf32>, vector<32x64xf32> -> vector<32x64xf32>
    %c11 = arith.constant 11 : index
    %c0_31 = arith.constant 0 : index
    %89 = vector.load %arg1[%c11, %c0_31] : memref<24x256xf32, #tpu.memory_space<vmem>>, vector<1x64xf32>
    %90 = vector.shape_cast %89 : vector<1x64xf32> to vector<64xf32>
    %91 = vector.shape_cast %90 : vector<64xf32> to vector<1x64xf32>
    %92 = vector.broadcast %91 : vector<1x64xf32> to vector<32x64xf32>
    %93 = arith.addf %88, %92 : vector<32x64xf32>
    %94 = arith.negf %93 : vector<32x64xf32>
    %95 = math.exp %94 : vector<32x64xf32>
    %cst_32 = arith.constant 1.000000e+00 : f32
    %96 = vector.broadcast %cst_32 : f32 to vector<32x64xf32>
    %97 = arith.addf %96, %95 : vector<32x64xf32>
    %98 = arith.divf %96, %97 : vector<32x64xf32>
    %99 = arith.mulf %86, %98 : vector<32x64xf32>
    %cst_33 = arith.constant 0.000000e+00 : f32
    %100 = vector.broadcast %cst_33 : f32 to vector<16x64xf32>
    %101 = vector.extract_strided_slice %99 {offsets = [0, 0], sizes = [16, 64], strides = [1, 1]} : vector<32x64xf32> to vector<16x64xf32>
    %102 = vector.extract_strided_slice %99 {offsets = [16, 0], sizes = [16, 64], strides = [1, 1]} : vector<32x64xf32> to vector<16x64xf32>
    %103 = tpu.concatenate %100, %101, %100, %102, %100 in 0 : vector<16x64xf32>, vector<16x64xf32>, vector<16x64xf32>, vector<16x64xf32>, vector<16x64xf32> -> vector<80x64xf32>
    %c256 = arith.constant 256 : index
    %c0_34 = arith.constant 0 : index
    %104 = vector.load %arg4[%c256, %c0_34] : memref<288x64xf32, #tpu.memory_space<vmem>>, vector<31x64xf32>
    %cst_35 = arith.constant 0.000000e+00 : f32
    %105 = vector.broadcast %cst_35 : f32 to vector<80x64xf32>
    %c79_i32 = arith.constant 79 : i32
    %106 = tpu.dynamic_rotate %103 by %c79_i32 dim 0 : vector<80x64xf32>, i32 -> vector<80x64xf32>
    %107 = vector.extract_strided_slice %104 {offsets = [0, 0], sizes = [1, 64], strides = [1, 1]} : vector<31x64xf32> to vector<1x64xf32>
    %108 = vector.shape_cast %107 : vector<1x64xf32> to vector<64xf32>
    %109 = vector.shape_cast %108 : vector<64xf32> to vector<1x64xf32>
    %110 = vector.broadcast %109 : vector<1x64xf32> to vector<80x64xf32>
    %111 = arith.mulf %106, %110 : vector<80x64xf32>
    %112 = arith.addf %105, %111 : vector<80x64xf32>
    %c78_i32 = arith.constant 78 : i32
    %113 = tpu.dynamic_rotate %103 by %c78_i32 dim 0 : vector<80x64xf32>, i32 -> vector<80x64xf32>
    %114 = vector.extract_strided_slice %104 {offsets = [1, 0], sizes = [1, 64], strides = [1, 1]} : vector<31x64xf32> to vector<1x64xf32>
    %115 = vector.shape_cast %114 : vector<1x64xf32> to vector<64xf32>
    %116 = vector.shape_cast %115 : vector<64xf32> to vector<1x64xf32>
    %117 = vector.broadcast %116 : vector<1x64xf32> to vector<80x64xf32>
    %118 = arith.mulf %113, %117 : vector<80x64xf32>
    %119 = arith.addf %112, %118 : vector<80x64xf32>
    %c77_i32 = arith.constant 77 : i32
    %120 = tpu.dynamic_rotate %103 by %c77_i32 dim 0 : vector<80x64xf32>, i32 -> vector<80x64xf32>
    %121 = vector.extract_strided_slice %104 {offsets = [2, 0], sizes = [1, 64], strides = [1, 1]} : vector<31x64xf32> to vector<1x64xf32>
    %122 = vector.shape_cast %121 : vector<1x64xf32> to vector<64xf32>
    %123 = vector.shape_cast %122 : vector<64xf32> to vector<1x64xf32>
    %124 = vector.broadcast %123 : vector<1x64xf32> to vector<80x64xf32>
    %125 = arith.mulf %120, %124 : vector<80x64xf32>
    %126 = arith.addf %119, %125 : vector<80x64xf32>
    %c76_i32 = arith.constant 76 : i32
    %127 = tpu.dynamic_rotate %103 by %c76_i32 dim 0 : vector<80x64xf32>, i32 -> vector<80x64xf32>
    %128 = vector.extract_strided_slice %104 {offsets = [3, 0], sizes = [1, 64], strides = [1, 1]} : vector<31x64xf32> to vector<1x64xf32>
    %129 = vector.shape_cast %128 : vector<1x64xf32> to vector<64xf32>
    %130 = vector.shape_cast %129 : vector<64xf32> to vector<1x64xf32>
    %131 = vector.broadcast %130 : vector<1x64xf32> to vector<80x64xf32>
    %132 = arith.mulf %127, %131 : vector<80x64xf32>
    %133 = arith.addf %126, %132 : vector<80x64xf32>
    %c75_i32 = arith.constant 75 : i32
    %134 = tpu.dynamic_rotate %103 by %c75_i32 dim 0 : vector<80x64xf32>, i32 -> vector<80x64xf32>
    %135 = vector.extract_strided_slice %104 {offsets = [4, 0], sizes = [1, 64], strides = [1, 1]} : vector<31x64xf32> to vector<1x64xf32>
    %136 = vector.shape_cast %135 : vector<1x64xf32> to vector<64xf32>
    %137 = vector.shape_cast %136 : vector<64xf32> to vector<1x64xf32>
    %138 = vector.broadcast %137 : vector<1x64xf32> to vector<80x64xf32>
    %139 = arith.mulf %134, %138 : vector<80x64xf32>
    %140 = arith.addf %133, %139 : vector<80x64xf32>
    %c74_i32 = arith.constant 74 : i32
    %141 = tpu.dynamic_rotate %103 by %c74_i32 dim 0 : vector<80x64xf32>, i32 -> vector<80x64xf32>
    %142 = vector.extract_strided_slice %104 {offsets = [5, 0], sizes = [1, 64], strides = [1, 1]} : vector<31x64xf32> to vector<1x64xf32>
    %143 = vector.shape_cast %142 : vector<1x64xf32> to vector<64xf32>
    %144 = vector.shape_cast %143 : vector<64xf32> to vector<1x64xf32>
    %145 = vector.broadcast %144 : vector<1x64xf32> to vector<80x64xf32>
    %146 = arith.mulf %141, %145 : vector<80x64xf32>
    %147 = arith.addf %140, %146 : vector<80x64xf32>
    %c73_i32 = arith.constant 73 : i32
    %148 = tpu.dynamic_rotate %103 by %c73_i32 dim 0 : vector<80x64xf32>, i32 -> vector<80x64xf32>
    %149 = vector.extract_strided_slice %104 {offsets = [6, 0], sizes = [1, 64], strides = [1, 1]} : vector<31x64xf32> to vector<1x64xf32>
    %150 = vector.shape_cast %149 : vector<1x64xf32> to vector<64xf32>
    %151 = vector.shape_cast %150 : vector<64xf32> to vector<1x64xf32>
    %152 = vector.broadcast %151 : vector<1x64xf32> to vector<80x64xf32>
    %153 = arith.mulf %148, %152 : vector<80x64xf32>
    %154 = arith.addf %147, %153 : vector<80x64xf32>
    %c72_i32 = arith.constant 72 : i32
    %155 = tpu.dynamic_rotate %103 by %c72_i32 dim 0 : vector<80x64xf32>, i32 -> vector<80x64xf32>
    %156 = vector.extract_strided_slice %104 {offsets = [7, 0], sizes = [1, 64], strides = [1, 1]} : vector<31x64xf32> to vector<1x64xf32>
    %157 = vector.shape_cast %156 : vector<1x64xf32> to vector<64xf32>
    %158 = vector.shape_cast %157 : vector<64xf32> to vector<1x64xf32>
    %159 = vector.broadcast %158 : vector<1x64xf32> to vector<80x64xf32>
    %160 = arith.mulf %155, %159 : vector<80x64xf32>
    %161 = arith.addf %154, %160 : vector<80x64xf32>
    %c71_i32 = arith.constant 71 : i32
    %162 = tpu.dynamic_rotate %103 by %c71_i32 dim 0 : vector<80x64xf32>, i32 -> vector<80x64xf32>
    %163 = vector.extract_strided_slice %104 {offsets = [8, 0], sizes = [1, 64], strides = [1, 1]} : vector<31x64xf32> to vector<1x64xf32>
    %164 = vector.shape_cast %163 : vector<1x64xf32> to vector<64xf32>
    %165 = vector.shape_cast %164 : vector<64xf32> to vector<1x64xf32>
    %166 = vector.broadcast %165 : vector<1x64xf32> to vector<80x64xf32>
    %167 = arith.mulf %162, %166 : vector<80x64xf32>
    %168 = arith.addf %161, %167 : vector<80x64xf32>
    %c70_i32 = arith.constant 70 : i32
    %169 = tpu.dynamic_rotate %103 by %c70_i32 dim 0 : vector<80x64xf32>, i32 -> vector<80x64xf32>
    %170 = vector.extract_strided_slice %104 {offsets = [9, 0], sizes = [1, 64], strides = [1, 1]} : vector<31x64xf32> to vector<1x64xf32>
    %171 = vector.shape_cast %170 : vector<1x64xf32> to vector<64xf32>
    %172 = vector.shape_cast %171 : vector<64xf32> to vector<1x64xf32>
    %173 = vector.broadcast %172 : vector<1x64xf32> to vector<80x64xf32>
    %174 = arith.mulf %169, %173 : vector<80x64xf32>
    %175 = arith.addf %168, %174 : vector<80x64xf32>
    %c69_i32 = arith.constant 69 : i32
    %176 = tpu.dynamic_rotate %103 by %c69_i32 dim 0 : vector<80x64xf32>, i32 -> vector<80x64xf32>
    %177 = vector.extract_strided_slice %104 {offsets = [10, 0], sizes = [1, 64], strides = [1, 1]} : vector<31x64xf32> to vector<1x64xf32>
    %178 = vector.shape_cast %177 : vector<1x64xf32> to vector<64xf32>
    %179 = vector.shape_cast %178 : vector<64xf32> to vector<1x64xf32>
    %180 = vector.broadcast %179 : vector<1x64xf32> to vector<80x64xf32>
    %181 = arith.mulf %176, %180 : vector<80x64xf32>
    %182 = arith.addf %175, %181 : vector<80x64xf32>
    %c68_i32 = arith.constant 68 : i32
    %183 = tpu.dynamic_rotate %103 by %c68_i32 dim 0 : vector<80x64xf32>, i32 -> vector<80x64xf32>
    %184 = vector.extract_strided_slice %104 {offsets = [11, 0], sizes = [1, 64], strides = [1, 1]} : vector<31x64xf32> to vector<1x64xf32>
    %185 = vector.shape_cast %184 : vector<1x64xf32> to vector<64xf32>
    %186 = vector.shape_cast %185 : vector<64xf32> to vector<1x64xf32>
    %187 = vector.broadcast %186 : vector<1x64xf32> to vector<80x64xf32>
    %188 = arith.mulf %183, %187 : vector<80x64xf32>
    %189 = arith.addf %182, %188 : vector<80x64xf32>
    %c67_i32 = arith.constant 67 : i32
    %190 = tpu.dynamic_rotate %103 by %c67_i32 dim 0 : vector<80x64xf32>, i32 -> vector<80x64xf32>
    %191 = vector.extract_strided_slice %104 {offsets = [12, 0], sizes = [1, 64], strides = [1, 1]} : vector<31x64xf32> to vector<1x64xf32>
    %192 = vector.shape_cast %191 : vector<1x64xf32> to vector<64xf32>
    %193 = vector.shape_cast %192 : vector<64xf32> to vector<1x64xf32>
    %194 = vector.broadcast %193 : vector<1x64xf32> to vector<80x64xf32>
    %195 = arith.mulf %190, %194 : vector<80x64xf32>
    %196 = arith.addf %189, %195 : vector<80x64xf32>
    %c66_i32 = arith.constant 66 : i32
    %197 = tpu.dynamic_rotate %103 by %c66_i32 dim 0 : vector<80x64xf32>, i32 -> vector<80x64xf32>
    %198 = vector.extract_strided_slice %104 {offsets = [13, 0], sizes = [1, 64], strides = [1, 1]} : vector<31x64xf32> to vector<1x64xf32>
    %199 = vector.shape_cast %198 : vector<1x64xf32> to vector<64xf32>
    %200 = vector.shape_cast %199 : vector<64xf32> to vector<1x64xf32>
    %201 = vector.broadcast %200 : vector<1x64xf32> to vector<80x64xf32>
    %202 = arith.mulf %197, %201 : vector<80x64xf32>
    %203 = arith.addf %196, %202 : vector<80x64xf32>
    %c65_i32 = arith.constant 65 : i32
    %204 = tpu.dynamic_rotate %103 by %c65_i32 dim 0 : vector<80x64xf32>, i32 -> vector<80x64xf32>
    %205 = vector.extract_strided_slice %104 {offsets = [14, 0], sizes = [1, 64], strides = [1, 1]} : vector<31x64xf32> to vector<1x64xf32>
    %206 = vector.shape_cast %205 : vector<1x64xf32> to vector<64xf32>
    %207 = vector.shape_cast %206 : vector<64xf32> to vector<1x64xf32>
    %208 = vector.broadcast %207 : vector<1x64xf32> to vector<80x64xf32>
    %209 = arith.mulf %204, %208 : vector<80x64xf32>
    %210 = arith.addf %203, %209 : vector<80x64xf32>
    %c64_i32 = arith.constant 64 : i32
    %211 = tpu.dynamic_rotate %103 by %c64_i32 dim 0 : vector<80x64xf32>, i32 -> vector<80x64xf32>
    %212 = vector.extract_strided_slice %104 {offsets = [15, 0], sizes = [1, 64], strides = [1, 1]} : vector<31x64xf32> to vector<1x64xf32>
    %213 = vector.shape_cast %212 : vector<1x64xf32> to vector<64xf32>
    %214 = vector.shape_cast %213 : vector<64xf32> to vector<1x64xf32>
    %215 = vector.broadcast %214 : vector<1x64xf32> to vector<80x64xf32>
    %216 = arith.mulf %211, %215 : vector<80x64xf32>
    %217 = arith.addf %210, %216 : vector<80x64xf32>
    %c63_i32 = arith.constant 63 : i32
    %218 = tpu.dynamic_rotate %103 by %c63_i32 dim 0 : vector<80x64xf32>, i32 -> vector<80x64xf32>
    %219 = vector.extract_strided_slice %104 {offsets = [16, 0], sizes = [1, 64], strides = [1, 1]} : vector<31x64xf32> to vector<1x64xf32>
    %220 = vector.shape_cast %219 : vector<1x64xf32> to vector<64xf32>
    %221 = vector.shape_cast %220 : vector<64xf32> to vector<1x64xf32>
    %222 = vector.broadcast %221 : vector<1x64xf32> to vector<80x64xf32>
    %223 = arith.mulf %218, %222 : vector<80x64xf32>
    %224 = arith.addf %217, %223 : vector<80x64xf32>
    %c62_i32 = arith.constant 62 : i32
    %225 = tpu.dynamic_rotate %103 by %c62_i32 dim 0 : vector<80x64xf32>, i32 -> vector<80x64xf32>
    %226 = vector.extract_strided_slice %104 {offsets = [17, 0], sizes = [1, 64], strides = [1, 1]} : vector<31x64xf32> to vector<1x64xf32>
    %227 = vector.shape_cast %226 : vector<1x64xf32> to vector<64xf32>
    %228 = vector.shape_cast %227 : vector<64xf32> to vector<1x64xf32>
    %229 = vector.broadcast %228 : vector<1x64xf32> to vector<80x64xf32>
    %230 = arith.mulf %225, %229 : vector<80x64xf32>
    %231 = arith.addf %224, %230 : vector<80x64xf32>
    %c61_i32 = arith.constant 61 : i32
    %232 = tpu.dynamic_rotate %103 by %c61_i32 dim 0 : vector<80x64xf32>, i32 -> vector<80x64xf32>
    %233 = vector.extract_strided_slice %104 {offsets = [18, 0], sizes = [1, 64], strides = [1, 1]} : vector<31x64xf32> to vector<1x64xf32>
    %234 = vector.shape_cast %233 : vector<1x64xf32> to vector<64xf32>
    %235 = vector.shape_cast %234 : vector<64xf32> to vector<1x64xf32>
    %236 = vector.broadcast %235 : vector<1x64xf32> to vector<80x64xf32>
    %237 = arith.mulf %232, %236 : vector<80x64xf32>
    %238 = arith.addf %231, %237 : vector<80x64xf32>
    %c60_i32 = arith.constant 60 : i32
    %239 = tpu.dynamic_rotate %103 by %c60_i32 dim 0 : vector<80x64xf32>, i32 -> vector<80x64xf32>
    %240 = vector.extract_strided_slice %104 {offsets = [19, 0], sizes = [1, 64], strides = [1, 1]} : vector<31x64xf32> to vector<1x64xf32>
    %241 = vector.shape_cast %240 : vector<1x64xf32> to vector<64xf32>
    %242 = vector.shape_cast %241 : vector<64xf32> to vector<1x64xf32>
    %243 = vector.broadcast %242 : vector<1x64xf32> to vector<80x64xf32>
    %244 = arith.mulf %239, %243 : vector<80x64xf32>
    %245 = arith.addf %238, %244 : vector<80x64xf32>
    %c59_i32 = arith.constant 59 : i32
    %246 = tpu.dynamic_rotate %103 by %c59_i32 dim 0 : vector<80x64xf32>, i32 -> vector<80x64xf32>
    %247 = vector.extract_strided_slice %104 {offsets = [20, 0], sizes = [1, 64], strides = [1, 1]} : vector<31x64xf32> to vector<1x64xf32>
    %248 = vector.shape_cast %247 : vector<1x64xf32> to vector<64xf32>
    %249 = vector.shape_cast %248 : vector<64xf32> to vector<1x64xf32>
    %250 = vector.broadcast %249 : vector<1x64xf32> to vector<80x64xf32>
    %251 = arith.mulf %246, %250 : vector<80x64xf32>
    %252 = arith.addf %245, %251 : vector<80x64xf32>
    %c58_i32 = arith.constant 58 : i32
    %253 = tpu.dynamic_rotate %103 by %c58_i32 dim 0 : vector<80x64xf32>, i32 -> vector<80x64xf32>
    %254 = vector.extract_strided_slice %104 {offsets = [21, 0], sizes = [1, 64], strides = [1, 1]} : vector<31x64xf32> to vector<1x64xf32>
    %255 = vector.shape_cast %254 : vector<1x64xf32> to vector<64xf32>
    %256 = vector.shape_cast %255 : vector<64xf32> to vector<1x64xf32>
    %257 = vector.broadcast %256 : vector<1x64xf32> to vector<80x64xf32>
    %258 = arith.mulf %253, %257 : vector<80x64xf32>
    %259 = arith.addf %252, %258 : vector<80x64xf32>
    %c57_i32 = arith.constant 57 : i32
    %260 = tpu.dynamic_rotate %103 by %c57_i32 dim 0 : vector<80x64xf32>, i32 -> vector<80x64xf32>
    %261 = vector.extract_strided_slice %104 {offsets = [22, 0], sizes = [1, 64], strides = [1, 1]} : vector<31x64xf32> to vector<1x64xf32>
    %262 = vector.shape_cast %261 : vector<1x64xf32> to vector<64xf32>
    %263 = vector.shape_cast %262 : vector<64xf32> to vector<1x64xf32>
    %264 = vector.broadcast %263 : vector<1x64xf32> to vector<80x64xf32>
    %265 = arith.mulf %260, %264 : vector<80x64xf32>
    %266 = arith.addf %259, %265 : vector<80x64xf32>
    %c56_i32 = arith.constant 56 : i32
    %267 = tpu.dynamic_rotate %103 by %c56_i32 dim 0 : vector<80x64xf32>, i32 -> vector<80x64xf32>
    %268 = vector.extract_strided_slice %104 {offsets = [23, 0], sizes = [1, 64], strides = [1, 1]} : vector<31x64xf32> to vector<1x64xf32>
    %269 = vector.shape_cast %268 : vector<1x64xf32> to vector<64xf32>
    %270 = vector.shape_cast %269 : vector<64xf32> to vector<1x64xf32>
    %271 = vector.broadcast %270 : vector<1x64xf32> to vector<80x64xf32>
    %272 = arith.mulf %267, %271 : vector<80x64xf32>
    %273 = arith.addf %266, %272 : vector<80x64xf32>
    %c55_i32 = arith.constant 55 : i32
    %274 = tpu.dynamic_rotate %103 by %c55_i32 dim 0 : vector<80x64xf32>, i32 -> vector<80x64xf32>
    %275 = vector.extract_strided_slice %104 {offsets = [24, 0], sizes = [1, 64], strides = [1, 1]} : vector<31x64xf32> to vector<1x64xf32>
    %276 = vector.shape_cast %275 : vector<1x64xf32> to vector<64xf32>
    %277 = vector.shape_cast %276 : vector<64xf32> to vector<1x64xf32>
    %278 = vector.broadcast %277 : vector<1x64xf32> to vector<80x64xf32>
    %279 = arith.mulf %274, %278 : vector<80x64xf32>
    %280 = arith.addf %273, %279 : vector<80x64xf32>
    %c54_i32 = arith.constant 54 : i32
    %281 = tpu.dynamic_rotate %103 by %c54_i32 dim 0 : vector<80x64xf32>, i32 -> vector<80x64xf32>
    %282 = vector.extract_strided_slice %104 {offsets = [25, 0], sizes = [1, 64], strides = [1, 1]} : vector<31x64xf32> to vector<1x64xf32>
    %283 = vector.shape_cast %282 : vector<1x64xf32> to vector<64xf32>
    %284 = vector.shape_cast %283 : vector<64xf32> to vector<1x64xf32>
    %285 = vector.broadcast %284 : vector<1x64xf32> to vector<80x64xf32>
    %286 = arith.mulf %281, %285 : vector<80x64xf32>
    %287 = arith.addf %280, %286 : vector<80x64xf32>
    %c53_i32 = arith.constant 53 : i32
    %288 = tpu.dynamic_rotate %103 by %c53_i32 dim 0 : vector<80x64xf32>, i32 -> vector<80x64xf32>
    %289 = vector.extract_strided_slice %104 {offsets = [26, 0], sizes = [1, 64], strides = [1, 1]} : vector<31x64xf32> to vector<1x64xf32>
    %290 = vector.shape_cast %289 : vector<1x64xf32> to vector<64xf32>
    %291 = vector.shape_cast %290 : vector<64xf32> to vector<1x64xf32>
    %292 = vector.broadcast %291 : vector<1x64xf32> to vector<80x64xf32>
    %293 = arith.mulf %288, %292 : vector<80x64xf32>
    %294 = arith.addf %287, %293 : vector<80x64xf32>
    %c52_i32 = arith.constant 52 : i32
    %295 = tpu.dynamic_rotate %103 by %c52_i32 dim 0 : vector<80x64xf32>, i32 -> vector<80x64xf32>
    %296 = vector.extract_strided_slice %104 {offsets = [27, 0], sizes = [1, 64], strides = [1, 1]} : vector<31x64xf32> to vector<1x64xf32>
    %297 = vector.shape_cast %296 : vector<1x64xf32> to vector<64xf32>
    %298 = vector.shape_cast %297 : vector<64xf32> to vector<1x64xf32>
    %299 = vector.broadcast %298 : vector<1x64xf32> to vector<80x64xf32>
    %300 = arith.mulf %295, %299 : vector<80x64xf32>
    %301 = arith.addf %294, %300 : vector<80x64xf32>
    %c51_i32 = arith.constant 51 : i32
    %302 = tpu.dynamic_rotate %103 by %c51_i32 dim 0 : vector<80x64xf32>, i32 -> vector<80x64xf32>
    %303 = vector.extract_strided_slice %104 {offsets = [28, 0], sizes = [1, 64], strides = [1, 1]} : vector<31x64xf32> to vector<1x64xf32>
    %304 = vector.shape_cast %303 : vector<1x64xf32> to vector<64xf32>
    %305 = vector.shape_cast %304 : vector<64xf32> to vector<1x64xf32>
    %306 = vector.broadcast %305 : vector<1x64xf32> to vector<80x64xf32>
    %307 = arith.mulf %302, %306 : vector<80x64xf32>
    %308 = arith.addf %301, %307 : vector<80x64xf32>
    %c50_i32 = arith.constant 50 : i32
    %309 = tpu.dynamic_rotate %103 by %c50_i32 dim 0 : vector<80x64xf32>, i32 -> vector<80x64xf32>
    %310 = vector.extract_strided_slice %104 {offsets = [29, 0], sizes = [1, 64], strides = [1, 1]} : vector<31x64xf32> to vector<1x64xf32>
    %311 = vector.shape_cast %310 : vector<1x64xf32> to vector<64xf32>
    %312 = vector.shape_cast %311 : vector<64xf32> to vector<1x64xf32>
    %313 = vector.broadcast %312 : vector<1x64xf32> to vector<80x64xf32>
    %314 = arith.mulf %309, %313 : vector<80x64xf32>
    %315 = arith.addf %308, %314 : vector<80x64xf32>
    %c49_i32 = arith.constant 49 : i32
    %316 = tpu.dynamic_rotate %103 by %c49_i32 dim 0 : vector<80x64xf32>, i32 -> vector<80x64xf32>
    %317 = vector.extract_strided_slice %104 {offsets = [30, 0], sizes = [1, 64], strides = [1, 1]} : vector<31x64xf32> to vector<1x64xf32>
    %318 = vector.shape_cast %317 : vector<1x64xf32> to vector<64xf32>
    %319 = vector.shape_cast %318 : vector<64xf32> to vector<1x64xf32>
    %320 = vector.broadcast %319 : vector<1x64xf32> to vector<80x64xf32>
    %321 = arith.mulf %316, %320 : vector<80x64xf32>
    %322 = arith.addf %315, %321 : vector<80x64xf32>
    %c12 = arith.constant 12 : index
    %c0_36 = arith.constant 0 : index
    %323 = vector.load %arg1[%c12, %c0_36] : memref<24x256xf32, #tpu.memory_space<vmem>>, vector<1x64xf32>
    %324 = vector.shape_cast %323 : vector<1x64xf32> to vector<64xf32>
    %c13 = arith.constant 13 : index
    %c0_37 = arith.constant 0 : index
    %325 = vector.load %arg1[%c13, %c0_37] : memref<24x256xf32, #tpu.memory_space<vmem>>, vector<1x64xf32>
    %326 = vector.shape_cast %325 : vector<1x64xf32> to vector<64xf32>
    %c14 = arith.constant 14 : index
    %c0_38 = arith.constant 0 : index
    %327 = vector.load %arg1[%c14, %c0_38] : memref<24x256xf32, #tpu.memory_space<vmem>>, vector<1x64xf32>
    %328 = vector.shape_cast %327 : vector<1x64xf32> to vector<64xf32>
    %329 = vector.extract_strided_slice %322 {offsets = [0, 0], sizes = [16, 64], strides = [1, 1]} : vector<80x64xf32> to vector<16x64xf32>
    %330 = vector.shape_cast %324 : vector<64xf32> to vector<1x64xf32>
    %331 = vector.broadcast %330 : vector<1x64xf32> to vector<16x64xf32>
    %332 = arith.addf %329, %331 : vector<16x64xf32>
    %333 = vector.shape_cast %332 : vector<16x64xf32> to vector<1x16x64xf32>
    %cst_39 = arith.constant dense<0.000000e+00> : vector<1xf32>
    %334 = vector.multi_reduction <add>, %333, %cst_39 [1, 2] : vector<1x16x64xf32> to vector<1xf32>
    %335 = vector.shape_cast %334 : vector<1xf32> to vector<1x1x1xf32>
    %336 = vector.extract %335[0, 0, 0] : f32 from vector<1x1x1xf32>
    %cst_40 = arith.constant 1.024000e+03 : f32
    %337 = arith.divf %336, %cst_40 : f32
    %338 = vector.broadcast %337 : f32 to vector<16x64xf32>
    %339 = arith.subf %332, %338 : vector<16x64xf32>
    %340 = arith.mulf %339, %339 : vector<16x64xf32>
    %341 = vector.shape_cast %340 : vector<16x64xf32> to vector<1x16x64xf32>
    %cst_41 = arith.constant dense<0.000000e+00> : vector<1xf32>
    %342 = vector.multi_reduction <add>, %341, %cst_41 [1, 2] : vector<1x16x64xf32> to vector<1xf32>
    %343 = vector.shape_cast %342 : vector<1xf32> to vector<1x1x1xf32>
    %344 = vector.extract %343[0, 0, 0] : f32 from vector<1x1x1xf32>
    %cst_42 = arith.constant 1.024000e+03 : f32
    %345 = arith.divf %344, %cst_42 : f32
    %346 = vector.broadcast %337 : f32 to vector<16x64xf32>
    %347 = arith.subf %332, %346 : vector<16x64xf32>
    %cst_43 = arith.constant 9.99999974E-6 : f32
    %348 = arith.addf %345, %cst_43 : f32
    %349 = math.rsqrt %348 : f32
    %350 = vector.broadcast %349 : f32 to vector<16x64xf32>
    %351 = arith.mulf %347, %350 : vector<16x64xf32>
    %352 = vector.shape_cast %326 : vector<64xf32> to vector<1x64xf32>
    %353 = vector.broadcast %352 : vector<1x64xf32> to vector<16x64xf32>
    %354 = arith.mulf %351, %353 : vector<16x64xf32>
    %355 = vector.shape_cast %328 : vector<64xf32> to vector<1x64xf32>
    %356 = vector.broadcast %355 : vector<1x64xf32> to vector<16x64xf32>
    %357 = arith.addf %354, %356 : vector<16x64xf32>
    %358 = vector.extract_strided_slice %322 {offsets = [32, 0], sizes = [16, 64], strides = [1, 1]} : vector<80x64xf32> to vector<16x64xf32>
    %359 = vector.shape_cast %324 : vector<64xf32> to vector<1x64xf32>
    %360 = vector.broadcast %359 : vector<1x64xf32> to vector<16x64xf32>
    %361 = arith.addf %358, %360 : vector<16x64xf32>
    %362 = vector.shape_cast %361 : vector<16x64xf32> to vector<1x16x64xf32>
    %cst_44 = arith.constant dense<0.000000e+00> : vector<1xf32>
    %363 = vector.multi_reduction <add>, %362, %cst_44 [1, 2] : vector<1x16x64xf32> to vector<1xf32>
    %364 = vector.shape_cast %363 : vector<1xf32> to vector<1x1x1xf32>
    %365 = vector.extract %364[0, 0, 0] : f32 from vector<1x1x1xf32>
    %cst_45 = arith.constant 1.024000e+03 : f32
    %366 = arith.divf %365, %cst_45 : f32
    %367 = vector.broadcast %366 : f32 to vector<16x64xf32>
    %368 = arith.subf %361, %367 : vector<16x64xf32>
    %369 = arith.mulf %368, %368 : vector<16x64xf32>
    %370 = vector.shape_cast %369 : vector<16x64xf32> to vector<1x16x64xf32>
    %cst_46 = arith.constant dense<0.000000e+00> : vector<1xf32>
    %371 = vector.multi_reduction <add>, %370, %cst_46 [1, 2] : vector<1x16x64xf32> to vector<1xf32>
    %372 = vector.shape_cast %371 : vector<1xf32> to vector<1x1x1xf32>
    %373 = vector.extract %372[0, 0, 0] : f32 from vector<1x1x1xf32>
    %cst_47 = arith.constant 1.024000e+03 : f32
    %374 = arith.divf %373, %cst_47 : f32
    %375 = vector.broadcast %366 : f32 to vector<16x64xf32>
    %376 = arith.subf %361, %375 : vector<16x64xf32>
    %cst_48 = arith.constant 9.99999974E-6 : f32
    %377 = arith.addf %374, %cst_48 : f32
    %378 = math.rsqrt %377 : f32
    %379 = vector.broadcast %378 : f32 to vector<16x64xf32>
    %380 = arith.mulf %376, %379 : vector<16x64xf32>
    %381 = vector.shape_cast %326 : vector<64xf32> to vector<1x64xf32>
    %382 = vector.broadcast %381 : vector<1x64xf32> to vector<16x64xf32>
    %383 = arith.mulf %380, %382 : vector<16x64xf32>
    %384 = vector.shape_cast %328 : vector<64xf32> to vector<1x64xf32>
    %385 = vector.broadcast %384 : vector<1x64xf32> to vector<16x64xf32>
    %386 = arith.addf %383, %385 : vector<16x64xf32>
    %387 = tpu.concatenate %357, %386 in 0 : vector<16x64xf32>, vector<16x64xf32> -> vector<32x64xf32>
    %388 = arith.negf %387 : vector<32x64xf32>
    %389 = math.exp %388 : vector<32x64xf32>
    %cst_49 = arith.constant 1.000000e+00 : f32
    %390 = vector.broadcast %cst_49 : f32 to vector<32x64xf32>
    %391 = arith.addf %390, %389 : vector<32x64xf32>
    %392 = arith.divf %390, %391 : vector<32x64xf32>
    %393 = arith.mulf %387, %392 : vector<32x64xf32>
    %c128 = arith.constant 128 : index
    %c0_50 = arith.constant 0 : index
    %394 = vector.load %arg4[%c128, %c0_50] : memref<288x64xf32, #tpu.memory_space<vmem>>, vector<64x64xf32>
    %cst_51 = arith.constant dense<0.000000e+00> : vector<32x64xf32>
    %395 = tpu.matmul %393, %394, %cst_51 {dimension_numbers = #tpu.dot_dimension_numbers<[1], [0], [0], [1], [0, 0, 1, 1], [], []>} : vector<32x64xf32>, vector<64x64xf32>, vector<32x64xf32> -> vector<32x64xf32>
    %c15 = arith.constant 15 : index
    %c0_52 = arith.constant 0 : index
    %396 = vector.load %arg1[%c15, %c0_52] : memref<24x256xf32, #tpu.memory_space<vmem>>, vector<1x64xf32>
    %397 = vector.shape_cast %396 : vector<1x64xf32> to vector<64xf32>
    %398 = vector.shape_cast %397 : vector<64xf32> to vector<1x64xf32>
    %399 = vector.broadcast %398 : vector<1x64xf32> to vector<32x64xf32>
    %400 = arith.addf %395, %399 : vector<32x64xf32>
    %401 = arith.addf %51, %400 : vector<32x64xf32>
    %cst_53 = arith.constant dense<0.000000e+00> : vector<32xf32>
    %402 = vector.multi_reduction <add>, %401, %cst_53 [1] : vector<32x64xf32> to vector<32xf32>
    %403 = vector.shape_cast %402 : vector<32xf32> to vector<32x1xf32>
    %cst_54 = arith.constant 6.400000e+01 : f32
    %404 = vector.broadcast %cst_54 : f32 to vector<32x1xf32>
    %405 = arith.divf %403, %404 : vector<32x1xf32>
    %406 = vector.broadcast %405 : vector<32x1xf32> to vector<32x64xf32>
    %407 = arith.subf %401, %406 : vector<32x64xf32>
    %408 = arith.mulf %407, %407 : vector<32x64xf32>
    %cst_55 = arith.constant dense<0.000000e+00> : vector<32xf32>
    %409 = vector.multi_reduction <add>, %408, %cst_55 [1] : vector<32x64xf32> to vector<32xf32>
    %410 = vector.shape_cast %409 : vector<32xf32> to vector<32x1xf32>
    %cst_56 = arith.constant 6.400000e+01 : f32
    %411 = vector.broadcast %cst_56 : f32 to vector<32x1xf32>
    %412 = arith.divf %410, %411 : vector<32x1xf32>
    %413 = vector.broadcast %405 : vector<32x1xf32> to vector<32x64xf32>
    %414 = arith.subf %401, %413 : vector<32x64xf32>
    %cst_57 = arith.constant 9.99999974E-6 : f32
    %415 = vector.broadcast %cst_57 : f32 to vector<32x1xf32>
    %416 = arith.addf %412, %415 : vector<32x1xf32>
    %417 = math.rsqrt %416 : vector<32x1xf32>
    %418 = vector.broadcast %417 : vector<32x1xf32> to vector<32x64xf32>
    %419 = arith.mulf %414, %418 : vector<32x64xf32>
    %c16 = arith.constant 16 : index
    %c0_58 = arith.constant 0 : index
    %420 = vector.load %arg1[%c16, %c0_58] : memref<24x256xf32, #tpu.memory_space<vmem>>, vector<1x64xf32>
    %421 = vector.shape_cast %420 : vector<1x64xf32> to vector<64xf32>
    %422 = vector.shape_cast %421 : vector<64xf32> to vector<1x64xf32>
    %423 = vector.broadcast %422 : vector<1x64xf32> to vector<32x64xf32>
    %424 = arith.mulf %419, %423 : vector<32x64xf32>
    %c17 = arith.constant 17 : index
    %c0_59 = arith.constant 0 : index
    %425 = vector.load %arg1[%c17, %c0_59] : memref<24x256xf32, #tpu.memory_space<vmem>>, vector<1x64xf32>
    %426 = vector.shape_cast %425 : vector<1x64xf32> to vector<64xf32>
    %427 = vector.shape_cast %426 : vector<64xf32> to vector<1x64xf32>
    %428 = vector.broadcast %427 : vector<1x64xf32> to vector<32x64xf32>
    %429 = arith.addf %424, %428 : vector<32x64xf32>
    %c0_60 = arith.constant 0 : index
    %c512 = arith.constant 512 : index
    %430 = vector.load %arg2[%c0_60, %c512] : memref<64x704xf32, #tpu.memory_space<vmem>>, vector<64x192xf32>
    %cst_61 = arith.constant dense<0.000000e+00> : vector<32x192xf32>
    %431 = tpu.matmul %429, %430, %cst_61 {dimension_numbers = #tpu.dot_dimension_numbers<[1], [0], [0], [1], [0, 0, 1, 1], [], []>} : vector<32x64xf32>, vector<64x192xf32>, vector<32x192xf32> -> vector<32x192xf32>
    %c18 = arith.constant 18 : index
    %c0_62 = arith.constant 0 : index
    %432 = vector.load %arg1[%c18, %c0_62] : memref<24x256xf32, #tpu.memory_space<vmem>>, vector<1x192xf32>
    %433 = vector.shape_cast %432 : vector<1x192xf32> to vector<192xf32>
    %434 = vector.shape_cast %433 : vector<192xf32> to vector<1x192xf32>
    %435 = vector.broadcast %434 : vector<1x192xf32> to vector<32x192xf32>
    %436 = arith.addf %431, %435 : vector<32x192xf32>
    %c192 = arith.constant 192 : index
    %c0_63 = arith.constant 0 : index
    %437 = vector.load %arg4[%c192, %c0_63] : memref<288x64xf32, #tpu.memory_space<vmem>>, vector<64x64xf32>
    %cst_64 = arith.constant 0.000000e+00 : f32
    %438 = vector.broadcast %cst_64 : f32 to vector<16x64xf32>
    %439 = vector.extract_strided_slice %436 {offsets = [0, 0], sizes = [16, 16], strides = [1, 1]} : vector<32x192xf32> to vector<16x16xf32>
    %440 = vector.extract_strided_slice %436 {offsets = [0, 64], sizes = [16, 16], strides = [1, 1]} : vector<32x192xf32> to vector<16x16xf32>
    %441 = vector.extract_strided_slice %436 {offsets = [0, 128], sizes = [16, 16], strides = [1, 1]} : vector<32x192xf32> to vector<16x16xf32>
    %cst_65 = arith.constant dense<0.000000e+00> : vector<16x16xf32>
    %442 = tpu.matmul %439, %440, %cst_65 {dimension_numbers = #tpu.dot_dimension_numbers<[1], [1], [0], [0], [0, 0, 1, 0], [], []>} : vector<16x16xf32>, vector<16x16xf32>, vector<16x16xf32> -> vector<16x16xf32>
    %cst_66 = arith.constant 2.500000e-01 : f32
    %443 = vector.broadcast %cst_66 : f32 to vector<16x16xf32>
    %444 = arith.mulf %442, %443 : vector<16x16xf32>
    %cst_67 = arith.constant dense<0xFF800000> : vector<16xf32>
    %445 = vector.multi_reduction <maximumf>, %444, %cst_67 [1] : vector<16x16xf32> to vector<16xf32>
    %446 = vector.shape_cast %445 : vector<16xf32> to vector<16x1xf32>
    %447 = vector.broadcast %446 : vector<16x1xf32> to vector<16x16xf32>
    %448 = arith.subf %444, %447 : vector<16x16xf32>
    %449 = math.exp %448 : vector<16x16xf32>
    %cst_68 = arith.constant dense<0.000000e+00> : vector<16xf32>
    %450 = vector.multi_reduction <add>, %449, %cst_68 [1] : vector<16x16xf32> to vector<16xf32>
    %451 = vector.shape_cast %450 : vector<16xf32> to vector<16x1xf32>
    %452 = tpu.reciprocal %451 {approx = true} : vector<16x1xf32> -> vector<16x1xf32>
    %453 = vector.broadcast %452 : vector<16x1xf32> to vector<16x16xf32>
    %454 = arith.mulf %449, %453 : vector<16x16xf32>
    %cst_69 = arith.constant dense<0.000000e+00> : vector<16x16xf32>
    %455 = tpu.matmul %454, %441, %cst_69 {dimension_numbers = #tpu.dot_dimension_numbers<[1], [0], [0], [1], [0, 0, 1, 1], [], []>} : vector<16x16xf32>, vector<16x16xf32>, vector<16x16xf32> -> vector<16x16xf32>
    %456 = vector.extract_strided_slice %437 {offsets = [0, 0], sizes = [16, 64], strides = [1, 1]} : vector<64x64xf32> to vector<16x64xf32>
    %cst_70 = arith.constant dense<0.000000e+00> : vector<16x64xf32>
    %457 = tpu.matmul %455, %456, %cst_70 {dimension_numbers = #tpu.dot_dimension_numbers<[1], [0], [0], [1], [0, 0, 1, 1], [], []>} : vector<16x16xf32>, vector<16x64xf32>, vector<16x64xf32> -> vector<16x64xf32>
    %458 = arith.addf %438, %457 : vector<16x64xf32>
    %459 = vector.extract_strided_slice %436 {offsets = [0, 16], sizes = [16, 16], strides = [1, 1]} : vector<32x192xf32> to vector<16x16xf32>
    %460 = vector.extract_strided_slice %436 {offsets = [0, 80], sizes = [16, 16], strides = [1, 1]} : vector<32x192xf32> to vector<16x16xf32>
    %461 = vector.extract_strided_slice %436 {offsets = [0, 144], sizes = [16, 16], strides = [1, 1]} : vector<32x192xf32> to vector<16x16xf32>
    %cst_71 = arith.constant dense<0.000000e+00> : vector<16x16xf32>
    %462 = tpu.matmul %459, %460, %cst_71 {dimension_numbers = #tpu.dot_dimension_numbers<[1], [1], [0], [0], [0, 0, 1, 0], [], []>} : vector<16x16xf32>, vector<16x16xf32>, vector<16x16xf32> -> vector<16x16xf32>
    %cst_72 = arith.constant 2.500000e-01 : f32
    %463 = vector.broadcast %cst_72 : f32 to vector<16x16xf32>
    %464 = arith.mulf %462, %463 : vector<16x16xf32>
    %cst_73 = arith.constant dense<0xFF800000> : vector<16xf32>
    %465 = vector.multi_reduction <maximumf>, %464, %cst_73 [1] : vector<16x16xf32> to vector<16xf32>
    %466 = vector.shape_cast %465 : vector<16xf32> to vector<16x1xf32>
    %467 = vector.broadcast %466 : vector<16x1xf32> to vector<16x16xf32>
    %468 = arith.subf %464, %467 : vector<16x16xf32>
    %469 = math.exp %468 : vector<16x16xf32>
    %cst_74 = arith.constant dense<0.000000e+00> : vector<16xf32>
    %470 = vector.multi_reduction <add>, %469, %cst_74 [1] : vector<16x16xf32> to vector<16xf32>
    %471 = vector.shape_cast %470 : vector<16xf32> to vector<16x1xf32>
    %472 = tpu.reciprocal %471 {approx = true} : vector<16x1xf32> -> vector<16x1xf32>
    %473 = vector.broadcast %472 : vector<16x1xf32> to vector<16x16xf32>
    %474 = arith.mulf %469, %473 : vector<16x16xf32>
    %cst_75 = arith.constant dense<0.000000e+00> : vector<16x16xf32>
    %475 = tpu.matmul %474, %461, %cst_75 {dimension_numbers = #tpu.dot_dimension_numbers<[1], [0], [0], [1], [0, 0, 1, 1], [], []>} : vector<16x16xf32>, vector<16x16xf32>, vector<16x16xf32> -> vector<16x16xf32>
    %476 = vector.extract_strided_slice %437 {offsets = [16, 0], sizes = [16, 64], strides = [1, 1]} : vector<64x64xf32> to vector<16x64xf32>
    %cst_76 = arith.constant dense<0.000000e+00> : vector<16x64xf32>
    %477 = tpu.matmul %475, %476, %cst_76 {dimension_numbers = #tpu.dot_dimension_numbers<[1], [0], [0], [1], [0, 0, 1, 1], [], []>} : vector<16x16xf32>, vector<16x64xf32>, vector<16x64xf32> -> vector<16x64xf32>
    %478 = arith.addf %458, %477 : vector<16x64xf32>
    %479 = vector.extract_strided_slice %436 {offsets = [0, 32], sizes = [16, 16], strides = [1, 1]} : vector<32x192xf32> to vector<16x16xf32>
    %480 = vector.extract_strided_slice %436 {offsets = [0, 96], sizes = [16, 16], strides = [1, 1]} : vector<32x192xf32> to vector<16x16xf32>
    %481 = vector.extract_strided_slice %436 {offsets = [0, 160], sizes = [16, 16], strides = [1, 1]} : vector<32x192xf32> to vector<16x16xf32>
    %cst_77 = arith.constant dense<0.000000e+00> : vector<16x16xf32>
    %482 = tpu.matmul %479, %480, %cst_77 {dimension_numbers = #tpu.dot_dimension_numbers<[1], [1], [0], [0], [0, 0, 1, 0], [], []>} : vector<16x16xf32>, vector<16x16xf32>, vector<16x16xf32> -> vector<16x16xf32>
    %cst_78 = arith.constant 2.500000e-01 : f32
    %483 = vector.broadcast %cst_78 : f32 to vector<16x16xf32>
    %484 = arith.mulf %482, %483 : vector<16x16xf32>
    %cst_79 = arith.constant dense<0xFF800000> : vector<16xf32>
    %485 = vector.multi_reduction <maximumf>, %484, %cst_79 [1] : vector<16x16xf32> to vector<16xf32>
    %486 = vector.shape_cast %485 : vector<16xf32> to vector<16x1xf32>
    %487 = vector.broadcast %486 : vector<16x1xf32> to vector<16x16xf32>
    %488 = arith.subf %484, %487 : vector<16x16xf32>
    %489 = math.exp %488 : vector<16x16xf32>
    %cst_80 = arith.constant dense<0.000000e+00> : vector<16xf32>
    %490 = vector.multi_reduction <add>, %489, %cst_80 [1] : vector<16x16xf32> to vector<16xf32>
    %491 = vector.shape_cast %490 : vector<16xf32> to vector<16x1xf32>
    %492 = tpu.reciprocal %491 {approx = true} : vector<16x1xf32> -> vector<16x1xf32>
    %493 = vector.broadcast %492 : vector<16x1xf32> to vector<16x16xf32>
    %494 = arith.mulf %489, %493 : vector<16x16xf32>
    %cst_81 = arith.constant dense<0.000000e+00> : vector<16x16xf32>
    %495 = tpu.matmul %494, %481, %cst_81 {dimension_numbers = #tpu.dot_dimension_numbers<[1], [0], [0], [1], [0, 0, 1, 1], [], []>} : vector<16x16xf32>, vector<16x16xf32>, vector<16x16xf32> -> vector<16x16xf32>
    %496 = vector.extract_strided_slice %437 {offsets = [32, 0], sizes = [16, 64], strides = [1, 1]} : vector<64x64xf32> to vector<16x64xf32>
    %cst_82 = arith.constant dense<0.000000e+00> : vector<16x64xf32>
    %497 = tpu.matmul %495, %496, %cst_82 {dimension_numbers = #tpu.dot_dimension_numbers<[1], [0], [0], [1], [0, 0, 1, 1], [], []>} : vector<16x16xf32>, vector<16x64xf32>, vector<16x64xf32> -> vector<16x64xf32>
    %498 = arith.addf %478, %497 : vector<16x64xf32>
    %499 = vector.extract_strided_slice %436 {offsets = [0, 48], sizes = [16, 16], strides = [1, 1]} : vector<32x192xf32> to vector<16x16xf32>
    %500 = vector.extract_strided_slice %436 {offsets = [0, 112], sizes = [16, 16], strides = [1, 1]} : vector<32x192xf32> to vector<16x16xf32>
    %501 = vector.extract_strided_slice %436 {offsets = [0, 176], sizes = [16, 16], strides = [1, 1]} : vector<32x192xf32> to vector<16x16xf32>
    %cst_83 = arith.constant dense<0.000000e+00> : vector<16x16xf32>
    %502 = tpu.matmul %499, %500, %cst_83 {dimension_numbers = #tpu.dot_dimension_numbers<[1], [1], [0], [0], [0, 0, 1, 0], [], []>} : vector<16x16xf32>, vector<16x16xf32>, vector<16x16xf32> -> vector<16x16xf32>
    %cst_84 = arith.constant 2.500000e-01 : f32
    %503 = vector.broadcast %cst_84 : f32 to vector<16x16xf32>
    %504 = arith.mulf %502, %503 : vector<16x16xf32>
    %cst_85 = arith.constant dense<0xFF800000> : vector<16xf32>
    %505 = vector.multi_reduction <maximumf>, %504, %cst_85 [1] : vector<16x16xf32> to vector<16xf32>
    %506 = vector.shape_cast %505 : vector<16xf32> to vector<16x1xf32>
    %507 = vector.broadcast %506 : vector<16x1xf32> to vector<16x16xf32>
    %508 = arith.subf %504, %507 : vector<16x16xf32>
    %509 = math.exp %508 : vector<16x16xf32>
    %cst_86 = arith.constant dense<0.000000e+00> : vector<16xf32>
    %510 = vector.multi_reduction <add>, %509, %cst_86 [1] : vector<16x16xf32> to vector<16xf32>
    %511 = vector.shape_cast %510 : vector<16xf32> to vector<16x1xf32>
    %512 = tpu.reciprocal %511 {approx = true} : vector<16x1xf32> -> vector<16x1xf32>
    %513 = vector.broadcast %512 : vector<16x1xf32> to vector<16x16xf32>
    %514 = arith.mulf %509, %513 : vector<16x16xf32>
    %cst_87 = arith.constant dense<0.000000e+00> : vector<16x16xf32>
    %515 = tpu.matmul %514, %501, %cst_87 {dimension_numbers = #tpu.dot_dimension_numbers<[1], [0], [0], [1], [0, 0, 1, 1], [], []>} : vector<16x16xf32>, vector<16x16xf32>, vector<16x16xf32> -> vector<16x16xf32>
    %516 = vector.extract_strided_slice %437 {offsets = [48, 0], sizes = [16, 64], strides = [1, 1]} : vector<64x64xf32> to vector<16x64xf32>
    %cst_88 = arith.constant dense<0.000000e+00> : vector<16x64xf32>
    %517 = tpu.matmul %515, %516, %cst_88 {dimension_numbers = #tpu.dot_dimension_numbers<[1], [0], [0], [1], [0, 0, 1, 1], [], []>} : vector<16x16xf32>, vector<16x64xf32>, vector<16x64xf32> -> vector<16x64xf32>
    %518 = arith.addf %498, %517 : vector<16x64xf32>
    %cst_89 = arith.constant 0.000000e+00 : f32
    %519 = vector.broadcast %cst_89 : f32 to vector<16x64xf32>
    %520 = vector.extract_strided_slice %436 {offsets = [16, 0], sizes = [16, 16], strides = [1, 1]} : vector<32x192xf32> to vector<16x16xf32>
    %521 = vector.extract_strided_slice %436 {offsets = [16, 64], sizes = [16, 16], strides = [1, 1]} : vector<32x192xf32> to vector<16x16xf32>
    %522 = vector.extract_strided_slice %436 {offsets = [16, 128], sizes = [16, 16], strides = [1, 1]} : vector<32x192xf32> to vector<16x16xf32>
    %cst_90 = arith.constant dense<0.000000e+00> : vector<16x16xf32>
    %523 = tpu.matmul %520, %521, %cst_90 {dimension_numbers = #tpu.dot_dimension_numbers<[1], [1], [0], [0], [0, 0, 1, 0], [], []>} : vector<16x16xf32>, vector<16x16xf32>, vector<16x16xf32> -> vector<16x16xf32>
    %cst_91 = arith.constant 2.500000e-01 : f32
    %524 = vector.broadcast %cst_91 : f32 to vector<16x16xf32>
    %525 = arith.mulf %523, %524 : vector<16x16xf32>
    %cst_92 = arith.constant dense<0xFF800000> : vector<16xf32>
    %526 = vector.multi_reduction <maximumf>, %525, %cst_92 [1] : vector<16x16xf32> to vector<16xf32>
    %527 = vector.shape_cast %526 : vector<16xf32> to vector<16x1xf32>
    %528 = vector.broadcast %527 : vector<16x1xf32> to vector<16x16xf32>
    %529 = arith.subf %525, %528 : vector<16x16xf32>
    %530 = math.exp %529 : vector<16x16xf32>
    %cst_93 = arith.constant dense<0.000000e+00> : vector<16xf32>
    %531 = vector.multi_reduction <add>, %530, %cst_93 [1] : vector<16x16xf32> to vector<16xf32>
    %532 = vector.shape_cast %531 : vector<16xf32> to vector<16x1xf32>
    %533 = tpu.reciprocal %532 {approx = true} : vector<16x1xf32> -> vector<16x1xf32>
    %534 = vector.broadcast %533 : vector<16x1xf32> to vector<16x16xf32>
    %535 = arith.mulf %530, %534 : vector<16x16xf32>
    %cst_94 = arith.constant dense<0.000000e+00> : vector<16x16xf32>
    %536 = tpu.matmul %535, %522, %cst_94 {dimension_numbers = #tpu.dot_dimension_numbers<[1], [0], [0], [1], [0, 0, 1, 1], [], []>} : vector<16x16xf32>, vector<16x16xf32>, vector<16x16xf32> -> vector<16x16xf32>
    %537 = vector.extract_strided_slice %437 {offsets = [0, 0], sizes = [16, 64], strides = [1, 1]} : vector<64x64xf32> to vector<16x64xf32>
    %cst_95 = arith.constant dense<0.000000e+00> : vector<16x64xf32>
    %538 = tpu.matmul %536, %537, %cst_95 {dimension_numbers = #tpu.dot_dimension_numbers<[1], [0], [0], [1], [0, 0, 1, 1], [], []>} : vector<16x16xf32>, vector<16x64xf32>, vector<16x64xf32> -> vector<16x64xf32>
    %539 = arith.addf %519, %538 : vector<16x64xf32>
    %540 = vector.extract_strided_slice %436 {offsets = [16, 16], sizes = [16, 16], strides = [1, 1]} : vector<32x192xf32> to vector<16x16xf32>
    %541 = vector.extract_strided_slice %436 {offsets = [16, 80], sizes = [16, 16], strides = [1, 1]} : vector<32x192xf32> to vector<16x16xf32>
    %542 = vector.extract_strided_slice %436 {offsets = [16, 144], sizes = [16, 16], strides = [1, 1]} : vector<32x192xf32> to vector<16x16xf32>
    %cst_96 = arith.constant dense<0.000000e+00> : vector<16x16xf32>
    %543 = tpu.matmul %540, %541, %cst_96 {dimension_numbers = #tpu.dot_dimension_numbers<[1], [1], [0], [0], [0, 0, 1, 0], [], []>} : vector<16x16xf32>, vector<16x16xf32>, vector<16x16xf32> -> vector<16x16xf32>
    %cst_97 = arith.constant 2.500000e-01 : f32
    %544 = vector.broadcast %cst_97 : f32 to vector<16x16xf32>
    %545 = arith.mulf %543, %544 : vector<16x16xf32>
    %cst_98 = arith.constant dense<0xFF800000> : vector<16xf32>
    %546 = vector.multi_reduction <maximumf>, %545, %cst_98 [1] : vector<16x16xf32> to vector<16xf32>
    %547 = vector.shape_cast %546 : vector<16xf32> to vector<16x1xf32>
    %548 = vector.broadcast %547 : vector<16x1xf32> to vector<16x16xf32>
    %549 = arith.subf %545, %548 : vector<16x16xf32>
    %550 = math.exp %549 : vector<16x16xf32>
    %cst_99 = arith.constant dense<0.000000e+00> : vector<16xf32>
    %551 = vector.multi_reduction <add>, %550, %cst_99 [1] : vector<16x16xf32> to vector<16xf32>
    %552 = vector.shape_cast %551 : vector<16xf32> to vector<16x1xf32>
    %553 = tpu.reciprocal %552 {approx = true} : vector<16x1xf32> -> vector<16x1xf32>
    %554 = vector.broadcast %553 : vector<16x1xf32> to vector<16x16xf32>
    %555 = arith.mulf %550, %554 : vector<16x16xf32>
    %cst_100 = arith.constant dense<0.000000e+00> : vector<16x16xf32>
    %556 = tpu.matmul %555, %542, %cst_100 {dimension_numbers = #tpu.dot_dimension_numbers<[1], [0], [0], [1], [0, 0, 1, 1], [], []>} : vector<16x16xf32>, vector<16x16xf32>, vector<16x16xf32> -> vector<16x16xf32>
    %557 = vector.extract_strided_slice %437 {offsets = [16, 0], sizes = [16, 64], strides = [1, 1]} : vector<64x64xf32> to vector<16x64xf32>
    %cst_101 = arith.constant dense<0.000000e+00> : vector<16x64xf32>
    %558 = tpu.matmul %556, %557, %cst_101 {dimension_numbers = #tpu.dot_dimension_numbers<[1], [0], [0], [1], [0, 0, 1, 1], [], []>} : vector<16x16xf32>, vector<16x64xf32>, vector<16x64xf32> -> vector<16x64xf32>
    %559 = arith.addf %539, %558 : vector<16x64xf32>
    %560 = vector.extract_strided_slice %436 {offsets = [16, 32], sizes = [16, 16], strides = [1, 1]} : vector<32x192xf32> to vector<16x16xf32>
    %561 = vector.extract_strided_slice %436 {offsets = [16, 96], sizes = [16, 16], strides = [1, 1]} : vector<32x192xf32> to vector<16x16xf32>
    %562 = vector.extract_strided_slice %436 {offsets = [16, 160], sizes = [16, 16], strides = [1, 1]} : vector<32x192xf32> to vector<16x16xf32>
    %cst_102 = arith.constant dense<0.000000e+00> : vector<16x16xf32>
    %563 = tpu.matmul %560, %561, %cst_102 {dimension_numbers = #tpu.dot_dimension_numbers<[1], [1], [0], [0], [0, 0, 1, 0], [], []>} : vector<16x16xf32>, vector<16x16xf32>, vector<16x16xf32> -> vector<16x16xf32>
    %cst_103 = arith.constant 2.500000e-01 : f32
    %564 = vector.broadcast %cst_103 : f32 to vector<16x16xf32>
    %565 = arith.mulf %563, %564 : vector<16x16xf32>
    %cst_104 = arith.constant dense<0xFF800000> : vector<16xf32>
    %566 = vector.multi_reduction <maximumf>, %565, %cst_104 [1] : vector<16x16xf32> to vector<16xf32>
    %567 = vector.shape_cast %566 : vector<16xf32> to vector<16x1xf32>
    %568 = vector.broadcast %567 : vector<16x1xf32> to vector<16x16xf32>
    %569 = arith.subf %565, %568 : vector<16x16xf32>
    %570 = math.exp %569 : vector<16x16xf32>
    %cst_105 = arith.constant dense<0.000000e+00> : vector<16xf32>
    %571 = vector.multi_reduction <add>, %570, %cst_105 [1] : vector<16x16xf32> to vector<16xf32>
    %572 = vector.shape_cast %571 : vector<16xf32> to vector<16x1xf32>
    %573 = tpu.reciprocal %572 {approx = true} : vector<16x1xf32> -> vector<16x1xf32>
    %574 = vector.broadcast %573 : vector<16x1xf32> to vector<16x16xf32>
    %575 = arith.mulf %570, %574 : vector<16x16xf32>
    %cst_106 = arith.constant dense<0.000000e+00> : vector<16x16xf32>
    %576 = tpu.matmul %575, %562, %cst_106 {dimension_numbers = #tpu.dot_dimension_numbers<[1], [0], [0], [1], [0, 0, 1, 1], [], []>} : vector<16x16xf32>, vector<16x16xf32>, vector<16x16xf32> -> vector<16x16xf32>
    %577 = vector.extract_strided_slice %437 {offsets = [32, 0], sizes = [16, 64], strides = [1, 1]} : vector<64x64xf32> to vector<16x64xf32>
    %cst_107 = arith.constant dense<0.000000e+00> : vector<16x64xf32>
    %578 = tpu.matmul %576, %577, %cst_107 {dimension_numbers = #tpu.dot_dimension_numbers<[1], [0], [0], [1], [0, 0, 1, 1], [], []>} : vector<16x16xf32>, vector<16x64xf32>, vector<16x64xf32> -> vector<16x64xf32>
    %579 = arith.addf %559, %578 : vector<16x64xf32>
    %580 = vector.extract_strided_slice %436 {offsets = [16, 48], sizes = [16, 16], strides = [1, 1]} : vector<32x192xf32> to vector<16x16xf32>
    %581 = vector.extract_strided_slice %436 {offsets = [16, 112], sizes = [16, 16], strides = [1, 1]} : vector<32x192xf32> to vector<16x16xf32>
    %582 = vector.extract_strided_slice %436 {offsets = [16, 176], sizes = [16, 16], strides = [1, 1]} : vector<32x192xf32> to vector<16x16xf32>
    %cst_108 = arith.constant dense<0.000000e+00> : vector<16x16xf32>
    %583 = tpu.matmul %580, %581, %cst_108 {dimension_numbers = #tpu.dot_dimension_numbers<[1], [1], [0], [0], [0, 0, 1, 0], [], []>} : vector<16x16xf32>, vector<16x16xf32>, vector<16x16xf32> -> vector<16x16xf32>
    %cst_109 = arith.constant 2.500000e-01 : f32
    %584 = vector.broadcast %cst_109 : f32 to vector<16x16xf32>
    %585 = arith.mulf %583, %584 : vector<16x16xf32>
    %cst_110 = arith.constant dense<0xFF800000> : vector<16xf32>
    %586 = vector.multi_reduction <maximumf>, %585, %cst_110 [1] : vector<16x16xf32> to vector<16xf32>
    %587 = vector.shape_cast %586 : vector<16xf32> to vector<16x1xf32>
    %588 = vector.broadcast %587 : vector<16x1xf32> to vector<16x16xf32>
    %589 = arith.subf %585, %588 : vector<16x16xf32>
    %590 = math.exp %589 : vector<16x16xf32>
    %cst_111 = arith.constant dense<0.000000e+00> : vector<16xf32>
    %591 = vector.multi_reduction <add>, %590, %cst_111 [1] : vector<16x16xf32> to vector<16xf32>
    %592 = vector.shape_cast %591 : vector<16xf32> to vector<16x1xf32>
    %593 = tpu.reciprocal %592 {approx = true} : vector<16x1xf32> -> vector<16x1xf32>
    %594 = vector.broadcast %593 : vector<16x1xf32> to vector<16x16xf32>
    %595 = arith.mulf %590, %594 : vector<16x16xf32>
    %cst_112 = arith.constant dense<0.000000e+00> : vector<16x16xf32>
    %596 = tpu.matmul %595, %582, %cst_112 {dimension_numbers = #tpu.dot_dimension_numbers<[1], [0], [0], [1], [0, 0, 1, 1], [], []>} : vector<16x16xf32>, vector<16x16xf32>, vector<16x16xf32> -> vector<16x16xf32>
    %597 = vector.extract_strided_slice %437 {offsets = [48, 0], sizes = [16, 64], strides = [1, 1]} : vector<64x64xf32> to vector<16x64xf32>
    %cst_113 = arith.constant dense<0.000000e+00> : vector<16x64xf32>
    %598 = tpu.matmul %596, %597, %cst_113 {dimension_numbers = #tpu.dot_dimension_numbers<[1], [0], [0], [1], [0, 0, 1, 1], [], []>} : vector<16x16xf32>, vector<16x64xf32>, vector<16x64xf32> -> vector<16x64xf32>
    %599 = arith.addf %579, %598 : vector<16x64xf32>
    %600 = tpu.concatenate %518, %599 in 0 : vector<16x64xf32>, vector<16x64xf32> -> vector<32x64xf32>
    %601 = arith.addf %401, %600 : vector<32x64xf32>
    %c19 = arith.constant 19 : index
    %c0_114 = arith.constant 0 : index
    %602 = vector.load %arg1[%c19, %c0_114] : memref<24x256xf32, #tpu.memory_space<vmem>>, vector<1x64xf32>
    %603 = vector.shape_cast %602 : vector<1x64xf32> to vector<64xf32>
    %604 = vector.shape_cast %603 : vector<64xf32> to vector<1x64xf32>
    %605 = vector.broadcast %604 : vector<1x64xf32> to vector<32x64xf32>
    %606 = arith.addf %601, %605 : vector<32x64xf32>
    %cst_115 = arith.constant dense<0.000000e+00> : vector<32xf32>
    %607 = vector.multi_reduction <add>, %606, %cst_115 [1] : vector<32x64xf32> to vector<32xf32>
    %608 = vector.shape_cast %607 : vector<32xf32> to vector<32x1xf32>
    %cst_116 = arith.constant 6.400000e+01 : f32
    %609 = vector.broadcast %cst_116 : f32 to vector<32x1xf32>
    %610 = arith.divf %608, %609 : vector<32x1xf32>
    %611 = vector.broadcast %610 : vector<32x1xf32> to vector<32x64xf32>
    %612 = arith.subf %606, %611 : vector<32x64xf32>
    %613 = arith.mulf %612, %612 : vector<32x64xf32>
    %cst_117 = arith.constant dense<0.000000e+00> : vector<32xf32>
    %614 = vector.multi_reduction <add>, %613, %cst_117 [1] : vector<32x64xf32> to vector<32xf32>
    %615 = vector.shape_cast %614 : vector<32xf32> to vector<32x1xf32>
    %cst_118 = arith.constant 6.400000e+01 : f32
    %616 = vector.broadcast %cst_118 : f32 to vector<32x1xf32>
    %617 = arith.divf %615, %616 : vector<32x1xf32>
    %618 = vector.broadcast %610 : vector<32x1xf32> to vector<32x64xf32>
    %619 = arith.subf %606, %618 : vector<32x64xf32>
    %cst_119 = arith.constant 9.99999974E-6 : f32
    %620 = vector.broadcast %cst_119 : f32 to vector<32x1xf32>
    %621 = arith.addf %617, %620 : vector<32x1xf32>
    %622 = math.rsqrt %621 : vector<32x1xf32>
    %623 = vector.broadcast %622 : vector<32x1xf32> to vector<32x64xf32>
    %624 = arith.mulf %619, %623 : vector<32x64xf32>
    %c4 = arith.constant 4 : index
    %c0_120 = arith.constant 0 : index
    %625 = vector.load %arg1[%c4, %c0_120] : memref<24x256xf32, #tpu.memory_space<vmem>>, vector<1x64xf32>
    %626 = vector.shape_cast %625 : vector<1x64xf32> to vector<64xf32>
    %627 = vector.shape_cast %626 : vector<64xf32> to vector<1x64xf32>
    %628 = vector.broadcast %627 : vector<1x64xf32> to vector<32x64xf32>
    %629 = arith.mulf %624, %628 : vector<32x64xf32>
    %c5 = arith.constant 5 : index
    %c0_121 = arith.constant 0 : index
    %630 = vector.load %arg1[%c5, %c0_121] : memref<24x256xf32, #tpu.memory_space<vmem>>, vector<1x64xf32>
    %631 = vector.shape_cast %630 : vector<1x64xf32> to vector<64xf32>
    %632 = vector.shape_cast %631 : vector<64xf32> to vector<1x64xf32>
    %633 = vector.broadcast %632 : vector<1x64xf32> to vector<32x64xf32>
    %634 = arith.addf %629, %633 : vector<32x64xf32>
    %c0_122 = arith.constant 0 : index
    %c256_123 = arith.constant 256 : index
    %635 = vector.load %arg2[%c0_122, %c256_123] : memref<64x704xf32, #tpu.memory_space<vmem>>, vector<64x256xf32>
    %cst_124 = arith.constant dense<0.000000e+00> : vector<32x256xf32>
    %636 = tpu.matmul %634, %635, %cst_124 {dimension_numbers = #tpu.dot_dimension_numbers<[1], [0], [0], [1], [0, 0, 1, 1], [], []>} : vector<32x64xf32>, vector<64x256xf32>, vector<32x256xf32> -> vector<32x256xf32>
    %c6 = arith.constant 6 : index
    %c0_125 = arith.constant 0 : index
    %637 = vector.load %arg1[%c6, %c0_125] : memref<24x256xf32, #tpu.memory_space<vmem>>, vector<1x256xf32>
    %638 = vector.shape_cast %637 : vector<1x256xf32> to vector<256xf32>
    %639 = vector.shape_cast %638 : vector<256xf32> to vector<1x256xf32>
    %640 = vector.broadcast %639 : vector<1x256xf32> to vector<32x256xf32>
    %641 = arith.addf %636, %640 : vector<32x256xf32>
    %642 = arith.negf %641 : vector<32x256xf32>
    %643 = math.exp %642 : vector<32x256xf32>
    %cst_126 = arith.constant 1.000000e+00 : f32
    %644 = vector.broadcast %cst_126 : f32 to vector<32x256xf32>
    %645 = arith.addf %644, %643 : vector<32x256xf32>
    %646 = arith.divf %644, %645 : vector<32x256xf32>
    %647 = arith.mulf %641, %646 : vector<32x256xf32>
    %c256_127 = arith.constant 256 : index
    %c0_128 = arith.constant 0 : index
    %648 = vector.load %arg3[%c256_127, %c0_128] : memref<512x64xf32, #tpu.memory_space<vmem>>, vector<256x64xf32>
    %cst_129 = arith.constant dense<0.000000e+00> : vector<32x64xf32>
    %649 = tpu.matmul %647, %648, %cst_129 {dimension_numbers = #tpu.dot_dimension_numbers<[1], [0], [0], [1], [0, 0, 1, 1], [], []>} : vector<32x256xf32>, vector<256x64xf32>, vector<32x64xf32> -> vector<32x64xf32>
    %c7 = arith.constant 7 : index
    %c0_130 = arith.constant 0 : index
    %650 = vector.load %arg1[%c7, %c0_130] : memref<24x256xf32, #tpu.memory_space<vmem>>, vector<1x64xf32>
    %651 = vector.shape_cast %650 : vector<1x64xf32> to vector<64xf32>
    %652 = vector.shape_cast %651 : vector<64xf32> to vector<1x64xf32>
    %653 = vector.broadcast %652 : vector<1x64xf32> to vector<32x64xf32>
    %654 = arith.addf %649, %653 : vector<32x64xf32>
    %cst_131 = arith.constant 5.000000e-01 : f32
    %655 = vector.broadcast %cst_131 : f32 to vector<32x64xf32>
    %656 = arith.mulf %655, %654 : vector<32x64xf32>
    %657 = arith.addf %606, %656 : vector<32x64xf32>
    %cst_132 = arith.constant dense<0.000000e+00> : vector<32xf32>
    %658 = vector.multi_reduction <add>, %657, %cst_132 [1] : vector<32x64xf32> to vector<32xf32>
    %659 = vector.shape_cast %658 : vector<32xf32> to vector<32x1xf32>
    %cst_133 = arith.constant 6.400000e+01 : f32
    %660 = vector.broadcast %cst_133 : f32 to vector<32x1xf32>
    %661 = arith.divf %659, %660 : vector<32x1xf32>
    %662 = vector.broadcast %661 : vector<32x1xf32> to vector<32x64xf32>
    %663 = arith.subf %657, %662 : vector<32x64xf32>
    %664 = arith.mulf %663, %663 : vector<32x64xf32>
    %cst_134 = arith.constant dense<0.000000e+00> : vector<32xf32>
    %665 = vector.multi_reduction <add>, %664, %cst_134 [1] : vector<32x64xf32> to vector<32xf32>
    %666 = vector.shape_cast %665 : vector<32xf32> to vector<32x1xf32>
    %cst_135 = arith.constant 6.400000e+01 : f32
    %667 = vector.broadcast %cst_135 : f32 to vector<32x1xf32>
    %668 = arith.divf %666, %667 : vector<32x1xf32>
    %669 = vector.broadcast %661 : vector<32x1xf32> to vector<32x64xf32>
    %670 = arith.subf %657, %669 : vector<32x64xf32>
    %cst_136 = arith.constant 9.99999974E-6 : f32
    %671 = vector.broadcast %cst_136 : f32 to vector<32x1xf32>
    %672 = arith.addf %668, %671 : vector<32x1xf32>
    %673 = math.rsqrt %672 : vector<32x1xf32>
    %674 = vector.broadcast %673 : vector<32x1xf32> to vector<32x64xf32>
    %675 = arith.mulf %670, %674 : vector<32x64xf32>
    %c20 = arith.constant 20 : index
    %c0_137 = arith.constant 0 : index
    %676 = vector.load %arg1[%c20, %c0_137] : memref<24x256xf32, #tpu.memory_space<vmem>>, vector<1x64xf32>
    %677 = vector.shape_cast %676 : vector<1x64xf32> to vector<64xf32>
    %678 = vector.shape_cast %677 : vector<64xf32> to vector<1x64xf32>
    %679 = vector.broadcast %678 : vector<1x64xf32> to vector<32x64xf32>
    %680 = arith.mulf %675, %679 : vector<32x64xf32>
    %c21 = arith.constant 21 : index
    %c0_138 = arith.constant 0 : index
    %681 = vector.load %arg1[%c21, %c0_138] : memref<24x256xf32, #tpu.memory_space<vmem>>, vector<1x64xf32>
    %682 = vector.shape_cast %681 : vector<1x64xf32> to vector<64xf32>
    %683 = vector.shape_cast %682 : vector<64xf32> to vector<1x64xf32>
    %684 = vector.broadcast %683 : vector<1x64xf32> to vector<32x64xf32>
    %685 = arith.addf %680, %684 : vector<32x64xf32>
    %c0_139 = arith.constant 0 : index
    %c0_140 = arith.constant 0 : index
    %686 = vector.load %arg5[%c0_139, %c0_140] : memref<32x64xf32, #tpu.memory_space<vmem>>, vector<32x64xf32>
    tpu.vector_store %arg5[%c0_139, %c0_140], %685 {strides = array<i32>} : memref<32x64xf32, #tpu.memory_space<vmem>>, vector<32x64xf32>,
    return
  }
}

</mosaic_0001>

<llo_original>
// kernel: conformer_layer_pallas.1
$region0: #{conformer_layer_pallas.1}
  #allocation0 [shape = 'u32[]', space=smem, size = 0x4, offset = 0x4, fixed_abs, tag = 'smem constant byte address 0x4 - core index']
  #allocation1 [shape = 'u32[144,128]{1,0:T(1,128)}', space=vmem, size = 0x12000, scoped, tag = 'internal scratch']
  %s0 = inlined_call_operand.vmem [shape: f32[32,64], index: 0, kind: input, shape index: {}]
  %s1 = inlined_call_operand.vmem [shape: f32[24,256], index: 1, kind: input, shape index: {}]
  %s2 = inlined_call_operand.vmem [shape: f32[64,704], index: 2, kind: input, shape index: {}]
  %s3 = inlined_call_operand.vmem [shape: f32[512,64], index: 3, kind: input, shape index: {}]
  %s4 = inlined_call_operand.vmem [shape: f32[288,64], index: 4, kind: input, shape index: {}]
  %s5 = inlined_call_operand.hbm [shape: f32[32,64], index: 5, kind: output, shape index: {}]
  %s6 = sld [smem:[#allocation0]]
  $region30: #{conformer_layer_pallas.1} parent=0
    _
  %s8 = ssub.s32 1, %s6
  %s9 = scalar_select 0, %s8, %s6
  $region1: #{conformer_layer_pallas.1} parent=0
    #allocation2 [shape = 'u8[16384]{0}', space=vmem, size = 0x4000, scoped, tag = 'output window, operand 0, single buffered']
    #allocation3 [shape = 's32[1]{0}', space=sflag, size = 0x4, scoped, tag = 'scoped memory for conformer_layer_pallas.1']
    %10 = vsyncpa [#allocation3], 0
    // Predicated region
    $region2: #{conformer_layer_pallas.1} parent=1 // pred_check
      _
    $region3: #{conformer_layer_pallas.1} parent=1 // pred_check_branch
      %12 = sbr.rel (0) target = $region5
    $region4: #{conformer_layer_pallas.1} parent=1 // pred_region
      _
    $region5: #{conformer_layer_pallas.1} parent=1 // pred_fallthru
      _
    // Predicated region
    $region6: #{conformer_layer_pallas.1} parent=1 // pred_check
      _
    $region7: #{conformer_layer_pallas.1} parent=1 // pred_check_branch
      %14 = sbr.rel (0) target = $region9
    $region8: #{conformer_layer_pallas.1} parent=1 // pred_region
      _
    $region9: #{conformer_layer_pallas.1} parent=1 // pred_fallthru
      _
    // Predicated region
    $region10: #{conformer_layer_pallas.1} parent=1 // pred_check
      _
    $region11: #{conformer_layer_pallas.1} parent=1 // pred_check_branch
      %16 = sbr.rel (0) target = $region13
    $region12: #{conformer_layer_pallas.1} parent=1 // pred_region
      _
    $region13: #{conformer_layer_pallas.1} parent=1 // pred_fallthru
      _
    // Predicated region
    $region14: #{conformer_layer_pallas.1} parent=1 // pred_check
      _
    $region15: #{conformer_layer_pallas.1} parent=1 // pred_check_branch
      %18 = sbr.rel (0) target = $region17
    $region16: #{conformer_layer_pallas.1} parent=1 // pred_region
      _
    $region17: #{conformer_layer_pallas.1} parent=1 // pred_fallthru
      _
    // Predicated region
    $region18: #{conformer_layer_pallas.1} parent=1 // pred_check
      _
    $region19: #{conformer_layer_pallas.1} parent=1 // pred_check_branch
      %20 = sbr.rel (0) target = $region21
    $region20: #{conformer_layer_pallas.1} parent=1 // pred_region
      _
    $region21: #{conformer_layer_pallas.1} parent=1 // pred_fallthru
      _
    %v21 = vld [vmem:[%s0] sm:$0xff]
    %v22 = vld [vmem:[%s0 + $0x8] sm:$0xff]
    %v23 = vld [vmem:[%s0 + $0x10] sm:$0xff]
    %v24 = vld [vmem:[%s0 + $0x18] sm:$0xff]
    %vm25 = vcmask 523264
    %v26 = vsel %vm25, %v21, 0.0
    %27 = vadd.xlane.f32.xlu0 %v26
    %v28 = vpop.xlane.xlu0 %27
    %v29 = vsel %vm25, %v22, 0.0
    %30 = vadd.xlane.f32.xlu0 %v29
    %v31 = vpop.xlane.xlu0 %30
    %v32 = vsel %vm25, %v23, 0.0
    %33 = vadd.xlane.f32.xlu0 %v32
    %v34 = vpop.xlane.xlu0 %33
    %v35 = vsel %vm25, %v24, 0.0
    %36 = vadd.xlane.f32.xlu0 %v35
    %v37 = vpop.xlane.xlu0 %36
    %v38 = vrcp.pop 64.0
    %v39 = vmul.f32 %v28, %v38
    %v40 = vmul.f32 %v31, %v38
    %v41 = vmul.f32 %v34, %v38
    %v42 = vmul.f32 %v37, %v38
    %v43 = vsub.f32 %v21, %v39
    %v44 = vsub.f32 %v22, %v40
    %v45 = vsub.f32 %v23, %v41
    %v46 = vsub.f32 %v24, %v42
    %v47 = vmul.f32 %v43, %v43
    %v48 = vmul.f32 %v44, %v44
    %v49 = vmul.f32 %v45, %v45
    %v50 = vmul.f32 %v46, %v46
    %v51 = vsel %vm25, %v47, 0.0
    %52 = vadd.xlane.f32.xlu0 %v51
    %v53 = vpop.xlane.xlu0 %52
    %v54 = vsel %vm25, %v48, 0.0
    %55 = vadd.xlane.f32.xlu0 %v54
    %v56 = vpop.xlane.xlu0 %55
    %v57 = vsel %vm25, %v49, 0.0
    %58 = vadd.xlane.f32.xlu0 %v57
    %v59 = vpop.xlane.xlu0 %58
    %v60 = vsel %vm25, %v50, 0.0
    %61 = vadd.xlane.f32.xlu0 %v60
    %v62 = vpop.xlane.xlu0 %61
    %v63 = vmul.f32 %v53, %v38
    %v64 = vmul.f32 %v56, %v38
    %v65 = vmul.f32 %v59, %v38
    %v66 = vmul.f32 %v62, %v38
    %v67 = vadd.f32 %v63, 1e-05
    %v68 = vadd.f32 %v64, 1e-05
    %v69 = vadd.f32 %v65, 1e-05
    %v70 = vadd.f32 %v66, 1e-05
    %v71 = vrsqrt.pop %v67
    %v72 = vrsqrt.pop %v68
    %v73 = vrsqrt.pop %v69
    %v74 = vrsqrt.pop %v70
    %v75 = vmul.f32 %v43, %v71
    %v76 = vmul.f32 %v44, %v72
    %v77 = vmul.f32 %v45, %v73
    %v78 = vmul.f32 %v46, %v74
    %v79 = vld [vmem:[%s1] ss:$0 sm:$0xff]
    %v80 = vmul.f32 %v75, %v79
    %v81 = vmul.f32 %v76, %v79
    %v82 = vmul.f32 %v77, %v79
    %v83 = vmul.f32 %v78, %v79
    %v84 = vld [vmem:[%s1 + $0x1] ss:$0 sm:$0xff]
    %v85 = vadd.f32 %v80, %v84
    %v86 = vadd.f32 %v81, %v84
    %v87 = vadd.f32 %v82, %v84
    %v88 = vadd.f32 %v83, %v84
    %v89 = vld [vmem:[%s2] sm:$0xff]
    %v90 = vld [vmem:[%s2 + $0x8] sm:$0xff]
    %v91 = vld [vmem:[%s2 + $0x30] sm:$0xff]
    %v92 = vld [vmem:[%s2 + $0x38] sm:$0xff]
    %v93 = vld [vmem:[%s2 + $0x60] sm:$0xff]
    %v94 = vld [vmem:[%s2 + $0x68] sm:$0xff]
    %v95 = vld [vmem:[%s2 + $0x90] sm:$0xff]
    %v96 = vld [vmem:[%s2 + $0x98] sm:$0xff]
    %v97 = vld [vmem:[%s2 + $0xc0] sm:$0xff]
    %v98 = vld [vmem:[%s2 + $0xc8] sm:$0xff]
    %v99 = vld [vmem:[%s2 + $0xf0] sm:$0xff]
    %v100 = vld [vmem:[%s2 + $0xf8] sm:$0xff]
    %v101 = vld [vmem:[%s2 + $0x120] sm:$0xff]
    %v102 = vld [vmem:[%s2 + $0x128] sm:$0xff]
    %v103 = vld [vmem:[%s2 + $0x150] sm:$0xff]
    %v104 = vld [vmem:[%s2 + $0x158] sm:$0xff]
    %s105 = scalar_lea.vmem %s1, 2
    %v106 = vld [vmem:[%s105] ss:$8 sm:$0x3]
    %v108 = vlaneseq
    %v109 = vshrl.u32 %v108, 7
    %v110 = vsub.s32 0, %v109
    %v111 = vrot.slane %v106, %v110
    %v112 = vlaneseq
    %v113 = vshrl.u32 %v112, 7
    %v114 = vsub.s32 1, %v113
    %v115 = vrot.slane %v106, %v114
    %v119 = vsel %vm25, %v85, 0
    %v122 = vsel %vm25, %v86, 0
    %v125 = vsel %vm25, %v87, 0
    %v128 = vsel %vm25, %v88, 0
    %130 = vmatprep.subr.mxu0 %v90
    %131 = vmatpush1.msra.mxu0 %v89
    %132 = vmatprep.subr.mxu0 %v92
    %133 = vmatpush1.msra.mxu0 %v91
    %134 = vmatprep.subr.mxu0 %v94
    %135 = vmatpush1.msra.mxu0 %v93
    %136 = vmatprep.subr.mxu0 %v96
    %137 = vmatpush1.msra.mxu0 %v95
    %138 = vmatprep.subr.mxu0 %v98
    %139 = vmatpush1.msra.mxu0 %v97
    %140 = vmatprep.subr.mxu0 %v100
    %141 = vmatpush1.msra.mxu0 %v99
    %142 = vmatprep.subr.mxu0 %v102
    %143 = vmatpush1.msra.mxu0 %v101
    %144 = vmatprep.subr.mxu0 %v104
    %145 = vmatpush1.msra.mxu0 %v103
    %146 = vmatprep.subr.mxu0 0.0
    %147 = vmatpush1.msra.mxu0 0.0
    %148 = vmatprep.subr.mxu0 0.0
    %149 = vmatpush1.msra.mxu0 0.0
    %150 = vmatprep.subr.mxu0 0.0
    %151 = vmatpush1.msra.mxu0 0.0
    %152 = vmatprep.subr.mxu0 0.0
    %153 = vmatpush1.msra.mxu0 0.0
    %154 = vmatprep.subr.mxu0 0.0
    %155 = vmatpush1.msra.mxu0 0.0
    %156 = vmatprep.subr.mxu0 0.0
    %157 = vmatpush1.msra.mxu0 0.0
    %158 = vmatprep.subr.mxu0 0.0
    %159 = vmatpush1.msra.mxu0 0.0
    %160 = vmatprep.subr.mxu0 0.0
    %161 = vmatpush1.msra.mxu0 0.0
    %162 = vmatprep.subr.mxu0 0.0
    %163 = vmatpush1.msra.mxu0 0.0
    %164 = vmatprep.subr.mxu0 0.0
    %165 = vmatpush1.msra.mxu0 0.0
    %166 = vmatprep.subr.mxu0 0.0
    %167 = vmatpush1.msra.mxu0 0.0
    %168 = vmatprep.subr.mxu0 0.0
    %169 = vmatpush1.msra.mxu0 0.0
    %170 = vmatprep.subr.mxu0 0.0
    %171 = vmatpush1.msra.mxu0 0.0
    %172 = vmatprep.subr.mxu0 0.0
    %173 = vmatpush1.msra.mxu0 0.0
    %174 = vmatprep.subr.mxu0 0.0
    %175 = vmatpush1.msra.mxu0 0.0
    %176 = vmatprep.subr.mxu0 0.0
    %177 = vmatpush1.msra.mxu0 0.0
    %178 = vmatprep.subr.mxu0 0.0
    %179 = vmatpush1.msra.mxu0 0.0
    %180 = vmatprep.subr.mxu0 0.0
    %181 = vmatpush1.msra.mxu0 0.0
    %182 = vmatprep.subr.mxu0 0.0
    %183 = vmatpush1.msra.mxu0 0.0
    %184 = vmatprep.subr.mxu0 0.0
    %185 = vmatpush1.msra.mxu0 0.0
    %186 = vmatprep.subr.mxu0 0.0
    %187 = vmatpush1.msra.mxu0 0.0
    %188 = vmatprep.subr.mxu0 0.0
    %189 = vmatpush1.msra.mxu0 0.0
    %190 = vmatprep.subr.mxu0 0.0
    %191 = vmatpush1.msra.mxu0 0.0
    %192 = vmatprep.subr.mxu0 0.0
    %193 = vmatpush1.msra.mxu0 0.0
    %194 = vmatprep.mubr.f32.mxu0 0.0
    %195 = vmatmul.mubr.f32.gmra.mrb[0].mxu0 %v119
    %v196 = vpop.f32.mrb[0].mxu0
    %v197 = vadd.f32 %v111, %v196
    %v198 = vpop.f32.mrb[0].mxu0
    %v199 = vadd.f32 %v115, %v198
    %200 = vmatprep.mubr.f32.mxu0 0.0
    %201 = vmatmul.mubr.f32.gmra.mrb[0].mxu0 %v122
    %v202 = vpop.f32.mrb[0].mxu0
    %v203 = vadd.f32 %v111, %v202
    %v204 = vpop.f32.mrb[0].mxu0
    %v205 = vadd.f32 %v115, %v204
    %206 = vmatprep.mubr.f32.mxu0 0.0
    %207 = vmatmul.mubr.f32.gmra.mrb[0].mxu0 %v125
    %v208 = vpop.f32.mrb[0].mxu0
    %v209 = vadd.f32 %v111, %v208
    %v210 = vpop.f32.mrb[0].mxu0
    %v211 = vadd.f32 %v115, %v210
    %212 = vmatprep.mubr.f32.mxu0 0.0
    %213 = vmatmul.mubr.f32.gmra.mrb[0].mxu0 %v128
    %v214 = vpop.f32.mrb[0].mxu0
    %v215 = vadd.f32 %v111, %v214
    %v216 = vpop.f32.mrb[0].mxu0
    %v217 = vadd.f32 %v115, %v216
    %218 = vdwg.mxu0
    %v219 = vxor.u32 %v197, 2147483648
    %v220 = vxor.u32 %v199, 2147483648
    %v221 = vxor.u32 %v203, 2147483648
    %v222 = vxor.u32 %v205, 2147483648
    %v223 = vxor.u32 %v209, 2147483648
    %v224 = vxor.u32 %v211, 2147483648
    %v225 = vxor.u32 %v215, 2147483648
    %v226 = vxor.u32 %v217, 2147483648
    %v227 = vmul.f32 %v219, 1.442695
    %v228 = vpow.pop %v227
    %v229 = vmul.f32 %v220, 1.442695
    %v230 = vpow.pop %v229
    %v231 = vmul.f32 %v221, 1.442695
    %v232 = vpow.pop %v231
    %v233 = vmul.f32 %v222, 1.442695
    %v234 = vpow.pop %v233
    %v235 = vmul.f32 %v223, 1.442695
    %v236 = vpow.pop %v235
    %v237 = vmul.f32 %v224, 1.442695
    %v238 = vpow.pop %v237
    %v239 = vmul.f32 %v225, 1.442695
    %v240 = vpow.pop %v239
    %v241 = vmul.f32 %v226, 1.442695
    %v242 = vpow.pop %v241
    %v243 = vadd.f32 %v228, 1.0
    %v244 = vadd.f32 %v230, 1.0
    %v245 = vadd.f32 %v232, 1.0
    %v246 = vadd.f32 %v234, 1.0
    %v247 = vadd.f32 %v236, 1.0
    %v248 = vadd.f32 %v238, 1.0
    %v249 = vadd.f32 %v240, 1.0
    %v250 = vadd.f32 %v242, 1.0
    %v251 = vrcp.pop %v243
    %v252 = vmul.f32 1.0, %v251
    %v253 = vrcp.pop %v244
    %v254 = vmul.f32 1.0, %v253
    %v255 = vrcp.pop %v245
    %v256 = vmul.f32 1.0, %v255
    %v257 = vrcp.pop %v246
    %v258 = vmul.f32 1.0, %v257
    %v259 = vrcp.pop %v247
    %v260 = vmul.f32 1.0, %v259
    %v261 = vrcp.pop %v248
    %v262 = vmul.f32 1.0, %v261
    %v263 = vrcp.pop %v249
    %v264 = vmul.f32 1.0, %v263
    %v265 = vrcp.pop %v250
    %v266 = vmul.f32 1.0, %v265
    %v267 = vmul.f32 %v197, %v252
    %v268 = vmul.f32 %v199, %v254
    %v269 = vmul.f32 %v203, %v256
    %v270 = vmul.f32 %v205, %v258
    %v271 = vmul.f32 %v209, %v260
    %v272 = vmul.f32 %v211, %v262
    %v273 = vmul.f32 %v215, %v264
    %v274 = vmul.f32 %v217, %v266
    %v275 = vld [vmem:[%s3] sm:$0xff]
    %v276 = vld [vmem:[%s3 + $0x8] sm:$0xff]
    %v277 = vld [vmem:[%s3 + $0x10] sm:$0xff]
    %v278 = vld [vmem:[%s3 + $0x18] sm:$0xff]
    %v279 = vld [vmem:[%s3 + $0x20] sm:$0xff]
    %v280 = vld [vmem:[%s3 + $0x28] sm:$0xff]
    %v281 = vld [vmem:[%s3 + $0x30] sm:$0xff]
    %v282 = vld [vmem:[%s3 + $0x38] sm:$0xff]
    %v283 = vld [vmem:[%s3 + $0x40] sm:$0xff]
    %v284 = vld [vmem:[%s3 + $0x48] sm:$0xff]
    %v285 = vld [vmem:[%s3 + $0x50] sm:$0xff]
    %v286 = vld [vmem:[%s3 + $0x58] sm:$0xff]
    %v287 = vld [vmem:[%s3 + $0x60] sm:$0xff]
    %v288 = vld [vmem:[%s3 + $0x68] sm:$0xff]
    %v289 = vld [vmem:[%s3 + $0x70] sm:$0xff]
    %v290 = vld [vmem:[%s3 + $0x78] sm:$0xff]
    %v291 = vld [vmem:[%s3 + $0x80] sm:$0xff]
    %v292 = vld [vmem:[%s3 + $0x88] sm:$0xff]
    %v293 = vld [vmem:[%s3 + $0x90] sm:$0xff]
    %v294 = vld [vmem:[%s3 + $0x98] sm:$0xff]
    %v295 = vld [vmem:[%s3 + $0xa0] sm:$0xff]
    %v296 = vld [vmem:[%s3 + $0xa8] sm:$0xff]
    %v297 = vld [vmem:[%s3 + $0xb0] sm:$0xff]
    %v298 = vld [vmem:[%s3 + $0xb8] sm:$0xff]
    %v299 = vld [vmem:[%s3 + $0xc0] sm:$0xff]
    %v300 = vld [vmem:[%s3 + $0xc8] sm:$0xff]
    %v301 = vld [vmem:[%s3 + $0xd0] sm:$0xff]
    %v302 = vld [vmem:[%s3 + $0xd8] sm:$0xff]
    %v303 = vld [vmem:[%s3 + $0xe0] sm:$0xff]
    %v304 = vld [vmem:[%s3 + $0xe8] sm:$0xff]
    %v305 = vld [vmem:[%s3 + $0xf0] sm:$0xff]
    %v306 = vld [vmem:[%s3 + $0xf8] sm:$0xff]
    %v307 = vld [vmem:[%s1 + $0x3] ss:$0 sm:$0xff]
    %308 = vmatprep.subr.mxu0 0.0
    %309 = vmatpush1.msra.mxu0 %v275
    %310 = vmatprep.subr.mxu0 0.0
    %311 = vmatpush1.msra.mxu0 %v276
    %312 = vmatprep.subr.mxu0 0.0
    %313 = vmatpush1.msra.mxu0 %v277
    %314 = vmatprep.subr.mxu0 0.0
    %315 = vmatpush1.msra.mxu0 %v278
    %316 = vmatprep.subr.mxu0 0.0
    %317 = vmatpush1.msra.mxu0 %v279
    %318 = vmatprep.subr.mxu0 0.0
    %319 = vmatpush1.msra.mxu0 %v280
    %320 = vmatprep.subr.mxu0 0.0
    %321 = vmatpush1.msra.mxu0 %v281
    %322 = vmatprep.subr.mxu0 0.0
    %323 = vmatpush1.msra.mxu0 %v282
    %324 = vmatprep.subr.mxu0 0.0
    %325 = vmatpush1.msra.mxu0 %v283
    %326 = vmatprep.subr.mxu0 0.0
    %327 = vmatpush1.msra.mxu0 %v284
    %328 = vmatprep.subr.mxu0 0.0
    %329 = vmatpush1.msra.mxu0 %v285
    %330 = vmatprep.subr.mxu0 0.0
    %331 = vmatpush1.msra.mxu0 %v286
    %332 = vmatprep.subr.mxu0 0.0
    %333 = vmatpush1.msra.mxu0 %v287
    %334 = vmatprep.subr.mxu0 0.0
    %335 = vmatpush1.msra.mxu0 %v288
    %336 = vmatprep.subr.mxu0 0.0
    %337 = vmatpush1.msra.mxu0 %v289
    %338 = vmatprep.subr.mxu0 0.0
    %339 = vmatpush1.msra.mxu0 %v290
    %340 = vmatprep.subr.mxu0 0.0
    %341 = vmatpush1.msra.mxu0 %v291
    %342 = vmatprep.subr.mxu0 0.0
    %343 = vmatpush1.msra.mxu0 %v292
    %344 = vmatprep.subr.mxu0 0.0
    %345 = vmatpush1.msra.mxu0 %v293
    %346 = vmatprep.subr.mxu0 0.0
    %347 = vmatpush1.msra.mxu0 %v294
    %348 = vmatprep.subr.mxu0 0.0
    %349 = vmatpush1.msra.mxu0 %v295
    %350 = vmatprep.subr.mxu0 0.0
    %351 = vmatpush1.msra.mxu0 %v296
    %352 = vmatprep.subr.mxu0 0.0
    %353 = vmatpush1.msra.mxu0 %v297
    %354 = vmatprep.subr.mxu0 0.0
    %355 = vmatpush1.msra.mxu0 %v298
    %356 = vmatprep.subr.mxu0 0.0
    %357 = vmatpush1.msra.mxu0 %v299
    %358 = vmatprep.subr.mxu0 0.0
    %359 = vmatpush1.msra.mxu0 %v300
    %360 = vmatprep.subr.mxu0 0.0
    %361 = vmatpush1.msra.mxu0 %v301
    %362 = vmatprep.subr.mxu0 0.0
    %363 = vmatpush1.msra.mxu0 %v302
    %364 = vmatprep.subr.mxu0 0.0
    %365 = vmatpush1.msra.mxu0 %v303
    %366 = vmatprep.subr.mxu0 0.0
    %367 = vmatpush1.msra.mxu0 %v304
    %368 = vmatprep.subr.mxu0 0.0
    %369 = vmatpush1.msra.mxu0 %v305
    %370 = vmatprep.subr.mxu0 0.0
    %371 = vmatpush1.msra.mxu0 %v306
    %372 = vmatprep.mubr.f32.mxu0 %v268
    %373 = vmatmul.mubr.f32.gmra.mrb[0].mxu0 %v267
    %v374 = vpop.f32.mrb[0].mxu0
    %v375 = vadd.f32 %v307, %v374
    %v376 = vpop.f32.mrb[0].mxu0
    %377 = vmatprep.mubr.f32.mxu0 %v270
    %378 = vmatmul.mubr.f32.gmra.mrb[0].mxu0 %v269
    %v379 = vpop.f32.mrb[0].mxu0
    %v380 = vadd.f32 %v307, %v379
    %v381 = vpop.f32.mrb[0].mxu0
    %382 = vmatprep.mubr.f32.mxu0 %v272
    %383 = vmatmul.mubr.f32.gmra.mrb[0].mxu0 %v271
    %v384 = vpop.f32.mrb[0].mxu0
    %v385 = vadd.f32 %v307, %v384
    %v386 = vpop.f32.mrb[0].mxu0
    %387 = vmatprep.mubr.f32.mxu0 %v274
    %388 = vmatmul.mubr.f32.gmra.mrb[0].mxu0 %v273
    %v389 = vpop.f32.mrb[0].mxu0
    %v390 = vadd.f32 %v307, %v389
    %v391 = vpop.f32.mrb[0].mxu0
    %392 = vdwg.mxu0
    %v393 = vmul.f32 %v375, 0.5
    %v394 = vmul.f32 %v380, 0.5
    %v395 = vmul.f32 %v385, 0.5
    %v396 = vmul.f32 %v390, 0.5
    %v397 = vadd.f32 %v21, %v393
    %v398 = vadd.f32 %v22, %v394
    %v399 = vadd.f32 %v23, %v395
    %v400 = vadd.f32 %v24, %v396
    %v401 = vsel %vm25, %v397, 0.0
    %402 = vadd.xlane.f32.xlu0 %v401
    %v403 = vpop.xlane.xlu0 %402
    %v404 = vsel %vm25, %v398, 0.0
    %405 = vadd.xlane.f32.xlu0 %v404
    %v406 = vpop.xlane.xlu0 %405
    %v407 = vsel %vm25, %v399, 0.0
    %408 = vadd.xlane.f32.xlu0 %v407
    %v409 = vpop.xlane.xlu0 %408
    %v410 = vsel %vm25, %v400, 0.0
    %411 = vadd.xlane.f32.xlu0 %v410
    %v412 = vpop.xlane.xlu0 %411
    %v413 = vmul.f32 %v403, %v38
    %v414 = vmul.f32 %v406, %v38
    %v415 = vmul.f32 %v409, %v38
    %v416 = vmul.f32 %v412, %v38
    %v417 = vsub.f32 %v397, %v413
    %v418 = vsub.f32 %v398, %v414
    %v419 = vsub.f32 %v399, %v415
    %v420 = vsub.f32 %v400, %v416
    %v421 = vmul.f32 %v417, %v417
    %v422 = vmul.f32 %v418, %v418
    %v423 = vmul.f32 %v419, %v419
    %v424 = vmul.f32 %v420, %v420
    %v425 = vsel %vm25, %v421, 0.0
    %426 = vadd.xlane.f32.xlu0 %v425
    %v427 = vpop.xlane.xlu0 %426
    %v428 = vsel %vm25, %v422, 0.0
    %429 = vadd.xlane.f32.xlu0 %v428
    %v430 = vpop.xlane.xlu0 %429
    %v431 = vsel %vm25, %v423, 0.0
    %432 = vadd.xlane.f32.xlu0 %v431
    %v433 = vpop.xlane.xlu0 %432
    %v434 = vsel %vm25, %v424, 0.0
    %435 = vadd.xlane.f32.xlu0 %v434
    %v436 = vpop.xlane.xlu0 %435
    %v437 = vmul.f32 %v427, %v38
    %v438 = vmul.f32 %v430, %v38
    %v439 = vmul.f32 %v433, %v38
    %v440 = vmul.f32 %v436, %v38
    %v441 = vadd.f32 %v437, 1e-05
    %v442 = vadd.f32 %v438, 1e-05
    %v443 = vadd.f32 %v439, 1e-05
    %v444 = vadd.f32 %v440, 1e-05
    %v445 = vrsqrt.pop %v441
    %v446 = vrsqrt.pop %v442
    %v447 = vrsqrt.pop %v443
    %v448 = vrsqrt.pop %v444
    %v449 = vmul.f32 %v417, %v445
    %v450 = vmul.f32 %v418, %v446
    %v451 = vmul.f32 %v419, %v447
    %v452 = vmul.f32 %v420, %v448
    %v453 = vld [vmem:[%s1 + $0x10] ss:$0 sm:$0xff]
    %v454 = vmul.f32 %v449, %v453
    %v455 = vmul.f32 %v450, %v453
    %v456 = vmul.f32 %v451, %v453
    %v457 = vmul.f32 %v452, %v453
    %v458 = vld [vmem:[%s1 + $0x11] ss:$0 sm:$0xff]
    %v459 = vadd.f32 %v454, %v458
    %v460 = vadd.f32 %v455, %v458
    %v461 = vadd.f32 %v456, %v458
    %v462 = vadd.f32 %v457, %v458
    %v463 = vld [vmem:[%s4] sm:$0xff]
    %v464 = vld [vmem:[%s4 + $0x8] sm:$0xff]
    %v465 = vld [vmem:[%s4 + $0x10] sm:$0xff]
    %v466 = vld [vmem:[%s4 + $0x18] sm:$0xff]
    %v467 = vld [vmem:[%s4 + $0x20] sm:$0xff]
    %v468 = vld [vmem:[%s4 + $0x28] sm:$0xff]
    %v469 = vld [vmem:[%s4 + $0x30] sm:$0xff]
    %v470 = vld [vmem:[%s4 + $0x38] sm:$0xff]
    %v471 = vld [vmem:[%s1 + $0x12] ss:$0 sm:$0xff]
    %v473 = vsel %vm25, %v459, 0
    %v476 = vsel %vm25, %v460, 0
    %v479 = vsel %vm25, %v461, 0
    %v482 = vsel %vm25, %v462, 0
    %484 = vmatprep.subr.mxu0 0.0
    %485 = vmatpush1.msra.mxu0 %v463
    %486 = vmatprep.subr.mxu0 0.0
    %487 = vmatpush1.msra.mxu0 %v464
    %488 = vmatprep.subr.mxu0 0.0
    %489 = vmatpush1.msra.mxu0 %v465
    %490 = vmatprep.subr.mxu0 0.0
    %491 = vmatpush1.msra.mxu0 %v466
    %492 = vmatprep.subr.mxu0 0.0
    %493 = vmatpush1.msra.mxu0 %v467
    %494 = vmatprep.subr.mxu0 0.0
    %495 = vmatpush1.msra.mxu0 %v468
    %496 = vmatprep.subr.mxu0 0.0
    %497 = vmatpush1.msra.mxu0 %v469
    %498 = vmatprep.subr.mxu0 0.0
    %499 = vmatpush1.msra.mxu0 %v470
    %500 = vmatprep.subr.mxu0 0.0
    %501 = vmatpush1.msra.mxu0 0.0
    %502 = vmatprep.subr.mxu0 0.0
    %503 = vmatpush1.msra.mxu0 0.0
    %504 = vmatprep.subr.mxu0 0.0
    %505 = vmatpush1.msra.mxu0 0.0
    %506 = vmatprep.subr.mxu0 0.0
    %507 = vmatpush1.msra.mxu0 0.0
    %508 = vmatprep.subr.mxu0 0.0
    %509 = vmatpush1.msra.mxu0 0.0
    %510 = vmatprep.subr.mxu0 0.0
    %511 = vmatpush1.msra.mxu0 0.0
    %512 = vmatprep.subr.mxu0 0.0
    %513 = vmatpush1.msra.mxu0 0.0
    %514 = vmatprep.subr.mxu0 0.0
    %515 = vmatpush1.msra.mxu0 0.0
    %516 = vmatprep.subr.mxu0 0.0
    %517 = vmatpush1.msra.mxu0 0.0
    %518 = vmatprep.subr.mxu0 0.0
    %519 = vmatpush1.msra.mxu0 0.0
    %520 = vmatprep.subr.mxu0 0.0
    %521 = vmatpush1.msra.mxu0 0.0
    %522 = vmatprep.subr.mxu0 0.0
    %523 = vmatpush1.msra.mxu0 0.0
    %524 = vmatprep.subr.mxu0 0.0
    %525 = vmatpush1.msra.mxu0 0.0
    %526 = vmatprep.subr.mxu0 0.0
    %527 = vmatpush1.msra.mxu0 0.0
    %528 = vmatprep.subr.mxu0 0.0
    %529 = vmatpush1.msra.mxu0 0.0
    %530 = vmatprep.subr.mxu0 0.0
    %531 = vmatpush1.msra.mxu0 0.0
    %532 = vmatprep.subr.mxu0 0.0
    %533 = vmatpush1.msra.mxu0 0.0
    %534 = vmatprep.subr.mxu0 0.0
    %535 = vmatpush1.msra.mxu0 0.0
    %536 = vmatprep.subr.mxu0 0.0
    %537 = vmatpush1.msra.mxu0 0.0
    %538 = vmatprep.subr.mxu0 0.0
    %539 = vmatpush1.msra.mxu0 0.0
    %540 = vmatprep.subr.mxu0 0.0
    %541 = vmatpush1.msra.mxu0 0.0
    %542 = vmatprep.subr.mxu0 0.0
    %543 = vmatpush1.msra.mxu0 0.0
    %544 = vmatprep.subr.mxu0 0.0
    %545 = vmatpush1.msra.mxu0 0.0
    %546 = vmatprep.subr.mxu0 0.0
    %547 = vmatpush1.msra.mxu0 0.0
    %548 = vmatprep.mubr.f32.mxu0 0.0
    %549 = vmatmul.mubr.f32.gmra.mrb[0].mxu0 %v473
    %v550 = vpop.f32.mrb[0].mxu0
    %v551 = vadd.f32 %v471, %v550
    %v552 = vpop.f32.mrb[0].mxu0
    %553 = vmatprep.mubr.f32.mxu0 0.0
    %554 = vmatmul.mubr.f32.gmra.mrb[0].mxu0 %v476
    %v555 = vpop.f32.mrb[0].mxu0
    %v556 = vadd.f32 %v471, %v555
    %v557 = vpop.f32.mrb[0].mxu0
    %558 = vmatprep.mubr.f32.mxu0 0.0
    %559 = vmatmul.mubr.f32.gmra.mrb[0].mxu0 %v479
    %v560 = vpop.f32.mrb[0].mxu0
    %v561 = vadd.f32 %v471, %v560
    %v562 = vpop.f32.mrb[0].mxu0
    %563 = vmatprep.mubr.f32.mxu0 0.0
    %564 = vmatmul.mubr.f32.gmra.mrb[0].mxu0 %v482
    %v565 = vpop.f32.mrb[0].mxu0
    %v566 = vadd.f32 %v471, %v565
    %v567 = vpop.f32.mrb[0].mxu0
    %568 = vdwg.mxu0
    %v569 = vld [vmem:[%s4 + $0x40] sm:$0xff]
    %v570 = vld [vmem:[%s4 + $0x48] sm:$0xff]
    %v571 = vld [vmem:[%s4 + $0x50] sm:$0xff]
    %v572 = vld [vmem:[%s4 + $0x58] sm:$0xff]
    %v573 = vld [vmem:[%s4 + $0x60] sm:$0xff]
    %v574 = vld [vmem:[%s4 + $0x68] sm:$0xff]
    %v575 = vld [vmem:[%s4 + $0x70] sm:$0xff]
    %v576 = vld [vmem:[%s4 + $0x78] sm:$0xff]
    %v577 = vld [vmem:[%s1 + $0x13] ss:$0 sm:$0xff]
    %578 = vmatprep.subr.mxu0 0.0
    %579 = vmatpush1.msra.mxu0 %v569
    %580 = vmatprep.subr.mxu0 0.0
    %581 = vmatpush1.msra.mxu0 %v570
    %582 = vmatprep.subr.mxu0 0.0
    %583 = vmatpush1.msra.mxu0 %v571
    %584 = vmatprep.subr.mxu0 0.0
    %585 = vmatpush1.msra.mxu0 %v572
    %586 = vmatprep.subr.mxu0 0.0
    %587 = vmatpush1.msra.mxu0 %v573
    %588 = vmatprep.subr.mxu0 0.0
    %589 = vmatpush1.msra.mxu0 %v574
    %590 = vmatprep.subr.mxu0 0.0
    %591 = vmatpush1.msra.mxu0 %v575
    %592 = vmatprep.subr.mxu0 0.0
    %593 = vmatpush1.msra.mxu0 %v576
    %594 = vmatprep.subr.mxu0 0.0
    %595 = vmatpush1.msra.mxu0 0.0
    %596 = vmatprep.subr.mxu0 0.0
    %597 = vmatpush1.msra.mxu0 0.0
    %598 = vmatprep.subr.mxu0 0.0
    %599 = vmatpush1.msra.mxu0 0.0
    %600 = vmatprep.subr.mxu0 0.0
    %601 = vmatpush1.msra.mxu0 0.0
    %602 = vmatprep.subr.mxu0 0.0
    %603 = vmatpush1.msra.mxu0 0.0
    %604 = vmatprep.subr.mxu0 0.0
    %605 = vmatpush1.msra.mxu0 0.0
    %606 = vmatprep.subr.mxu0 0.0
    %607 = vmatpush1.msra.mxu0 0.0
    %608 = vmatprep.subr.mxu0 0.0
    %609 = vmatpush1.msra.mxu0 0.0
    %610 = vmatprep.subr.mxu0 0.0
    %611 = vmatpush1.msra.mxu0 0.0
    %612 = vmatprep.subr.mxu0 0.0
    %613 = vmatpush1.msra.mxu0 0.0
    %614 = vmatprep.subr.mxu0 0.0
    %615 = vmatpush1.msra.mxu0 0.0
    %616 = vmatprep.subr.mxu0 0.0
    %617 = vmatpush1.msra.mxu0 0.0
    %618 = vmatprep.subr.mxu0 0.0
    %619 = vmatpush1.msra.mxu0 0.0
    %620 = vmatprep.subr.mxu0 0.0
    %621 = vmatpush1.msra.mxu0 0.0
    %622 = vmatprep.subr.mxu0 0.0
    %623 = vmatpush1.msra.mxu0 0.0
    %624 = vmatprep.subr.mxu0 0.0
    %625 = vmatpush1.msra.mxu0 0.0
    %626 = vmatprep.subr.mxu0 0.0
    %627 = vmatpush1.msra.mxu0 0.0
    %628 = vmatprep.subr.mxu0 0.0
    %629 = vmatpush1.msra.mxu0 0.0
    %630 = vmatprep.subr.mxu0 0.0
    %631 = vmatpush1.msra.mxu0 0.0
    %632 = vmatprep.subr.mxu0 0.0
    %633 = vmatpush1.msra.mxu0 0.0
    %634 = vmatprep.subr.mxu0 0.0
    %635 = vmatpush1.msra.mxu0 0.0
    %636 = vmatprep.subr.mxu0 0.0
    %637 = vmatpush1.msra.mxu0 0.0
    %638 = vmatprep.subr.mxu0 0.0
    %639 = vmatpush1.msra.mxu0 0.0
    %640 = vmatprep.subr.mxu0 0.0
    %641 = vmatpush1.msra.mxu0 0.0
    %642 = vmatprep.mubr.f32.mxu0 0.0
    %643 = vmatmul.mubr.f32.gmra.mrb[0].mxu0 %v473
    %v644 = vpop.f32.mrb[0].mxu0
    %v645 = vadd.f32 %v577, %v644
    %v646 = vpop.f32.mrb[0].mxu0
    %647 = vmatprep.mubr.f32.mxu0 0.0
    %648 = vmatmul.mubr.f32.gmra.mrb[0].mxu0 %v476
    %v649 = vpop.f32.mrb[0].mxu0
    %v650 = vadd.f32 %v577, %v649
    %v651 = vpop.f32.mrb[0].mxu0
    %652 = vmatprep.mubr.f32.mxu0 0.0
    %653 = vmatmul.mubr.f32.gmra.mrb[0].mxu0 %v479
    %v654 = vpop.f32.mrb[0].mxu0
    %v655 = vadd.f32 %v577, %v654
    %v656 = vpop.f32.mrb[0].mxu0
    %657 = vmatprep.mubr.f32.mxu0 0.0
    %658 = vmatmul.mubr.f32.gmra.mrb[0].mxu0 %v482
    %v659 = vpop.f32.mrb[0].mxu0
    %v660 = vadd.f32 %v577, %v659
    %v661 = vpop.f32.mrb[0].mxu0
    %662 = vdwg.mxu0
    %v663 = vxor.u32 %v645, 2147483648
    %v664 = vxor.u32 %v650, 2147483648
    %v665 = vxor.u32 %v655, 2147483648
    %v666 = vxor.u32 %v660, 2147483648
    %v667 = vmul.f32 %v663, 1.442695
    %v668 = vpow.pop %v667
    %v669 = vmul.f32 %v664, 1.442695
    %v670 = vpow.pop %v669
    %v671 = vmul.f32 %v665, 1.442695
    %v672 = vpow.pop %v671
    %v673 = vmul.f32 %v666, 1.442695
    %v674 = vpow.pop %v673
    %v675 = vadd.f32 %v668, 1.0
    %v676 = vadd.f32 %v670, 1.0
    %v677 = vadd.f32 %v672, 1.0
    %v678 = vadd.f32 %v674, 1.0
    %v679 = vrcp.pop %v675
    %v680 = vmul.f32 1.0, %v679
    %v681 = vrcp.pop %v676
    %v682 = vmul.f32 1.0, %v681
    %v683 = vrcp.pop %v677
    %v684 = vmul.f32 1.0, %v683
    %v685 = vrcp.pop %v678
    %v686 = vmul.f32 1.0, %v685
    %v687 = vmul.f32 %v551, %v680
    %v688 = vmul.f32 %v556, %v682
    %v689 = vmul.f32 %v561, %v684
    %v690 = vmul.f32 %v566, %v686
    %v691 = vld [vmem:[%s4 + $0x100] sm:$0xff]
    %v692 = vld [vmem:[%s4 + $0x108] sm:$0xff]
    %v693 = vld [vmem:[%s4 + $0x110] sm:$0xff]
    %v694 = vld [vmem:[%s4 + $0x118] sm:$0x7f]
    %v695 = vrot.slane %v687, 1
    %v696 = vrot.slane %v689, 1
    %v697 = vlaneseq
    %v698 = vshrl.u32 %v697, 7
    %vm699 = vcmp.lt.s32.totalorder %v698, 7
    %v700 = vsel %vm699, 0.0, %v696
    %v701 = vsel %vm699, 0.0, %v695
    %v702 = vlaneseq
    %v703 = vshrl.u32 %v702, 7
    %v704 = vsub.s32 0, %v703
    %v705 = vrot.slane %v691, %v704
    %v706 = vmul.f32 0.0, %v705
    %v707 = vmul.f32 %v701, %v705
    %v708 = vmul.f32 %v700, %v705
    %v709 = vadd.f32 %v706, 0.0
    %v710 = vadd.f32 %v707, 0.0
    %v711 = vadd.f32 %v708, 0.0
    %v712 = vrot.slane %v687, 2
    %v713 = vrot.slane %v689, 2
    %vm714 = vcmp.lt.s32.totalorder %v698, 6
    %v715 = vsel %vm714, 0.0, %v713
    %v716 = vsel %vm714, 0.0, %v712
    %v717 = vlaneseq
    %v718 = vshrl.u32 %v717, 7
    %v719 = vsub.s32 1, %v718
    %v720 = vrot.slane %v691, %v719
    %v721 = vmul.f32 0.0, %v720
    %v722 = vmul.f32 %v716, %v720
    %v723 = vmul.f32 %v715, %v720
    %v724 = vadd.f32 %v709, %v721
    %v725 = vadd.f32 %v710, %v722
    %v726 = vadd.f32 %v711, %v723
    %v727 = vrot.slane %v687, 3
    %v728 = vrot.slane %v689, 3
    %vm729 = vcmp.lt.s32.totalorder %v698, 5
    %v730 = vsel %vm729, 0.0, %v728
    %v731 = vsel %vm729, 0.0, %v727
    %v732 = vlaneseq
    %v733 = vshrl.u32 %v732, 7
    %v734 = vsub.s32 2, %v733
    %v735 = vrot.slane %v691, %v734
    %v736 = vmul.f32 0.0, %v735
    %v737 = vmul.f32 %v731, %v735
    %v738 = vmul.f32 %v730, %v735
    %v739 = vadd.f32 %v724, %v736
    %v740 = vadd.f32 %v725, %v737
    %v741 = vadd.f32 %v726, %v738
    %v742 = vrot.slane %v687, 4
    %v743 = vrot.slane %v689, 4
    %vm744 = vcmp.lt.s32.totalorder %v698, 4
    %v745 = vsel %vm744, 0.0, %v743
    %v746 = vsel %vm744, 0.0, %v742
    %v747 = vlaneseq
    %v748 = vshrl.u32 %v747, 7
    %v749 = vsub.s32 3, %v748
    %v750 = vrot.slane %v691, %v749
    %v751 = vmul.f32 0.0, %v750
    %v752 = vmul.f32 %v746, %v750
    %v753 = vmul.f32 %v745, %v750
    %v754 = vadd.f32 %v739, %v751
    %v755 = vadd.f32 %v740, %v752
    %v756 = vadd.f32 %v741, %v753
    %v757 = vrot.slane %v687, 5
    %v758 = vrot.slane %v689, 5
    %vm759 = vcmp.lt.s32.totalorder %v698, 3
    %v760 = vsel %vm759, 0.0, %v758
    %v761 = vsel %vm759, 0.0, %v757
    %v762 = vlaneseq
    %v763 = vshrl.u32 %v762, 7
    %v764 = vsub.s32 4, %v763
    %v765 = vrot.slane %v691, %v764
    %v766 = vmul.f32 0.0, %v765
    %v767 = vmul.f32 %v761, %v765
    %v768 = vmul.f32 %v760, %v765
    %v769 = vadd.f32 %v754, %v766
    %v770 = vadd.f32 %v755, %v767
    %v771 = vadd.f32 %v756, %v768
    %v772 = vrot.slane %v687, 6
    %v773 = vrot.slane %v689, 6
    %vm774 = vcmp.lt.s32.totalorder %v698, 2
    %v775 = vsel %vm774, 0.0, %v773
    %v776 = vsel %vm774, 0.0, %v772
    %v777 = vlaneseq
    %v778 = vshrl.u32 %v777, 7
    %v779 = vsub.s32 5, %v778
    %v780 = vrot.slane %v691, %v779
    %v781 = vmul.f32 0.0, %v780
    %v782 = vmul.f32 %v776, %v780
    %v783 = vmul.f32 %v775, %v780
    %v784 = vadd.f32 %v769, %v781
    %v785 = vadd.f32 %v770, %v782
    %v786 = vadd.f32 %v771, %v783
    %v787 = vrot.slane %v687, 7
    %v788 = vrot.slane %v689, 7
    %vm789 = vcmp.lt.s32.totalorder %v698, 1
    %v790 = vsel %vm789, 0.0, %v788
    %v791 = vsel %vm789, 0.0, %v787
    %v792 = vlaneseq
    %v793 = vshrl.u32 %v792, 7
    %v794 = vsub.s32 6, %v793
    %v795 = vrot.slane %v691, %v794
    %v796 = vmul.f32 0.0, %v795
    %v797 = vmul.f32 %v791, %v795
    %v798 = vmul.f32 %v790, %v795
    %v799 = vadd.f32 %v784, %v796
    %v800 = vadd.f32 %v785, %v797
    %v801 = vadd.f32 %v786, %v798
    %v802 = vlaneseq
    %v803 = vshrl.u32 %v802, 7
    %v804 = vsub.s32 7, %v803
    %v805 = vrot.slane %v691, %v804
    %v806 = vmul.f32 %v805, 0.0
    %v807 = vmul.f32 %v687, %v805
    %v808 = vmul.f32 %v689, %v805
    %v809 = vadd.f32 %v799, %v806
    %v810 = vadd.f32 %v800, %v807
    %v811 = vadd.f32 %v801, %v808
    %v812 = vrot.slane %v688, 1
    %v813 = vrot.slane %v690, 1
    %v814 = vsel %vm699, %v696, %v813
    %v815 = vsel %vm699, %v695, %v812
    %v816 = vlaneseq
    %v817 = vshrl.u32 %v816, 7
    %v818 = vsub.s32 0, %v817
    %v819 = vrot.slane %v692, %v818
    %v820 = vmul.f32 %v701, %v819
    %v821 = vmul.f32 %v815, %v819
    %v822 = vmul.f32 %v700, %v819
    %v823 = vmul.f32 %v814, %v819
    %v824 = vadd.f32 %v809, %v820
    %v825 = vadd.f32 %v810, %v821
    %v826 = vadd.f32 %v809, %v822
    %v827 = vadd.f32 %v811, %v823
    %v828 = vrot.slane %v688, 2
    %v829 = vrot.slane %v690, 2
    %v830 = vsel %vm714, %v713, %v829
    %v831 = vsel %vm714, %v712, %v828
    %v832 = vlaneseq
    %v833 = vshrl.u32 %v832, 7
    %v834 = vsub.s32 1, %v833
    %v835 = vrot.slane %v692, %v834
    %v836 = vmul.f32 %v716, %v835
    %v837 = vmul.f32 %v831, %v835
    %v838 = vmul.f32 %v715, %v835
    %v839 = vmul.f32 %v830, %v835
    %v840 = vadd.f32 %v824, %v836
    %v841 = vadd.f32 %v825, %v837
    %v842 = vadd.f32 %v826, %v838
    %v843 = vadd.f32 %v827, %v839
    %v844 = vrot.slane %v688, 3
    %v845 = vrot.slane %v690, 3
    %v846 = vsel %vm729, %v728, %v845
    %v847 = vsel %vm729, %v727, %v844
    %v848 = vlaneseq
    %v849 = vshrl.u32 %v848, 7
    %v850 = vsub.s32 2, %v849
    %v851 = vrot.slane %v692, %v850
    %v852 = vmul.f32 %v731, %v851
    %v853 = vmul.f32 %v847, %v851
    %v854 = vmul.f32 %v730, %v851
    %v855 = vmul.f32 %v846, %v851
    %v856 = vadd.f32 %v840, %v852
    %v857 = vadd.f32 %v841, %v853
    %v858 = vadd.f32 %v842, %v854
    %v859 = vadd.f32 %v843, %v855
    %v860 = vrot.slane %v688, 4
    %v861 = vrot.slane %v690, 4
    %v862 = vsel %vm744, %v743, %v861
    %v863 = vsel %vm744, %v742, %v860
    %v864 = vlaneseq
    %v865 = vshrl.u32 %v864, 7
    %v866 = vsub.s32 3, %v865
    %v867 = vrot.slane %v692, %v866
    %v868 = vmul.f32 %v746, %v867
    %v869 = vmul.f32 %v863, %v867
    %v870 = vmul.f32 %v745, %v867
    %v871 = vmul.f32 %v862, %v867
    %v872 = vadd.f32 %v856, %v868
    %v873 = vadd.f32 %v857, %v869
    %v874 = vadd.f32 %v858, %v870
    %v875 = vadd.f32 %v859, %v871
    %v876 = vrot.slane %v688, 5
    %v877 = vrot.slane %v690, 5
    %v878 = vsel %vm759, %v758, %v877
    %v879 = vsel %vm759, %v757, %v876
    %v880 = vlaneseq
    %v881 = vshrl.u32 %v880, 7
    %v882 = vsub.s32 4, %v881
    %v883 = vrot.slane %v692, %v882
    %v884 = vmul.f32 %v761, %v883
    %v885 = vmul.f32 %v879, %v883
    %v886 = vmul.f32 %v760, %v883
    %v887 = vmul.f32 %v878, %v883
    %v888 = vadd.f32 %v872, %v884
    %v889 = vadd.f32 %v873, %v885
    %v890 = vadd.f32 %v874, %v886
    %v891 = vadd.f32 %v875, %v887
    %v892 = vrot.slane %v688, 6
    %v893 = vrot.slane %v690, 6
    %v894 = vsel %vm774, %v773, %v893
    %v895 = vsel %vm774, %v772, %v892
    %v896 = vlaneseq
    %v897 = vshrl.u32 %v896, 7
    %v898 = vsub.s32 5, %v897
    %v899 = vrot.slane %v692, %v898
    %v900 = vmul.f32 %v776, %v899
    %v901 = vmul.f32 %v895, %v899
    %v902 = vmul.f32 %v775, %v899
    %v903 = vmul.f32 %v894, %v899
    %v904 = vadd.f32 %v888, %v900
    %v905 = vadd.f32 %v889, %v901
    %v906 = vadd.f32 %v890, %v902
    %v907 = vadd.f32 %v891, %v903
    %v908 = vrot.slane %v688, 7
    %v909 = vrot.slane %v690, 7
    %v910 = vsel %vm789, %v788, %v909
    %v911 = vsel %vm789, %v787, %v908
    %v912 = vlaneseq
    %v913 = vshrl.u32 %v912, 7
    %v914 = vsub.s32 6, %v913
    %v915 = vrot.slane %v692, %v914
    %v916 = vmul.f32 %v791, %v915
    %v917 = vmul.f32 %v911, %v915
    %v918 = vmul.f32 %v790, %v915
    %v919 = vmul.f32 %v910, %v915
    %v920 = vadd.f32 %v904, %v916
    %v921 = vadd.f32 %v905, %v917
    %v922 = vadd.f32 %v906, %v918
    %v923 = vadd.f32 %v907, %v919
    %v924 = vlaneseq
    %v925 = vshrl.u32 %v924, 7
    %v926 = vsub.s32 7, %v925
    %v927 = vrot.slane %v692, %v926
    %v928 = vmul.f32 %v687, %v927
    %v929 = vmul.f32 %v688, %v927
    %v930 = vmul.f32 %v689, %v927
    %v931 = vmul.f32 %v690, %v927
    %v932 = vadd.f32 %v920, %v928
    %v933 = vadd.f32 %v921, %v929
    %v934 = vadd.f32 %v922, %v930
    %v935 = vadd.f32 %v923, %v931
    %v936 = vsel %vm699, %v813, 0.0
    %v937 = vsel %vm699, %v812, 0.0
    %v938 = vlaneseq
    %v939 = vshrl.u32 %v938, 7
    %v940 = vsub.s32 0, %v939
    %v941 = vrot.slane %v693, %v940
    %v942 = vmul.f32 %v815, %v941
    %v943 = vmul.f32 %v937, %v941
    %v944 = vmul.f32 %v814, %v941
    %v945 = vmul.f32 %v936, %v941
    %v946 = vadd.f32 %v932, %v942
    %v947 = vadd.f32 %v933, %v943
    %v948 = vadd.f32 %v934, %v944
    %v949 = vadd.f32 %v935, %v945
    %v950 = vsel %vm714, %v829, 0.0
    %v951 = vsel %vm714, %v828, 0.0
    %v952 = vlaneseq
    %v953 = vshrl.u32 %v952, 7
    %v954 = vsub.s32 1, %v953
    %v955 = vrot.slane %v693, %v954
    %v956 = vmul.f32 %v831, %v955
    %v957 = vmul.f32 %v951, %v955
    %v958 = vmul.f32 %v830, %v955
    %v959 = vmul.f32 %v950, %v955
    %v960 = vadd.f32 %v946, %v956
    %v961 = vadd.f32 %v947, %v957
    %v962 = vadd.f32 %v948, %v958
    %v963 = vadd.f32 %v949, %v959
    %v964 = vsel %vm729, %v845, 0.0
    %v965 = vsel %vm729, %v844, 0.0
    %v966 = vlaneseq
    %v967 = vshrl.u32 %v966, 7
    %v968 = vsub.s32 2, %v967
    %v969 = vrot.slane %v693, %v968
    %v970 = vmul.f32 %v847, %v969
    %v971 = vmul.f32 %v965, %v969
    %v972 = vmul.f32 %v846, %v969
    %v973 = vmul.f32 %v964, %v969
    %v974 = vadd.f32 %v960, %v970
    %v975 = vadd.f32 %v961, %v971
    %v976 = vadd.f32 %v962, %v972
    %v977 = vadd.f32 %v963, %v973
    %v978 = vsel %vm744, %v861, 0.0
    %v979 = vsel %vm744, %v860, 0.0
    %v980 = vlaneseq
    %v981 = vshrl.u32 %v980, 7
    %v982 = vsub.s32 3, %v981
    %v983 = vrot.slane %v693, %v982
    %v984 = vmul.f32 %v863, %v983
    %v985 = vmul.f32 %v979, %v983
    %v986 = vmul.f32 %v862, %v983
    %v987 = vmul.f32 %v978, %v983
    %v988 = vadd.f32 %v974, %v984
    %v989 = vadd.f32 %v975, %v985
    %v990 = vadd.f32 %v976, %v986
    %v991 = vadd.f32 %v977, %v987
    %v992 = vsel %vm759, %v877, 0.0
    %v993 = vsel %vm759, %v876, 0.0
    %v994 = vlaneseq
    %v995 = vshrl.u32 %v994, 7
    %v996 = vsub.s32 4, %v995
    %v997 = vrot.slane %v693, %v996
    %v998 = vmul.f32 %v879, %v997
    %v999 = vmul.f32 %v993, %v997
    %v1000 = vmul.f32 %v878, %v997
    %v1001 = vmul.f32 %v992, %v997
    %v1002 = vadd.f32 %v988, %v998
    %v1003 = vadd.f32 %v989, %v999
    %v1004 = vadd.f32 %v990, %v1000
    %v1005 = vadd.f32 %v991, %v1001
    %v1006 = vsel %vm774, %v893, 0.0
    %v1007 = vsel %vm774, %v892, 0.0
    %v1008 = vlaneseq
    %v1009 = vshrl.u32 %v1008, 7
    %v1010 = vsub.s32 5, %v1009
    %v1011 = vrot.slane %v693, %v1010
    %v1012 = vmul.f32 %v895, %v1011
    %v1013 = vmul.f32 %v1007, %v1011
    %v1014 = vmul.f32 %v894, %v1011
    %v1015 = vmul.f32 %v1006, %v1011
    %v1016 = vadd.f32 %v1002, %v1012
    %v1017 = vadd.f32 %v1003, %v1013
    %v1018 = vadd.f32 %v1004, %v1014
    %v1019 = vadd.f32 %v1005, %v1015
    %v1020 = vsel %vm789, %v909, 0.0
    %v1021 = vsel %vm789, %v908, 0.0
    %v1022 = vlaneseq
    %v1023 = vshrl.u32 %v1022, 7
    %v1024 = vsub.s32 6, %v1023
    %v1025 = vrot.slane %v693, %v1024
    %v1026 = vmul.f32 %v911, %v1025
    %v1027 = vmul.f32 %v1021, %v1025
    %v1028 = vmul.f32 %v910, %v1025
    %v1029 = vmul.f32 %v1020, %v1025
    %v1030 = vadd.f32 %v1016, %v1026
    %v1031 = vadd.f32 %v1017, %v1027
    %v1032 = vadd.f32 %v1018, %v1028
    %v1033 = vadd.f32 %v1019, %v1029
    %v1034 = vlaneseq
    %v1035 = vshrl.u32 %v1034, 7
    %v1036 = vsub.s32 7, %v1035
    %v1037 = vrot.slane %v693, %v1036
    %v1038 = vmul.f32 %v688, %v1037
    %v1039 = vmul.f32 %v1037, 0.0
    %v1040 = vmul.f32 %v690, %v1037
    %v1041 = vadd.f32 %v1030, %v1038
    %v1042 = vadd.f32 %v1031, %v1039
    %v1043 = vadd.f32 %v1032, %v1040
    %v1044 = vadd.f32 %v1033, %v1039
    %v1045 = vlaneseq
    %v1046 = vshrl.u32 %v1045, 7
    %v1047 = vsub.s32 0, %v1046
    %v1048 = vrot.slane %v694, %v1047
    %v1049 = vmul.f32 %v937, %v1048
    %v1050 = vmul.f32 0.0, %v1048
    %v1051 = vmul.f32 %v936, %v1048
    %v1052 = vadd.f32 %v1041, %v1049
    %v1053 = vadd.f32 %v1042, %v1050
    %v1054 = vadd.f32 %v1043, %v1051
    %v1055 = vadd.f32 %v1044, %v1050
    %v1056 = vlaneseq
    %v1057 = vshrl.u32 %v1056, 7
    %v1058 = vsub.s32 1, %v1057
    %v1059 = vrot.slane %v694, %v1058
    %v1060 = vmul.f32 %v951, %v1059
    %v1061 = vmul.f32 0.0, %v1059
    %v1062 = vmul.f32 %v950, %v1059
    %v1063 = vadd.f32 %v1052, %v1060
    %v1064 = vadd.f32 %v1053, %v1061
    %v1065 = vadd.f32 %v1054, %v1062
    %v1066 = vadd.f32 %v1055, %v1061
    %v1067 = vlaneseq
    %v1068 = vshrl.u32 %v1067, 7
    %v1069 = vsub.s32 2, %v1068
    %v1070 = vrot.slane %v694, %v1069
    %v1071 = vmul.f32 %v965, %v1070
    %v1072 = vmul.f32 0.0, %v1070
    %v1073 = vmul.f32 %v964, %v1070
    %v1074 = vadd.f32 %v1063, %v1071
    %v1075 = vadd.f32 %v1064, %v1072
    %v1076 = vadd.f32 %v1065, %v1073
    %v1077 = vadd.f32 %v1066, %v1072
    %v1078 = vlaneseq
    %v1079 = vshrl.u32 %v1078, 7
    %v1080 = vsub.s32 3, %v1079
    %v1081 = vrot.slane %v694, %v1080
    %v1082 = vmul.f32 %v979, %v1081
    %v1083 = vmul.f32 0.0, %v1081
    %v1084 = vmul.f32 %v978, %v1081
    %v1085 = vadd.f32 %v1074, %v1082
    %v1086 = vadd.f32 %v1075, %v1083
    %v1087 = vadd.f32 %v1076, %v1084
    %v1088 = vadd.f32 %v1077, %v1083
    %v1089 = vlaneseq
    %v1090 = vshrl.u32 %v1089, 7
    %v1091 = vsub.s32 4, %v1090
    %v1092 = vrot.slane %v694, %v1091
    %v1093 = vmul.f32 %v993, %v1092
    %v1094 = vmul.f32 0.0, %v1092
    %v1095 = vmul.f32 %v992, %v1092
    %v1096 = vadd.f32 %v1085, %v1093
    %v1097 = vadd.f32 %v1086, %v1094
    %v1098 = vadd.f32 %v1087, %v1095
    %v1099 = vadd.f32 %v1088, %v1094
    %v1100 = vlaneseq
    %v1101 = vshrl.u32 %v1100, 7
    %v1102 = vsub.s32 5, %v1101
    %v1103 = vrot.slane %v694, %v1102
    %v1104 = vmul.f32 %v1007, %v1103
    %v1105 = vmul.f32 0.0, %v1103
    %v1106 = vmul.f32 %v1006, %v1103
    %v1107 = vadd.f32 %v1096, %v1104
    %v1108 = vadd.f32 %v1097, %v1105
    %v1109 = vadd.f32 %v1098, %v1106
    %v1110 = vadd.f32 %v1099, %v1105
    %v1111 = vlaneseq
    %v1112 = vshrl.u32 %v1111, 7
    %v1113 = vsub.s32 6, %v1112
    %v1114 = vrot.slane %v694, %v1113
    %v1115 = vmul.f32 %v1021, %v1114
    %v1116 = vmul.f32 0.0, %v1114
    %v1117 = vmul.f32 %v1020, %v1114
    %v1118 = vadd.f32 %v1107, %v1115
    %v1119 = vadd.f32 %v1108, %v1116
    %v1120 = vadd.f32 %v1109, %v1117
    %v1121 = vadd.f32 %v1110, %v1116
    %v1122 = vld [vmem:[%s1 + $0x14] ss:$0 sm:$0xff]
    %v1123 = vld [vmem:[%s1 + $0x15] ss:$0 sm:$0xff]
    %v1124 = vld [vmem:[%s1 + $0x16] ss:$0 sm:$0xff]
    %v1125 = vadd.f32 %v1118, %v1122
    %v1126 = vadd.f32 %v1119, %v1122
    %v1127 = vsel %vm25, %v1125, 0.0
    %v1128 = vsel %vm25, %v1126, 0.0
    %v1129 = vadd.f32 %v1127, %v1128
    %1130 = vadd.xlane.f32.xlu0 %v1129
    %v1131 = vpop.xlane.xlu0 %1130
    %v1132 = vrot.slane %v1131, 4
    %v1133 = vadd.f32 %v1131, %v1132
    %v1134 = vrot.slane %v1133, 2
    %v1135 = vadd.f32 %v1133, %v1134
    %v1136 = vrot.slane %v1135, 1
    %v1137 = vadd.f32 %v1135, %v1136
    %s1138 = vtos %v1137
    %v1139 = vrcp.pop 1024.0
    %s1140 = vtos %v1139
    %s1141 = smul.f32 %s1138, %s1140
    %v1142 = vstv %s1141
    %v1143 = vsub.f32 %v1125, %v1142
    %v1144 = vsub.f32 %v1126, %v1142
    %v1145 = vmul.f32 %v1143, %v1143
    %v1146 = vmul.f32 %v1144, %v1144
    %v1147 = vsel %vm25, %v1145, 0.0
    %v1148 = vsel %vm25, %v1146, 0.0
    %v1149 = vadd.f32 %v1147, %v1148
    %1150 = vadd.xlane.f32.xlu0 %v1149
    %v1151 = vpop.xlane.xlu0 %1150
    %v1152 = vrot.slane %v1151, 4
    %v1153 = vadd.f32 %v1151, %v1152
    %v1154 = vrot.slane %v1153, 2
    %v1155 = vadd.f32 %v1153, %v1154
    %v1156 = vrot.slane %v1155, 1
    %v1157 = vadd.f32 %v1155, %v1156
    %s1158 = vtos %v1157
    %v1159 = vrcp.pop 1024.0
    %s1160 = vtos %v1159
    %s1161 = smul.f32 %s1158, %s1160
    %s1162 = sadd.f32 %s1161, 1e-05
    %v1163 = vstv %s1162
    %v1164 = vrsqrt.pop %v1163
    %s1165 = vtos %v1164
    %v1166 = vstv %s1165
    %v1167 = vmul.f32 %v1143, %v1166
    %v1168 = vmul.f32 %v1144, %v1166
    %v1169 = vmul.f32 %v1167, %v1123
    %v1170 = vmul.f32 %v1168, %v1123
    %v1171 = vadd.f32 %v1169, %v1124
    %v1172 = vadd.f32 %v1170, %v1124
    %v1173 = vadd.f32 %v1120, %v1122
    %v1174 = vadd.f32 %v1121, %v1122
    %v1175 = vsel %vm25, %v1173, 0.0
    %v1176 = vsel %vm25, %v1174, 0.0
    %v1177 = vadd.f32 %v1175, %v1176
    %1178 = vadd.xlane.f32.xlu0 %v1177
    %v1179 = vpop.xlane.xlu0 %1178
    %v1180 = vrot.slane %v1179, 4
    %v1181 = vadd.f32 %v1179, %v1180
    %v1182 = vrot.slane %v1181, 2
    %v1183 = vadd.f32 %v1181, %v1182
    %v1184 = vrot.slane %v1183, 1
    %v1185 = vadd.f32 %v1183, %v1184
    %s1186 = vtos %v1185
    %v1187 = vrcp.pop 1024.0
    %s1188 = vtos %v1187
    %s1189 = smul.f32 %s1186, %s1188
    %v1190 = vstv %s1189
    %v1191 = vsub.f32 %v1173, %v1190
    %v1192 = vsub.f32 %v1174, %v1190
    %v1193 = vmul.f32 %v1191, %v1191
    %v1194 = vmul.f32 %v1192, %v1192
    %v1195 = vsel %vm25, %v1193, 0.0
    %v1196 = vsel %vm25, %v1194, 0.0
    %v1197 = vadd.f32 %v1195, %v1196
    %1198 = vadd.xlane.f32.xlu0 %v1197
    %v1199 = vpop.xlane.xlu0 %1198
    %v1200 = vrot.slane %v1199, 4
    %v1201 = vadd.f32 %v1199, %v1200
    %v1202 = vrot.slane %v1201, 2
    %v1203 = vadd.f32 %v1201, %v1202
    %v1204 = vrot.slane %v1203, 1
    %v1205 = vadd.f32 %v1203, %v1204
    %s1206 = vtos %v1205
    %v1207 = vrcp.pop 1024.0
    %s1208 = vtos %v1207
    %s1209 = smul.f32 %s1206, %s1208
    %s1210 = sadd.f32 %s1209, 1e-05
    %v1211 = vstv %s1210
    %v1212 = vrsqrt.pop %v1211
    %s1213 = vtos %v1212
    %v1214 = vstv %s1213
    %v1215 = vmul.f32 %v1191, %v1214
    %v1216 = vmul.f32 %v1192, %v1214
    %v1217 = vmul.f32 %v1215, %v1123
    %v1218 = vmul.f32 %v1216, %v1123
    %v1219 = vadd.f32 %v1217, %v1124
    %v1220 = vadd.f32 %v1218, %v1124
    %v1221 = vxor.u32 %v1171, 2147483648
    %v1222 = vxor.u32 %v1172, 2147483648
    %v1223 = vxor.u32 %v1219, 2147483648
    %v1224 = vxor.u32 %v1220, 2147483648
    %v1225 = vmul.f32 %v1221, 1.442695
    %v1226 = vpow.pop %v1225
    %v1227 = vmul.f32 %v1222, 1.442695
    %v1228 = vpow.pop %v1227
    %v1229 = vmul.f32 %v1223, 1.442695
    %v1230 = vpow.pop %v1229
    %v1231 = vmul.f32 %v1224, 1.442695
    %v1232 = vpow.pop %v1231
    %v1233 = vadd.f32 %v1226, 1.0
    %v1234 = vadd.f32 %v1228, 1.0
    %v1235 = vadd.f32 %v1230, 1.0
    %v1236 = vadd.f32 %v1232, 1.0
    %v1237 = vrcp.pop %v1233
    %v1238 = vmul.f32 1.0, %v1237
    %v1239 = vrcp.pop %v1234
    %v1240 = vmul.f32 1.0, %v1239
    %v1241 = vrcp.pop %v1235
    %v1242 = vmul.f32 1.0, %v1241
    %v1243 = vrcp.pop %v1236
    %v1244 = vmul.f32 1.0, %v1243
    %v1245 = vmul.f32 %v1171, %v1238
    %v1246 = vmul.f32 %v1172, %v1240
    %v1247 = vmul.f32 %v1219, %v1242
    %v1248 = vmul.f32 %v1220, %v1244
    %v1249 = vld [vmem:[%s4 + $0x80] sm:$0xff]
    %v1250 = vld [vmem:[%s4 + $0x88] sm:$0xff]
    %v1251 = vld [vmem:[%s4 + $0x90] sm:$0xff]
    %v1252 = vld [vmem:[%s4 + $0x98] sm:$0xff]
    %v1253 = vld [vmem:[%s4 + $0xa0] sm:$0xff]
    %v1254 = vld [vmem:[%s4 + $0xa8] sm:$0xff]
    %v1255 = vld [vmem:[%s4 + $0xb0] sm:$0xff]
    %v1256 = vld [vmem:[%s4 + $0xb8] sm:$0xff]
    %v1257 = vld [vmem:[%s1 + $0x17] ss:$0 sm:$0xff]
    %v1259 = vsel %vm25, %v1245, 0
    %v1262 = vsel %vm25, %v1246, 0
    %v1265 = vsel %vm25, %v1247, 0
    %v1268 = vsel %vm25, %v1248, 0
    %1270 = vmatprep.subr.mxu0 0.0
    %1271 = vmatpush1.msra.mxu0 %v1249
    %1272 = vmatprep.subr.mxu0 0.0
    %1273 = vmatpush1.msra.mxu0 %v1250
    %1274 = vmatprep.subr.mxu0 0.0
    %1275 = vmatpush1.msra.mxu0 %v1251
    %1276 = vmatprep.subr.mxu0 0.0
    %1277 = vmatpush1.msra.mxu0 %v1252
    %1278 = vmatprep.subr.mxu0 0.0
    %1279 = vmatpush1.msra.mxu0 %v1253
    %1280 = vmatprep.subr.mxu0 0.0
    %1281 = vmatpush1.msra.mxu0 %v1254
    %1282 = vmatprep.subr.mxu0 0.0
    %1283 = vmatpush1.msra.mxu0 %v1255
    %1284 = vmatprep.subr.mxu0 0.0
    %1285 = vmatpush1.msra.mxu0 %v1256
    %1286 = vmatprep.subr.mxu0 0.0
    %1287 = vmatpush1.msra.mxu0 0.0
    %1288 = vmatprep.subr.mxu0 0.0
    %1289 = vmatpush1.msra.mxu0 0.0
    %1290 = vmatprep.subr.mxu0 0.0
    %1291 = vmatpush1.msra.mxu0 0.0
    %1292 = vmatprep.subr.mxu0 0.0
    %1293 = vmatpush1.msra.mxu0 0.0
    %1294 = vmatprep.subr.mxu0 0.0
    %1295 = vmatpush1.msra.mxu0 0.0
    %1296 = vmatprep.subr.mxu0 0.0
    %1297 = vmatpush1.msra.mxu0 0.0
    %1298 = vmatprep.subr.mxu0 0.0
    %1299 = vmatpush1.msra.mxu0 0.0
    %1300 = vmatprep.subr.mxu0 0.0
    %1301 = vmatpush1.msra.mxu0 0.0
    %1302 = vmatprep.subr.mxu0 0.0
    %1303 = vmatpush1.msra.mxu0 0.0
    %1304 = vmatprep.subr.mxu0 0.0
    %1305 = vmatpush1.msra.mxu0 0.0
    %1306 = vmatprep.subr.mxu0 0.0
    %1307 = vmatpush1.msra.mxu0 0.0
    %1308 = vmatprep.subr.mxu0 0.0
    %1309 = vmatpush1.msra.mxu0 0.0
    %1310 = vmatprep.subr.mxu0 0.0
    %1311 = vmatpush1.msra.mxu0 0.0
    %1312 = vmatprep.subr.mxu0 0.0
    %1313 = vmatpush1.msra.mxu0 0.0
    %1314 = vmatprep.subr.mxu0 0.0
    %1315 = vmatpush1.msra.mxu0 0.0
    %1316 = vmatprep.subr.mxu0 0.0
    %1317 = vmatpush1.msra.mxu0 0.0
    %1318 = vmatprep.subr.mxu0 0.0
    %1319 = vmatpush1.msra.mxu0 0.0
    %1320 = vmatprep.subr.mxu0 0.0
    %1321 = vmatpush1.msra.mxu0 0.0
    %1322 = vmatprep.subr.mxu0 0.0
    %1323 = vmatpush1.msra.mxu0 0.0
    %1324 = vmatprep.subr.mxu0 0.0
    %1325 = vmatpush1.msra.mxu0 0.0
    %1326 = vmatprep.subr.mxu0 0.0
    %1327 = vmatpush1.msra.mxu0 0.0
    %1328 = vmatprep.subr.mxu0 0.0
    %1329 = vmatpush1.msra.mxu0 0.0
    %1330 = vmatprep.subr.mxu0 0.0
    %1331 = vmatpush1.msra.mxu0 0.0
    %1332 = vmatprep.subr.mxu0 0.0
    %1333 = vmatpush1.msra.mxu0 0.0
    %1334 = vmatprep.mubr.f32.mxu0 0.0
    %1335 = vmatmul.mubr.f32.gmra.mrb[0].mxu0 %v1259
    %v1336 = vpop.f32.mrb[0].mxu0
    %v1337 = vadd.f32 %v1257, %v1336
    %v1338 = vpop.f32.mrb[0].mxu0
    %1339 = vmatprep.mubr.f32.mxu0 0.0
    %1340 = vmatmul.mubr.f32.gmra.mrb[0].mxu0 %v1262
    %v1341 = vpop.f32.mrb[0].mxu0
    %v1342 = vadd.f32 %v1257, %v1341
    %v1343 = vpop.f32.mrb[0].mxu0
    %1344 = vmatprep.mubr.f32.mxu0 0.0
    %1345 = vmatmul.mubr.f32.gmra.mrb[0].mxu0 %v1265
    %v1346 = vpop.f32.mrb[0].mxu0
    %v1347 = vadd.f32 %v1257, %v1346
    %v1348 = vpop.f32.mrb[0].mxu0
    %1349 = vmatprep.mubr.f32.mxu0 0.0
    %1350 = vmatmul.mubr.f32.gmra.mrb[0].mxu0 %v1268
    %v1351 = vpop.f32.mrb[0].mxu0
    %v1352 = vadd.f32 %v1257, %v1351
    %v1353 = vpop.f32.mrb[0].mxu0
    %1354 = vdwg.mxu0
    %v1355 = vadd.f32 %v397, %v1337
    %v1356 = vadd.f32 %v398, %v1342
    %v1357 = vadd.f32 %v399, %v1347
    %v1358 = vadd.f32 %v400, %v1352
    %v1359 = vsel %vm25, %v1355, 0.0
    %1360 = vadd.xlane.f32.xlu0 %v1359
    %v1361 = vpop.xlane.xlu0 %1360
    %v1362 = vsel %vm25, %v1356, 0.0
    %1363 = vadd.xlane.f32.xlu0 %v1362
    %v1364 = vpop.xlane.xlu0 %1363
    %v1365 = vsel %vm25, %v1357, 0.0
    %1366 = vadd.xlane.f32.xlu0 %v1365
    %v1367 = vpop.xlane.xlu0 %1366
    %v1368 = vsel %vm25, %v1358, 0.0
    %1369 = vadd.xlane.f32.xlu0 %v1368
    %v1370 = vpop.xlane.xlu0 %1369
    %v1371 = vmul.f32 %v1361, %v38
    %v1372 = vmul.f32 %v1364, %v38
    %v1373 = vmul.f32 %v1367, %v38
    %v1374 = vmul.f32 %v1370, %v38
    %v1375 = vsub.f32 %v1355, %v1371
    %v1376 = vsub.f32 %v1356, %v1372
    %v1377 = vsub.f32 %v1357, %v1373
    %v1378 = vsub.f32 %v1358, %v1374
    %v1379 = vmul.f32 %v1375, %v1375
    %v1380 = vmul.f32 %v1376, %v1376
    %v1381 = vmul.f32 %v1377, %v1377
    %v1382 = vmul.f32 %v1378, %v1378
    %v1383 = vsel %vm25, %v1379, 0.0
    %1384 = vadd.xlane.f32.xlu0 %v1383
    %v1385 = vpop.xlane.xlu0 %1384
    %v1386 = vsel %vm25, %v1380, 0.0
    %1387 = vadd.xlane.f32.xlu0 %v1386
    %v1388 = vpop.xlane.xlu0 %1387
    %v1389 = vsel %vm25, %v1381, 0.0
    %1390 = vadd.xlane.f32.xlu0 %v1389
    %v1391 = vpop.xlane.xlu0 %1390
    %v1392 = vsel %vm25, %v1382, 0.0
    %1393 = vadd.xlane.f32.xlu0 %v1392
    %v1394 = vpop.xlane.xlu0 %1393
    %v1395 = vmul.f32 %v1385, %v38
    %v1396 = vmul.f32 %v1388, %v38
    %v1397 = vmul.f32 %v1391, %v38
    %v1398 = vmul.f32 %v1394, %v38
    %v1399 = vadd.f32 %v1395, 1e-05
    %v1400 = vadd.f32 %v1396, 1e-05
    %v1401 = vadd.f32 %v1397, 1e-05
    %v1402 = vadd.f32 %v1398, 1e-05
    %v1403 = vrsqrt.pop %v1399
    %v1404 = vrsqrt.pop %v1400
    %v1405 = vrsqrt.pop %v1401
    %v1406 = vrsqrt.pop %v1402
    %v1407 = vmul.f32 %v1375, %v1403
    %v1408 = vmul.f32 %v1376, %v1404
    %v1409 = vmul.f32 %v1377, %v1405
    %v1410 = vmul.f32 %v1378, %v1406
    %v1411 = vld [vmem:[%s1 + $0x20] ss:$0 sm:$0xff]
    %v1412 = vmul.f32 %v1407, %v1411
    %v1413 = vmul.f32 %v1408, %v1411
    %v1414 = vmul.f32 %v1409, %v1411
    %v1415 = vmul.f32 %v1410, %v1411
    %v1416 = vld [vmem:[%s1 + $0x21] ss:$0 sm:$0xff]
    %v1417 = vadd.f32 %v1412, %v1416
    %v1418 = vadd.f32 %v1413, %v1416
    %v1419 = vadd.f32 %v1414, %v1416
    %v1420 = vadd.f32 %v1415, %v1416
    %v1421 = vld [vmem:[%s2 + $0x20] sm:$0xff]
    %v1422 = vld [vmem:[%s2 + $0x28] sm:$0xff]
    %v1423 = vld [vmem:[%s2 + $0x50] sm:$0xff]
    %v1424 = vld [vmem:[%s2 + $0x58] sm:$0xff]
    %v1425 = vld [vmem:[%s2 + $0x80] sm:$0xff]
    %v1426 = vld [vmem:[%s2 + $0x88] sm:$0xff]
    %v1427 = vld [vmem:[%s2 + $0xb0] sm:$0xff]
    %v1428 = vld [vmem:[%s2 + $0xb8] sm:$0xff]
    %v1429 = vld [vmem:[%s2 + $0xe0] sm:$0xff]
    %v1430 = vld [vmem:[%s2 + $0xe8] sm:$0xff]
    %v1431 = vld [vmem:[%s2 + $0x110] sm:$0xff]
    %v1432 = vld [vmem:[%s2 + $0x118] sm:$0xff]
    %v1433 = vld [vmem:[%s2 + $0x140] sm:$0xff]
    %v1434 = vld [vmem:[%s2 + $0x148] sm:$0xff]
    %v1435 = vld [vmem:[%s2 + $0x170] sm:$0xff]
    %v1436 = vld [vmem:[%s2 + $0x178] sm:$0xff]
    %s1437 = scalar_lea.vmem %s1, 34
    %v1438 = vld [vmem:[%s1437] ss:$8 sm:$0x3]
    %v1440 = vlaneseq
    %v1441 = vshrl.u32 %v1440, 7
    %v1442 = vsub.s32 0, %v1441
    %v1443 = vrot.slane %v1438, %v1442
    %v1444 = vlaneseq
    %v1445 = vshrl.u32 %v1444, 7
    %v1446 = vsub.s32 1, %v1445
    %v1447 = vrot.slane %v1438, %v1446
    %v1451 = vsel %vm25, %v1417, 0
    %v1454 = vsel %vm25, %v1418, 0
    %v1457 = vsel %vm25, %v1419, 0
    %v1460 = vsel %vm25, %v1420, 0
    %1462 = vmatprep.subr.mxu0 %v1422
    %1463 = vmatpush1.msra.mxu0 %v1421
    %1464 = vmatprep.subr.mxu0 %v1424
    %1465 = vmatpush1.msra.mxu0 %v1423
    %1466 = vmatprep.subr.mxu0 %v1426
    %1467 = vmatpush1.msra.mxu0 %v1425
    %1468 = vmatprep.subr.mxu0 %v1428
    %1469 = vmatpush1.msra.mxu0 %v1427
    %1470 = vmatprep.subr.mxu0 %v1430
    %1471 = vmatpush1.msra.mxu0 %v1429
    %1472 = vmatprep.subr.mxu0 %v1432
    %1473 = vmatpush1.msra.mxu0 %v1431
    %1474 = vmatprep.subr.mxu0 %v1434
    %1475 = vmatpush1.msra.mxu0 %v1433
    %1476 = vmatprep.subr.mxu0 %v1436
    %1477 = vmatpush1.msra.mxu0 %v1435
    %1478 = vmatprep.subr.mxu0 0.0
    %1479 = vmatpush1.msra.mxu0 0.0
    %1480 = vmatprep.subr.mxu0 0.0
    %1481 = vmatpush1.msra.mxu0 0.0
    %1482 = vmatprep.subr.mxu0 0.0
    %1483 = vmatpush1.msra.mxu0 0.0
    %1484 = vmatprep.subr.mxu0 0.0
    %1485 = vmatpush1.msra.mxu0 0.0
    %1486 = vmatprep.subr.mxu0 0.0
    %1487 = vmatpush1.msra.mxu0 0.0
    %1488 = vmatprep.subr.mxu0 0.0
    %1489 = vmatpush1.msra.mxu0 0.0
    %1490 = vmatprep.subr.mxu0 0.0
    %1491 = vmatpush1.msra.mxu0 0.0
    %1492 = vmatprep.subr.mxu0 0.0
    %1493 = vmatpush1.msra.mxu0 0.0
    %1494 = vmatprep.subr.mxu0 0.0
    %1495 = vmatpush1.msra.mxu0 0.0
    %1496 = vmatprep.subr.mxu0 0.0
    %1497 = vmatpush1.msra.mxu0 0.0
    %1498 = vmatprep.subr.mxu0 0.0
    %1499 = vmatpush1.msra.mxu0 0.0
    %1500 = vmatprep.subr.mxu0 0.0
    %1501 = vmatpush1.msra.mxu0 0.0
    %1502 = vmatprep.subr.mxu0 0.0
    %1503 = vmatpush1.msra.mxu0 0.0
    %1504 = vmatprep.subr.mxu0 0.0
    %1505 = vmatpush1.msra.mxu0 0.0
    %1506 = vmatprep.subr.mxu0 0.0
    %1507 = vmatpush1.msra.mxu0 0.0
    %1508 = vmatprep.subr.mxu0 0.0
    %1509 = vmatpush1.msra.mxu0 0.0
    %1510 = vmatprep.subr.mxu0 0.0
    %1511 = vmatpush1.msra.mxu0 0.0
    %1512 = vmatprep.subr.mxu0 0.0
    %1513 = vmatpush1.msra.mxu0 0.0
    %1514 = vmatprep.subr.mxu0 0.0
    %1515 = vmatpush1.msra.mxu0 0.0
    %1516 = vmatprep.subr.mxu0 0.0
    %1517 = vmatpush1.msra.mxu0 0.0
    %1518 = vmatprep.subr.mxu0 0.0
    %1519 = vmatpush1.msra.mxu0 0.0
    %1520 = vmatprep.subr.mxu0 0.0
    %1521 = vmatpush1.msra.mxu0 0.0
    %1522 = vmatprep.subr.mxu0 0.0
    %1523 = vmatpush1.msra.mxu0 0.0
    %1524 = vmatprep.subr.mxu0 0.0
    %1525 = vmatpush1.msra.mxu0 0.0
    %1526 = vmatprep.mubr.f32.mxu0 0.0
    %1527 = vmatmul.mubr.f32.gmra.mrb[0].mxu0 %v1451
    %v1528 = vpop.f32.mrb[0].mxu0
    %v1529 = vadd.f32 %v1443, %v1528
    %v1530 = vpop.f32.mrb[0].mxu0
    %v1531 = vadd.f32 %v1447, %v1530
    %1532 = vmatprep.mubr.f32.mxu0 0.0
    %1533 = vmatmul.mubr.f32.gmra.mrb[0].mxu0 %v1454
    %v1534 = vpop.f32.mrb[0].mxu0
    %v1535 = vadd.f32 %v1443, %v1534
    %v1536 = vpop.f32.mrb[0].mxu0
    %v1537 = vadd.f32 %v1447, %v1536
    %1538 = vmatprep.mubr.f32.mxu0 0.0
    %1539 = vmatmul.mubr.f32.gmra.mrb[0].mxu0 %v1457
    %v1540 = vpop.f32.mrb[0].mxu0
    %v1541 = vadd.f32 %v1443, %v1540
    %v1542 = vpop.f32.mrb[0].mxu0
    %v1543 = vadd.f32 %v1447, %v1542
    %1544 = vmatprep.mubr.f32.mxu0 0.0
    %1545 = vmatmul.mubr.f32.gmra.mrb[0].mxu0 %v1460
    %v1546 = vpop.f32.mrb[0].mxu0
    %v1547 = vadd.f32 %v1443, %v1546
    %v1548 = vpop.f32.mrb[0].mxu0
    %v1549 = vadd.f32 %v1447, %v1548
    %1550 = vdwg.mxu0
    %v1551 = vld [vmem:[%s4 + $0xc0] sm:$0xff]
    %v1552 = vld [vmem:[%s4 + $0xc8] sm:$0xff]
    %v1553 = vld [vmem:[%s4 + $0xd0] sm:$0xff]
    %v1554 = vld [vmem:[%s4 + $0xd8] sm:$0xff]
    %v1555 = vld [vmem:[%s4 + $0xe0] sm:$0xff]
    %v1556 = vld [vmem:[%s4 + $0xe8] sm:$0xff]
    %v1557 = vld [vmem:[%s4 + $0xf0] sm:$0xff]
    %v1558 = vld [vmem:[%s4 + $0xf8] sm:$0xff]
    %1561 = vrot.lane.b32.xlu0 %v1529, 64
    %v1562 = vpop.permute.xlu0 %1561
    %1563 = vrot.lane.b32.xlu0 %v1535, 64
    %v1564 = vpop.permute.xlu0 %1563
    %vm1565 = vcmask 130048
    %v1566 = vsel %vm1565, %v1529, 0
    %v1568 = vsel %vm1565, %v1535, 0
    %v1570 = vsel %vm1565, %v1562, 0
    %v1572 = vsel %vm1565, %v1564, 0
    %1574 = vmatprep.subr.mxu0 0.0
    %1575 = vmatpush1.xpose.msra.mxu0 %v1570
    %1576 = vmatprep.subr.mxu0 0.0
    %1577 = vmatpush1.xpose.msra.mxu0 %v1572
    %1578 = vmatprep.subr.mxu0 0.0
    %1579 = vmatpush1.xpose.msra.mxu0 0.0
    %1580 = vmatprep.subr.mxu0 0.0
    %1581 = vmatpush1.xpose.msra.mxu0 0.0
    %1582 = vmatprep.subr.mxu0 0.0
    %1583 = vmatpush1.xpose.msra.mxu0 0.0
    %1584 = vmatprep.subr.mxu0 0.0
    %1585 = vmatpush1.xpose.msra.mxu0 0.0
    %1586 = vmatprep.subr.mxu0 0.0
    %1587 = vmatpush1.xpose.msra.mxu0 0.0
    %1588 = vmatprep.subr.mxu0 0.0
    %1589 = vmatpush1.xpose.msra.mxu0 0.0
    %1590 = vmatprep.subr.mxu0 0.0
    %1591 = vmatpush1.xpose.msra.mxu0 0.0
    %1592 = vmatprep.subr.mxu0 0.0
    %1593 = vmatpush1.xpose.msra.mxu0 0.0
    %1594 = vmatprep.subr.mxu0 0.0
    %1595 = vmatpush1.xpose.msra.mxu0 0.0
    %1596 = vmatprep.subr.mxu0 0.0
    %1597 = vmatpush1.xpose.msra.mxu0 0.0
    %1598 = vmatprep.subr.mxu0 0.0
    %1599 = vmatpush1.xpose.msra.mxu0 0.0
    %1600 = vmatprep.subr.mxu0 0.0
    %1601 = vmatpush1.xpose.msra.mxu0 0.0
    %1602 = vmatprep.subr.mxu0 0.0
    %1603 = vmatpush1.xpose.msra.mxu0 0.0
    %1604 = vmatprep.subr.mxu0 0.0
    %1605 = vmatpush1.xpose.msra.mxu0 0.0
    %1606 = vmatprep.subr.mxu0 0.0
    %1607 = vmatpush1.xpose.msra.mxu0 0.0
    %1608 = vmatprep.subr.mxu0 0.0
    %1609 = vmatpush1.xpose.msra.mxu0 0.0
    %1610 = vmatprep.subr.mxu0 0.0
    %1611 = vmatpush1.xpose.msra.mxu0 0.0
    %1612 = vmatprep.subr.mxu0 0.0
    %1613 = vmatpush1.xpose.msra.mxu0 0.0
    %1614 = vmatprep.subr.mxu0 0.0
    %1615 = vmatpush1.xpose.msra.mxu0 0.0
    %1616 = vmatprep.subr.mxu0 0.0
    %1617 = vmatpush1.xpose.msra.mxu0 0.0
    %1618 = vmatprep.subr.mxu0 0.0
    %1619 = vmatpush1.xpose.msra.mxu0 0.0
    %1620 = vmatprep.subr.mxu0 0.0
    %1621 = vmatpush1.xpose.msra.mxu0 0.0
    %1622 = vmatprep.subr.mxu0 0.0
    %1623 = vmatpush1.xpose.msra.mxu0 0.0
    %1624 = vmatprep.subr.mxu0 0.0
    %1625 = vmatpush1.xpose.msra.mxu0 0.0
    %1626 = vmatprep.subr.mxu0 0.0
    %1627 = vmatpush1.xpose.msra.mxu0 0.0
    %1628 = vmatprep.subr.mxu0 0.0
    %1629 = vmatpush1.xpose.msra.mxu0 0.0
    %1630 = vmatprep.subr.mxu0 0.0
    %1631 = vmatpush1.xpose.msra.mxu0 0.0
    %1632 = vmatprep.subr.mxu0 0.0
    %1633 = vmatpush1.xpose.msra.mxu0 0.0
    %1634 = vmatprep.subr.mxu0 0.0
    %1635 = vmatpush1.xpose.msra.mxu0 0.0
    %1636 = vmatprep.subr.mxu0 0.0
    %1637 = vmatpush1.xpose.msra.mxu0 0.0
    %1638 = vmatprep.mubr.f32.mxu0 0.0
    %1639 = vmatmul.mubr.f32.gmra.mrb[0].mxu0 %v1566
    %v1640 = vpop.f32.mrb[0].mxu0
    %v1641 = vadd.f32 0.0, %v1640
    %v1642 = vpop.f32.mrb[0].mxu0
    %1643 = vmatprep.mubr.f32.mxu0 0.0
    %1644 = vmatmul.mubr.f32.gmra.mrb[0].mxu0 %v1568
    %v1645 = vpop.f32.mrb[0].mxu0
    %v1646 = vadd.f32 0.0, %v1645
    %v1647 = vpop.f32.mrb[0].mxu0
    %1648 = vdwg.mxu0
    %v1649 = vmul.f32 %v1641, 0.25
    %v1650 = vmul.f32 %v1646, 0.25
    %v1651 = vsel %vm1565, %v1649, -inf
    %1652 = vmax.xlane.f32.xlu0 %v1651
    %v1653 = vpop.xlane.xlu0 %1652
    %v1654 = vsel %vm1565, %v1650, -inf
    %1655 = vmax.xlane.f32.xlu0 %v1654
    %v1656 = vpop.xlane.xlu0 %1655
    %v1657 = vsub.f32 %v1649, %v1653
    %v1658 = vsub.f32 %v1650, %v1656
    %v1659 = vmul.f32 %v1657, 1.442695
    %v1660 = vpow.pop %v1659
    %v1661 = vmul.f32 %v1658, 1.442695
    %v1662 = vpow.pop %v1661
    %v1663 = vsel %vm1565, %v1660, 0.0
    %1664 = vadd.xlane.f32.xlu0 %v1663
    %v1665 = vpop.xlane.xlu0 %1664
    %v1666 = vsel %vm1565, %v1662, 0.0
    %1667 = vadd.xlane.f32.xlu0 %v1666
    %v1668 = vpop.xlane.xlu0 %1667
    %v1669 = vrcp.pop %v1665
    %v1670 = vrcp.pop %v1668
    %v1671 = vmul.f32 %v1660, %v1669
    %v1672 = vmul.f32 %v1662, %v1670
    %v1674 = vsel %vm1565, %v1671, 0
    %v1677 = vsel %vm1565, %v1672, 0
    %1679 = vmatprep.subr.mxu0 0.0
    %1680 = vmatpush1.msra.mxu0 %v1531
    %1681 = vmatprep.subr.mxu0 0.0
    %1682 = vmatpush1.msra.mxu0 %v1537
    %1683 = vmatprep.subr.mxu0 0.0
    %1684 = vmatpush1.msra.mxu0 0.0
    %1685 = vmatprep.subr.mxu0 0.0
    %1686 = vmatpush1.msra.mxu0 0.0
    %1687 = vmatprep.subr.mxu0 0.0
    %1688 = vmatpush1.msra.mxu0 0.0
    %1689 = vmatprep.subr.mxu0 0.0
    %1690 = vmatpush1.msra.mxu0 0.0
    %1691 = vmatprep.subr.mxu0 0.0
    %1692 = vmatpush1.msra.mxu0 0.0
    %1693 = vmatprep.subr.mxu0 0.0
    %1694 = vmatpush1.msra.mxu0 0.0
    %1695 = vmatprep.subr.mxu0 0.0
    %1696 = vmatpush1.msra.mxu0 0.0
    %1697 = vmatprep.subr.mxu0 0.0
    %1698 = vmatpush1.msra.mxu0 0.0
    %1699 = vmatprep.subr.mxu0 0.0
    %1700 = vmatpush1.msra.mxu0 0.0
    %1701 = vmatprep.subr.mxu0 0.0
    %1702 = vmatpush1.msra.mxu0 0.0
    %1703 = vmatprep.subr.mxu0 0.0
    %1704 = vmatpush1.msra.mxu0 0.0
    %1705 = vmatprep.subr.mxu0 0.0
    %1706 = vmatpush1.msra.mxu0 0.0
    %1707 = vmatprep.subr.mxu0 0.0
    %1708 = vmatpush1.msra.mxu0 0.0
    %1709 = vmatprep.subr.mxu0 0.0
    %1710 = vmatpush1.msra.mxu0 0.0
    %1711 = vmatprep.subr.mxu0 0.0
    %1712 = vmatpush1.msra.mxu0 0.0
    %1713 = vmatprep.subr.mxu0 0.0
    %1714 = vmatpush1.msra.mxu0 0.0
    %1715 = vmatprep.subr.mxu0 0.0
    %1716 = vmatpush1.msra.mxu0 0.0
    %1717 = vmatprep.subr.mxu0 0.0
    %1718 = vmatpush1.msra.mxu0 0.0
    %1719 = vmatprep.subr.mxu0 0.0
    %1720 = vmatpush1.msra.mxu0 0.0
    %1721 = vmatprep.subr.mxu0 0.0
    %1722 = vmatpush1.msra.mxu0 0.0
    %1723 = vmatprep.subr.mxu0 0.0
    %1724 = vmatpush1.msra.mxu0 0.0
    %1725 = vmatprep.subr.mxu0 0.0
    %1726 = vmatpush1.msra.mxu0 0.0
    %1727 = vmatprep.subr.mxu0 0.0
    %1728 = vmatpush1.msra.mxu0 0.0
    %1729 = vmatprep.subr.mxu0 0.0
    %1730 = vmatpush1.msra.mxu0 0.0
    %1731 = vmatprep.subr.mxu0 0.0
    %1732 = vmatpush1.msra.mxu0 0.0
    %1733 = vmatprep.subr.mxu0 0.0
    %1734 = vmatpush1.msra.mxu0 0.0
    %1735 = vmatprep.subr.mxu0 0.0
    %1736 = vmatpush1.msra.mxu0 0.0
    %1737 = vmatprep.subr.mxu0 0.0
    %1738 = vmatpush1.msra.mxu0 0.0
    %1739 = vmatprep.subr.mxu0 0.0
    %1740 = vmatpush1.msra.mxu0 0.0
    %1741 = vmatprep.subr.mxu0 0.0
    %1742 = vmatpush1.msra.mxu0 0.0
    %1743 = vmatprep.mubr.f32.mxu0 0.0
    %1744 = vmatmul.mubr.f32.gmra.mrb[0].mxu0 %v1674
    %v1745 = vpop.f32.mrb[0].mxu0
    %v1746 = vadd.f32 0.0, %v1745
    %v1747 = vpop.f32.mrb[0].mxu0
    %1748 = vmatprep.mubr.f32.mxu0 0.0
    %1749 = vmatmul.mubr.f32.gmra.mrb[0].mxu0 %v1677
    %v1750 = vpop.f32.mrb[0].mxu0
    %v1751 = vadd.f32 0.0, %v1750
    %v1752 = vpop.f32.mrb[0].mxu0
    %1753 = vdwg.mxu0
    %1754 = vrot.lane.b32.xlu0 %v1529, 112
    %v1755 = vpop.permute.xlu0 %1754
    %1756 = vrot.lane.b32.xlu0 %v1535, 112
    %v1757 = vpop.permute.xlu0 %1756
    %1758 = vrot.lane.b32.xlu0 %v1529, 48
    %v1759 = vpop.permute.xlu0 %1758
    %1760 = vrot.lane.b32.xlu0 %v1535, 48
    %v1761 = vpop.permute.xlu0 %1760
    %v1762 = vsel %vm1565, %v1755, 0
    %v1764 = vsel %vm1565, %v1757, 0
    %v1766 = vsel %vm1565, %v1759, 0
    %v1768 = vsel %vm1565, %v1761, 0
    %1770 = vmatprep.subr.mxu0 0.0
    %1771 = vmatpush1.xpose.msra.mxu0 %v1766
    %1772 = vmatprep.subr.mxu0 0.0
    %1773 = vmatpush1.xpose.msra.mxu0 %v1768
    %1774 = vmatprep.subr.mxu0 0.0
    %1775 = vmatpush1.xpose.msra.mxu0 0.0
    %1776 = vmatprep.subr.mxu0 0.0
    %1777 = vmatpush1.xpose.msra.mxu0 0.0
    %1778 = vmatprep.subr.mxu0 0.0
    %1779 = vmatpush1.xpose.msra.mxu0 0.0
    %1780 = vmatprep.subr.mxu0 0.0
    %1781 = vmatpush1.xpose.msra.mxu0 0.0
    %1782 = vmatprep.subr.mxu0 0.0
    %1783 = vmatpush1.xpose.msra.mxu0 0.0
    %1784 = vmatprep.subr.mxu0 0.0
    %1785 = vmatpush1.xpose.msra.mxu0 0.0
    %1786 = vmatprep.subr.mxu0 0.0
    %1787 = vmatpush1.xpose.msra.mxu0 0.0
    %1788 = vmatprep.subr.mxu0 0.0
    %1789 = vmatpush1.xpose.msra.mxu0 0.0
    %1790 = vmatprep.subr.mxu0 0.0
    %1791 = vmatpush1.xpose.msra.mxu0 0.0
    %1792 = vmatprep.subr.mxu0 0.0
    %1793 = vmatpush1.xpose.msra.mxu0 0.0
    %1794 = vmatprep.subr.mxu0 0.0
    %1795 = vmatpush1.xpose.msra.mxu0 0.0
    %1796 = vmatprep.subr.mxu0 0.0
    %1797 = vmatpush1.xpose.msra.mxu0 0.0
    %1798 = vmatprep.subr.mxu0 0.0
    %1799 = vmatpush1.xpose.msra.mxu0 0.0
    %1800 = vmatprep.subr.mxu0 0.0
    %1801 = vmatpush1.xpose.msra.mxu0 0.0
    %1802 = vmatprep.subr.mxu0 0.0
    %1803 = vmatpush1.xpose.msra.mxu0 0.0
    %1804 = vmatprep.subr.mxu0 0.0
    %1805 = vmatpush1.xpose.msra.mxu0 0.0
    %1806 = vmatprep.subr.mxu0 0.0
    %1807 = vmatpush1.xpose.msra.mxu0 0.0
    %1808 = vmatprep.subr.mxu0 0.0
    %1809 = vmatpush1.xpose.msra.mxu0 0.0
    %1810 = vmatprep.subr.mxu0 0.0
    %1811 = vmatpush1.xpose.msra.mxu0 0.0
    %1812 = vmatprep.subr.mxu0 0.0
    %1813 = vmatpush1.xpose.msra.mxu0 0.0
    %1814 = vmatprep.subr.mxu0 0.0
    %1815 = vmatpush1.xpose.msra.mxu0 0.0
    %1816 = vmatprep.subr.mxu0 0.0
    %1817 = vmatpush1.xpose.msra.mxu0 0.0
    %1818 = vmatprep.subr.mxu0 0.0
    %1819 = vmatpush1.xpose.msra.mxu0 0.0
    %1820 = vmatprep.subr.mxu0 0.0
    %1821 = vmatpush1.xpose.msra.mxu0 0.0
    %1822 = vmatprep.subr.mxu0 0.0
    %1823 = vmatpush1.xpose.msra.mxu0 0.0
    %1824 = vmatprep.subr.mxu0 0.0
    %1825 = vmatpush1.xpose.msra.mxu0 0.0
    %1826 = vmatprep.subr.mxu0 0.0
    %1827 = vmatpush1.xpose.msra.mxu0 0.0
    %1828 = vmatprep.subr.mxu0 0.0
    %1829 = vmatpush1.xpose.msra.mxu0 0.0
    %1830 = vmatprep.subr.mxu0 0.0
    %1831 = vmatpush1.xpose.msra.mxu0 0.0
    %1832 = vmatprep.subr.mxu0 0.0
    %1833 = vmatpush1.xpose.msra.mxu0 0.0
    %1834 = vmatprep.mubr.f32.mxu0 0.0
    %1835 = vmatmul.mubr.f32.gmra.mrb[0].mxu0 %v1762
    %v1836 = vpop.f32.mrb[0].mxu0
    %v1837 = vadd.f32 0.0, %v1836
    %v1838 = vpop.f32.mrb[0].mxu0
    %1839 = vmatprep.mubr.f32.mxu0 0.0
    %1840 = vmatmul.mubr.f32.gmra.mrb[0].mxu0 %v1764
    %v1841 = vpop.f32.mrb[0].mxu0
    %v1842 = vadd.f32 0.0, %v1841
    %v1843 = vpop.f32.mrb[0].mxu0
    %1844 = vdwg.mxu0
    %v1845 = vmul.f32 %v1837, 0.25
    %v1846 = vmul.f32 %v1842, 0.25
    %v1847 = vsel %vm1565, %v1845, -inf
    %1848 = vmax.xlane.f32.xlu0 %v1847
    %v1849 = vpop.xlane.xlu0 %1848
    %v1850 = vsel %vm1565, %v1846, -inf
    %1851 = vmax.xlane.f32.xlu0 %v1850
    %v1852 = vpop.xlane.xlu0 %1851
    %v1853 = vsub.f32 %v1845, %v1849
    %v1854 = vsub.f32 %v1846, %v1852
    %v1855 = vmul.f32 %v1853, 1.442695
    %v1856 = vpow.pop %v1855
    %v1857 = vmul.f32 %v1854, 1.442695
    %v1858 = vpow.pop %v1857
    %v1859 = vsel %vm1565, %v1856, 0.0
    %1860 = vadd.xlane.f32.xlu0 %v1859
    %v1861 = vpop.xlane.xlu0 %1860
    %v1862 = vsel %vm1565, %v1858, 0.0
    %1863 = vadd.xlane.f32.xlu0 %v1862
    %v1864 = vpop.xlane.xlu0 %1863
    %v1865 = vrcp.pop %v1861
    %v1866 = vrcp.pop %v1864
    %v1867 = vmul.f32 %v1856, %v1865
    %v1868 = vmul.f32 %v1858, %v1866
    %1871 = vrot.lane.b32.xlu0 %v1531, 112
    %v1872 = vpop.permute.xlu0 %1871
    %1873 = vrot.lane.b32.xlu0 %v1537, 112
    %v1874 = vpop.permute.xlu0 %1873
    %v1878 = vsel %vm1565, %v1867, 0
    %v1881 = vsel %vm1565, %v1868, 0
    %1883 = vmatprep.subr.mxu0 0.0
    %1884 = vmatpush1.msra.mxu0 %v1872
    %1885 = vmatprep.subr.mxu0 0.0
    %1886 = vmatpush1.msra.mxu0 %v1874
    %1887 = vmatprep.subr.mxu0 0.0
    %1888 = vmatpush1.msra.mxu0 0.0
    %1889 = vmatprep.subr.mxu0 0.0
    %1890 = vmatpush1.msra.mxu0 0.0
    %1891 = vmatprep.subr.mxu0 0.0
    %1892 = vmatpush1.msra.mxu0 0.0
    %1893 = vmatprep.subr.mxu0 0.0
    %1894 = vmatpush1.msra.mxu0 0.0
    %1895 = vmatprep.subr.mxu0 0.0
    %1896 = vmatpush1.msra.mxu0 0.0
    %1897 = vmatprep.subr.mxu0 0.0
    %1898 = vmatpush1.msra.mxu0 0.0
    %1899 = vmatprep.subr.mxu0 0.0
    %1900 = vmatpush1.msra.mxu0 0.0
    %1901 = vmatprep.subr.mxu0 0.0
    %1902 = vmatpush1.msra.mxu0 0.0
    %1903 = vmatprep.subr.mxu0 0.0
    %1904 = vmatpush1.msra.mxu0 0.0
    %1905 = vmatprep.subr.mxu0 0.0
    %1906 = vmatpush1.msra.mxu0 0.0
    %1907 = vmatprep.subr.mxu0 0.0
    %1908 = vmatpush1.msra.mxu0 0.0
    %1909 = vmatprep.subr.mxu0 0.0
    %1910 = vmatpush1.msra.mxu0 0.0
    %1911 = vmatprep.subr.mxu0 0.0
    %1912 = vmatpush1.msra.mxu0 0.0
    %1913 = vmatprep.subr.mxu0 0.0
    %1914 = vmatpush1.msra.mxu0 0.0
    %1915 = vmatprep.subr.mxu0 0.0
    %1916 = vmatpush1.msra.mxu0 0.0
    %1917 = vmatprep.subr.mxu0 0.0
    %1918 = vmatpush1.msra.mxu0 0.0
    %1919 = vmatprep.subr.mxu0 0.0
    %1920 = vmatpush1.msra.mxu0 0.0
    %1921 = vmatprep.subr.mxu0 0.0
    %1922 = vmatpush1.msra.mxu0 0.0
    %1923 = vmatprep.subr.mxu0 0.0
    %1924 = vmatpush1.msra.mxu0 0.0
    %1925 = vmatprep.subr.mxu0 0.0
    %1926 = vmatpush1.msra.mxu0 0.0
    %1927 = vmatprep.subr.mxu0 0.0
    %1928 = vmatpush1.msra.mxu0 0.0
    %1929 = vmatprep.subr.mxu0 0.0
    %1930 = vmatpush1.msra.mxu0 0.0
    %1931 = vmatprep.subr.mxu0 0.0
    %1932 = vmatpush1.msra.mxu0 0.0
    %1933 = vmatprep.subr.mxu0 0.0
    %1934 = vmatpush1.msra.mxu0 0.0
    %1935 = vmatprep.subr.mxu0 0.0
    %1936 = vmatpush1.msra.mxu0 0.0
    %1937 = vmatprep.subr.mxu0 0.0
    %1938 = vmatpush1.msra.mxu0 0.0
    %1939 = vmatprep.subr.mxu0 0.0
    %1940 = vmatpush1.msra.mxu0 0.0
    %1941 = vmatprep.subr.mxu0 0.0
    %1942 = vmatpush1.msra.mxu0 0.0
    %1943 = vmatprep.subr.mxu0 0.0
    %1944 = vmatpush1.msra.mxu0 0.0
    %1945 = vmatprep.subr.mxu0 0.0
    %1946 = vmatpush1.msra.mxu0 0.0
    %1947 = vmatprep.mubr.f32.mxu0 0.0
    %1948 = vmatmul.mubr.f32.gmra.mrb[0].mxu0 %v1878
    %v1949 = vpop.f32.mrb[0].mxu0
    %v1950 = vadd.f32 0.0, %v1949
    %v1951 = vpop.f32.mrb[0].mxu0
    %1952 = vmatprep.mubr.f32.mxu0 0.0
    %1953 = vmatmul.mubr.f32.gmra.mrb[0].mxu0 %v1881
    %v1954 = vpop.f32.mrb[0].mxu0
    %v1955 = vadd.f32 0.0, %v1954
    %v1956 = vpop.f32.mrb[0].mxu0
    %1957 = vdwg.mxu0
    %v1959 = vsel %vm1565, %v1950, 0
    %v1962 = vsel %vm1565, %v1955, 0
    %1964 = vmatprep.subr.mxu0 0.0
    %1965 = vmatpush1.msra.mxu0 %v1553
    %1966 = vmatprep.subr.mxu0 0.0
    %1967 = vmatpush1.msra.mxu0 %v1554
    %1968 = vmatprep.subr.mxu0 0.0
    %1969 = vmatpush1.msra.mxu0 0.0
    %1970 = vmatprep.subr.mxu0 0.0
    %1971 = vmatpush1.msra.mxu0 0.0
    %1972 = vmatprep.subr.mxu0 0.0
    %1973 = vmatpush1.msra.mxu0 0.0
    %1974 = vmatprep.subr.mxu0 0.0
    %1975 = vmatpush1.msra.mxu0 0.0
    %1976 = vmatprep.subr.mxu0 0.0
    %1977 = vmatpush1.msra.mxu0 0.0
    %1978 = vmatprep.subr.mxu0 0.0
    %1979 = vmatpush1.msra.mxu0 0.0
    %1980 = vmatprep.subr.mxu0 0.0
    %1981 = vmatpush1.msra.mxu0 0.0
    %1982 = vmatprep.subr.mxu0 0.0
    %1983 = vmatpush1.msra.mxu0 0.0
    %1984 = vmatprep.subr.mxu0 0.0
    %1985 = vmatpush1.msra.mxu0 0.0
    %1986 = vmatprep.subr.mxu0 0.0
    %1987 = vmatpush1.msra.mxu0 0.0
    %1988 = vmatprep.subr.mxu0 0.0
    %1989 = vmatpush1.msra.mxu0 0.0
    %1990 = vmatprep.subr.mxu0 0.0
    %1991 = vmatpush1.msra.mxu0 0.0
    %1992 = vmatprep.subr.mxu0 0.0
    %1993 = vmatpush1.msra.mxu0 0.0
    %1994 = vmatprep.subr.mxu0 0.0
    %1995 = vmatpush1.msra.mxu0 0.0
    %1996 = vmatprep.subr.mxu0 0.0
    %1997 = vmatpush1.msra.mxu0 0.0
    %1998 = vmatprep.subr.mxu0 0.0
    %1999 = vmatpush1.msra.mxu0 0.0
    %2000 = vmatprep.subr.mxu0 0.0
    %2001 = vmatpush1.msra.mxu0 0.0
    %2002 = vmatprep.subr.mxu0 0.0
    %2003 = vmatpush1.msra.mxu0 0.0
    %2004 = vmatprep.subr.mxu0 0.0
    %2005 = vmatpush1.msra.mxu0 0.0
    %2006 = vmatprep.subr.mxu0 0.0
    %2007 = vmatpush1.msra.mxu0 0.0
    %2008 = vmatprep.subr.mxu0 0.0
    %2009 = vmatpush1.msra.mxu0 0.0
    %2010 = vmatprep.subr.mxu0 0.0
    %2011 = vmatpush1.msra.mxu0 0.0
    %2012 = vmatprep.subr.mxu0 0.0
    %2013 = vmatpush1.msra.mxu0 0.0
    %2014 = vmatprep.subr.mxu0 0.0
    %2015 = vmatpush1.msra.mxu0 0.0
    %2016 = vmatprep.subr.mxu0 0.0
    %2017 = vmatpush1.msra.mxu0 0.0
    %2018 = vmatprep.subr.mxu0 0.0
    %2019 = vmatpush1.msra.mxu0 0.0
    %2020 = vmatprep.subr.mxu0 0.0
    %2021 = vmatpush1.msra.mxu0 0.0
    %2022 = vmatprep.subr.mxu0 0.0
    %2023 = vmatpush1.msra.mxu0 0.0
    %2024 = vmatprep.subr.mxu0 0.0
    %2025 = vmatpush1.msra.mxu0 0.0
    %2026 = vmatprep.subr.mxu0 0.0
    %2027 = vmatpush1.msra.mxu0 0.0
    %2028 = vmatprep.mubr.f32.mxu0 0.0
    %2029 = vmatmul.mubr.f32.gmra.mrb[0].mxu0 %v1959
    %v2030 = vpop.f32.mrb[0].mxu0
    %v2031 = vadd.f32 0.0, %v2030
    %v2032 = vpop.f32.mrb[0].mxu0
    %2033 = vmatprep.mubr.f32.mxu0 0.0
    %2034 = vmatmul.mubr.f32.gmra.mrb[0].mxu0 %v1962
    %v2035 = vpop.f32.mrb[0].mxu0
    %v2036 = vadd.f32 0.0, %v2035
    %v2037 = vpop.f32.mrb[0].mxu0
    %2038 = vdwg.mxu0
    %v2040 = vsel %vm1565, %v1746, 0
    %v2043 = vsel %vm1565, %v1751, 0
    %2045 = vmatprep.subr.mxu0 0.0
    %2046 = vmatpush1.msra.mxu0 %v1551
    %2047 = vmatprep.subr.mxu0 0.0
    %2048 = vmatpush1.msra.mxu0 %v1552
    %2049 = vmatprep.subr.mxu0 0.0
    %2050 = vmatpush1.msra.mxu0 0.0
    %2051 = vmatprep.subr.mxu0 0.0
    %2052 = vmatpush1.msra.mxu0 0.0
    %2053 = vmatprep.subr.mxu0 0.0
    %2054 = vmatpush1.msra.mxu0 0.0
    %2055 = vmatprep.subr.mxu0 0.0
    %2056 = vmatpush1.msra.mxu0 0.0
    %2057 = vmatprep.subr.mxu0 0.0
    %2058 = vmatpush1.msra.mxu0 0.0
    %2059 = vmatprep.subr.mxu0 0.0
    %2060 = vmatpush1.msra.mxu0 0.0
    %2061 = vmatprep.subr.mxu0 0.0
    %2062 = vmatpush1.msra.mxu0 0.0
    %2063 = vmatprep.subr.mxu0 0.0
    %2064 = vmatpush1.msra.mxu0 0.0
    %2065 = vmatprep.subr.mxu0 0.0
    %2066 = vmatpush1.msra.mxu0 0.0
    %2067 = vmatprep.subr.mxu0 0.0
    %2068 = vmatpush1.msra.mxu0 0.0
    %2069 = vmatprep.subr.mxu0 0.0
    %2070 = vmatpush1.msra.mxu0 0.0
    %2071 = vmatprep.subr.mxu0 0.0
    %2072 = vmatpush1.msra.mxu0 0.0
    %2073 = vmatprep.subr.mxu0 0.0
    %2074 = vmatpush1.msra.mxu0 0.0
    %2075 = vmatprep.subr.mxu0 0.0
    %2076 = vmatpush1.msra.mxu0 0.0
    %2077 = vmatprep.subr.mxu0 0.0
    %2078 = vmatpush1.msra.mxu0 0.0
    %2079 = vmatprep.subr.mxu0 0.0
    %2080 = vmatpush1.msra.mxu0 0.0
    %2081 = vmatprep.subr.mxu0 0.0
    %2082 = vmatpush1.msra.mxu0 0.0
    %2083 = vmatprep.subr.mxu0 0.0
    %2084 = vmatpush1.msra.mxu0 0.0
    %2085 = vmatprep.subr.mxu0 0.0
    %2086 = vmatpush1.msra.mxu0 0.0
    %2087 = vmatprep.subr.mxu0 0.0
    %2088 = vmatpush1.msra.mxu0 0.0
    %2089 = vmatprep.subr.mxu0 0.0
    %2090 = vmatpush1.msra.mxu0 0.0
    %2091 = vmatprep.subr.mxu0 0.0
    %2092 = vmatpush1.msra.mxu0 0.0
    %2093 = vmatprep.subr.mxu0 0.0
    %2094 = vmatpush1.msra.mxu0 0.0
    %2095 = vmatprep.subr.mxu0 0.0
    %2096 = vmatpush1.msra.mxu0 0.0
    %2097 = vmatprep.subr.mxu0 0.0
    %2098 = vmatpush1.msra.mxu0 0.0
    %2099 = vmatprep.subr.mxu0 0.0
    %2100 = vmatpush1.msra.mxu0 0.0
    %2101 = vmatprep.subr.mxu0 0.0
    %2102 = vmatpush1.msra.mxu0 0.0
    %2103 = vmatprep.subr.mxu0 0.0
    %2104 = vmatpush1.msra.mxu0 0.0
    %2105 = vmatprep.subr.mxu0 0.0
    %2106 = vmatpush1.msra.mxu0 0.0
    %2107 = vmatprep.subr.mxu0 0.0
    %2108 = vmatpush1.msra.mxu0 0.0
    %2109 = vmatprep.mubr.f32.mxu0 0.0
    %2110 = vmatmul.mubr.f32.gmra.mrb[0].mxu0 %v2040
    %v2111 = vpop.f32.mrb[0].mxu0
    %v2112 = vadd.f32 %v2031, %v2111
    %v2113 = vpop.f32.mrb[0].mxu0
    %2114 = vmatprep.mubr.f32.mxu0 0.0
    %2115 = vmatmul.mubr.f32.gmra.mrb[0].mxu0 %v2043
    %v2116 = vpop.f32.mrb[0].mxu0
    %v2117 = vadd.f32 %v2036, %v2116
    %v2118 = vpop.f32.mrb[0].mxu0
    %2119 = vdwg.mxu0
    %2120 = vrot.lane.b32.xlu0 %v1529, 96
    %v2121 = vpop.permute.xlu0 %2120
    %2122 = vrot.lane.b32.xlu0 %v1535, 96
    %v2123 = vpop.permute.xlu0 %2122
    %2124 = vrot.lane.b32.xlu0 %v1529, 32
    %v2125 = vpop.permute.xlu0 %2124
    %2126 = vrot.lane.b32.xlu0 %v1535, 32
    %v2127 = vpop.permute.xlu0 %2126
    %v2128 = vsel %vm1565, %v2121, 0
    %v2130 = vsel %vm1565, %v2123, 0
    %v2132 = vsel %vm1565, %v2125, 0
    %v2134 = vsel %vm1565, %v2127, 0
    %2136 = vmatprep.subr.mxu0 0.0
    %2137 = vmatpush1.xpose.msra.mxu0 %v2132
    %2138 = vmatprep.subr.mxu0 0.0
    %2139 = vmatpush1.xpose.msra.mxu0 %v2134
    %2140 = vmatprep.subr.mxu0 0.0
    %2141 = vmatpush1.xpose.msra.mxu0 0.0
    %2142 = vmatprep.subr.mxu0 0.0
    %2143 = vmatpush1.xpose.msra.mxu0 0.0
    %2144 = vmatprep.subr.mxu0 0.0
    %2145 = vmatpush1.xpose.msra.mxu0 0.0
    %2146 = vmatprep.subr.mxu0 0.0
    %2147 = vmatpush1.xpose.msra.mxu0 0.0
    %2148 = vmatprep.subr.mxu0 0.0
    %2149 = vmatpush1.xpose.msra.mxu0 0.0
    %2150 = vmatprep.subr.mxu0 0.0
    %2151 = vmatpush1.xpose.msra.mxu0 0.0
    %2152 = vmatprep.subr.mxu0 0.0
    %2153 = vmatpush1.xpose.msra.mxu0 0.0
    %2154 = vmatprep.subr.mxu0 0.0
    %2155 = vmatpush1.xpose.msra.mxu0 0.0
    %2156 = vmatprep.subr.mxu0 0.0
    %2157 = vmatpush1.xpose.msra.mxu0 0.0
    %2158 = vmatprep.subr.mxu0 0.0
    %2159 = vmatpush1.xpose.msra.mxu0 0.0
    %2160 = vmatprep.subr.mxu0 0.0
    %2161 = vmatpush1.xpose.msra.mxu0 0.0
    %2162 = vmatprep.subr.mxu0 0.0
    %2163 = vmatpush1.xpose.msra.mxu0 0.0
    %2164 = vmatprep.subr.mxu0 0.0
    %2165 = vmatpush1.xpose.msra.mxu0 0.0
    %2166 = vmatprep.subr.mxu0 0.0
    %2167 = vmatpush1.xpose.msra.mxu0 0.0
    %2168 = vmatprep.subr.mxu0 0.0
    %2169 = vmatpush1.xpose.msra.mxu0 0.0
    %2170 = vmatprep.subr.mxu0 0.0
    %2171 = vmatpush1.xpose.msra.mxu0 0.0
    %2172 = vmatprep.subr.mxu0 0.0
    %2173 = vmatpush1.xpose.msra.mxu0 0.0
    %2174 = vmatprep.subr.mxu0 0.0
    %2175 = vmatpush1.xpose.msra.mxu0 0.0
    %2176 = vmatprep.subr.mxu0 0.0
    %2177 = vmatpush1.xpose.msra.mxu0 0.0
    %2178 = vmatprep.subr.mxu0 0.0
    %2179 = vmatpush1.xpose.msra.mxu0 0.0
    %2180 = vmatprep.subr.mxu0 0.0
    %2181 = vmatpush1.xpose.msra.mxu0 0.0
    %2182 = vmatprep.subr.mxu0 0.0
    %2183 = vmatpush1.xpose.msra.mxu0 0.0
    %2184 = vmatprep.subr.mxu0 0.0
    %2185 = vmatpush1.xpose.msra.mxu0 0.0
    %2186 = vmatprep.subr.mxu0 0.0
    %2187 = vmatpush1.xpose.msra.mxu0 0.0
    %2188 = vmatprep.subr.mxu0 0.0
    %2189 = vmatpush1.xpose.msra.mxu0 0.0
    %2190 = vmatprep.subr.mxu0 0.0
    %2191 = vmatpush1.xpose.msra.mxu0 0.0
    %2192 = vmatprep.subr.mxu0 0.0
    %2193 = vmatpush1.xpose.msra.mxu0 0.0
    %2194 = vmatprep.subr.mxu0 0.0
    %2195 = vmatpush1.xpose.msra.mxu0 0.0
    %2196 = vmatprep.subr.mxu0 0.0
    %2197 = vmatpush1.xpose.msra.mxu0 0.0
    %2198 = vmatprep.subr.mxu0 0.0
    %2199 = vmatpush1.xpose.msra.mxu0 0.0
    %2200 = vmatprep.mubr.f32.mxu0 0.0
    %2201 = vmatmul.mubr.f32.gmra.mrb[0].mxu0 %v2128
    %v2202 = vpop.f32.mrb[0].mxu0
    %v2203 = vadd.f32 0.0, %v2202
    %v2204 = vpop.f32.mrb[0].mxu0
    %2205 = vmatprep.mubr.f32.mxu0 0.0
    %2206 = vmatmul.mubr.f32.gmra.mrb[0].mxu0 %v2130
    %v2207 = vpop.f32.mrb[0].mxu0
    %v2208 = vadd.f32 0.0, %v2207
    %v2209 = vpop.f32.mrb[0].mxu0
    %2210 = vdwg.mxu0
    %v2211 = vmul.f32 %v2203, 0.25
    %v2212 = vmul.f32 %v2208, 0.25
    %v2213 = vsel %vm1565, %v2211, -inf
    %2214 = vmax.xlane.f32.xlu0 %v2213
    %v2215 = vpop.xlane.xlu0 %2214
    %v2216 = vsel %vm1565, %v2212, -inf
    %2217 = vmax.xlane.f32.xlu0 %v2216
    %v2218 = vpop.xlane.xlu0 %2217
    %v2219 = vsub.f32 %v2211, %v2215
    %v2220 = vsub.f32 %v2212, %v2218
    %v2221 = vmul.f32 %v2219, 1.442695
    %v2222 = vpow.pop %v2221
    %v2223 = vmul.f32 %v2220, 1.442695
    %v2224 = vpow.pop %v2223
    %v2225 = vsel %vm1565, %v2222, 0.0
    %2226 = vadd.xlane.f32.xlu0 %v2225
    %v2227 = vpop.xlane.xlu0 %2226
    %v2228 = vsel %vm1565, %v2224, 0.0
    %2229 = vadd.xlane.f32.xlu0 %v2228
    %v2230 = vpop.xlane.xlu0 %2229
    %v2231 = vrcp.pop %v2227
    %v2232 = vrcp.pop %v2230
    %v2233 = vmul.f32 %v2222, %v2231
    %v2234 = vmul.f32 %v2224, %v2232
    %2235 = vrot.lane.b32.xlu0 %v1531, 96
    %v2236 = vpop.permute.xlu0 %2235
    %2237 = vrot.lane.b32.xlu0 %v1537, 96
    %v2238 = vpop.permute.xlu0 %2237
    %v2242 = vsel %vm1565, %v2233, 0
    %v2245 = vsel %vm1565, %v2234, 0
    %2247 = vmatprep.subr.mxu0 0.0
    %2248 = vmatpush1.msra.mxu0 %v2236
    %2249 = vmatprep.subr.mxu0 0.0
    %2250 = vmatpush1.msra.mxu0 %v2238
    %2251 = vmatprep.subr.mxu0 0.0
    %2252 = vmatpush1.msra.mxu0 0.0
    %2253 = vmatprep.subr.mxu0 0.0
    %2254 = vmatpush1.msra.mxu0 0.0
    %2255 = vmatprep.subr.mxu0 0.0
    %2256 = vmatpush1.msra.mxu0 0.0
    %2257 = vmatprep.subr.mxu0 0.0
    %2258 = vmatpush1.msra.mxu0 0.0
    %2259 = vmatprep.subr.mxu0 0.0
    %2260 = vmatpush1.msra.mxu0 0.0
    %2261 = vmatprep.subr.mxu0 0.0
    %2262 = vmatpush1.msra.mxu0 0.0
    %2263 = vmatprep.subr.mxu0 0.0
    %2264 = vmatpush1.msra.mxu0 0.0
    %2265 = vmatprep.subr.mxu0 0.0
    %2266 = vmatpush1.msra.mxu0 0.0
    %2267 = vmatprep.subr.mxu0 0.0
    %2268 = vmatpush1.msra.mxu0 0.0
    %2269 = vmatprep.subr.mxu0 0.0
    %2270 = vmatpush1.msra.mxu0 0.0
    %2271 = vmatprep.subr.mxu0 0.0
    %2272 = vmatpush1.msra.mxu0 0.0
    %2273 = vmatprep.subr.mxu0 0.0
    %2274 = vmatpush1.msra.mxu0 0.0
    %2275 = vmatprep.subr.mxu0 0.0
    %2276 = vmatpush1.msra.mxu0 0.0
    %2277 = vmatprep.subr.mxu0 0.0
    %2278 = vmatpush1.msra.mxu0 0.0
    %2279 = vmatprep.subr.mxu0 0.0
    %2280 = vmatpush1.msra.mxu0 0.0
    %2281 = vmatprep.subr.mxu0 0.0
    %2282 = vmatpush1.msra.mxu0 0.0
    %2283 = vmatprep.subr.mxu0 0.0
    %2284 = vmatpush1.msra.mxu0 0.0
    %2285 = vmatprep.subr.mxu0 0.0
    %2286 = vmatpush1.msra.mxu0 0.0
    %2287 = vmatprep.subr.mxu0 0.0
    %2288 = vmatpush1.msra.mxu0 0.0
    %2289 = vmatprep.subr.mxu0 0.0
    %2290 = vmatpush1.msra.mxu0 0.0
    %2291 = vmatprep.subr.mxu0 0.0
    %2292 = vmatpush1.msra.mxu0 0.0
    %2293 = vmatprep.subr.mxu0 0.0
    %2294 = vmatpush1.msra.mxu0 0.0
    %2295 = vmatprep.subr.mxu0 0.0
    %2296 = vmatpush1.msra.mxu0 0.0
    %2297 = vmatprep.subr.mxu0 0.0
    %2298 = vmatpush1.msra.mxu0 0.0
    %2299 = vmatprep.subr.mxu0 0.0
    %2300 = vmatpush1.msra.mxu0 0.0
    %2301 = vmatprep.subr.mxu0 0.0
    %2302 = vmatpush1.msra.mxu0 0.0
    %2303 = vmatprep.subr.mxu0 0.0
    %2304 = vmatpush1.msra.mxu0 0.0
    %2305 = vmatprep.subr.mxu0 0.0
    %2306 = vmatpush1.msra.mxu0 0.0
    %2307 = vmatprep.subr.mxu0 0.0
    %2308 = vmatpush1.msra.mxu0 0.0
    %2309 = vmatprep.subr.mxu0 0.0
    %2310 = vmatpush1.msra.mxu0 0.0
    %2311 = vmatprep.mubr.f32.mxu0 0.0
    %2312 = vmatmul.mubr.f32.gmra.mrb[0].mxu0 %v2242
    %v2313 = vpop.f32.mrb[0].mxu0
    %v2314 = vadd.f32 0.0, %v2313
    %v2315 = vpop.f32.mrb[0].mxu0
    %2316 = vmatprep.mubr.f32.mxu0 0.0
    %2317 = vmatmul.mubr.f32.gmra.mrb[0].mxu0 %v2245
    %v2318 = vpop.f32.mrb[0].mxu0
    %v2319 = vadd.f32 0.0, %v2318
    %v2320 = vpop.f32.mrb[0].mxu0
    %2321 = vdwg.mxu0
    %v2323 = vsel %vm1565, %v2314, 0
    %v2326 = vsel %vm1565, %v2319, 0
    %2328 = vmatprep.subr.mxu0 0.0
    %2329 = vmatpush1.msra.mxu0 %v1555
    %2330 = vmatprep.subr.mxu0 0.0
    %2331 = vmatpush1.msra.mxu0 %v1556
    %2332 = vmatprep.subr.mxu0 0.0
    %2333 = vmatpush1.msra.mxu0 0.0
    %2334 = vmatprep.subr.mxu0 0.0
    %2335 = vmatpush1.msra.mxu0 0.0
    %2336 = vmatprep.subr.mxu0 0.0
    %2337 = vmatpush1.msra.mxu0 0.0
    %2338 = vmatprep.subr.mxu0 0.0
    %2339 = vmatpush1.msra.mxu0 0.0
    %2340 = vmatprep.subr.mxu0 0.0
    %2341 = vmatpush1.msra.mxu0 0.0
    %2342 = vmatprep.subr.mxu0 0.0
    %2343 = vmatpush1.msra.mxu0 0.0
    %2344 = vmatprep.subr.mxu0 0.0
    %2345 = vmatpush1.msra.mxu0 0.0
    %2346 = vmatprep.subr.mxu0 0.0
    %2347 = vmatpush1.msra.mxu0 0.0
    %2348 = vmatprep.subr.mxu0 0.0
    %2349 = vmatpush1.msra.mxu0 0.0
    %2350 = vmatprep.subr.mxu0 0.0
    %2351 = vmatpush1.msra.mxu0 0.0
    %2352 = vmatprep.subr.mxu0 0.0
    %2353 = vmatpush1.msra.mxu0 0.0
    %2354 = vmatprep.subr.mxu0 0.0
    %2355 = vmatpush1.msra.mxu0 0.0
    %2356 = vmatprep.subr.mxu0 0.0
    %2357 = vmatpush1.msra.mxu0 0.0
    %2358 = vmatprep.subr.mxu0 0.0
    %2359 = vmatpush1.msra.mxu0 0.0
    %2360 = vmatprep.subr.mxu0 0.0
    %2361 = vmatpush1.msra.mxu0 0.0
    %2362 = vmatprep.subr.mxu0 0.0
    %2363 = vmatpush1.msra.mxu0 0.0
    %2364 = vmatprep.subr.mxu0 0.0
    %2365 = vmatpush1.msra.mxu0 0.0
    %2366 = vmatprep.subr.mxu0 0.0
    %2367 = vmatpush1.msra.mxu0 0.0
    %2368 = vmatprep.subr.mxu0 0.0
    %2369 = vmatpush1.msra.mxu0 0.0
    %2370 = vmatprep.subr.mxu0 0.0
    %2371 = vmatpush1.msra.mxu0 0.0
    %2372 = vmatprep.subr.mxu0 0.0
    %2373 = vmatpush1.msra.mxu0 0.0
    %2374 = vmatprep.subr.mxu0 0.0
    %2375 = vmatpush1.msra.mxu0 0.0
    %2376 = vmatprep.subr.mxu0 0.0
    %2377 = vmatpush1.msra.mxu0 0.0
    %2378 = vmatprep.subr.mxu0 0.0
    %2379 = vmatpush1.msra.mxu0 0.0
    %2380 = vmatprep.subr.mxu0 0.0
    %2381 = vmatpush1.msra.mxu0 0.0
    %2382 = vmatprep.subr.mxu0 0.0
    %2383 = vmatpush1.msra.mxu0 0.0
    %2384 = vmatprep.subr.mxu0 0.0
    %2385 = vmatpush1.msra.mxu0 0.0
    %2386 = vmatprep.subr.mxu0 0.0
    %2387 = vmatpush1.msra.mxu0 0.0
    %2388 = vmatprep.subr.mxu0 0.0
    %2389 = vmatpush1.msra.mxu0 0.0
    %2390 = vmatprep.subr.mxu0 0.0
    %2391 = vmatpush1.msra.mxu0 0.0
    %2392 = vmatprep.mubr.f32.mxu0 0.0
    %2393 = vmatmul.mubr.f32.gmra.mrb[0].mxu0 %v2323
    %v2394 = vpop.f32.mrb[0].mxu0
    %v2395 = vadd.f32 0.0, %v2394
    %v2396 = vpop.f32.mrb[0].mxu0
    %2397 = vmatprep.mubr.f32.mxu0 0.0
    %2398 = vmatmul.mubr.f32.gmra.mrb[0].mxu0 %v2326
    %v2399 = vpop.f32.mrb[0].mxu0
    %v2400 = vadd.f32 0.0, %v2399
    %v2401 = vpop.f32.mrb[0].mxu0
    %2402 = vdwg.mxu0
    %v2403 = vadd.f32 %v2112, %v2395
    %v2404 = vadd.f32 %v2117, %v2400
    %2405 = vrot.lane.b32.xlu0 %v1529, 80
    %v2406 = vpop.permute.xlu0 %2405
    %2407 = vrot.lane.b32.xlu0 %v1535, 80
    %v2408 = vpop.permute.xlu0 %2407
    %2409 = vrot.lane.b32.xlu0 %v1529, 16
    %v2410 = vpop.permute.xlu0 %2409
    %2411 = vrot.lane.b32.xlu0 %v1535, 16
    %v2412 = vpop.permute.xlu0 %2411
    %v2413 = vsel %vm1565, %v2406, 0
    %v2415 = vsel %vm1565, %v2408, 0
    %v2417 = vsel %vm1565, %v2410, 0
    %v2419 = vsel %vm1565, %v2412, 0
    %2421 = vmatprep.subr.mxu0 0.0
    %2422 = vmatpush1.xpose.msra.mxu0 %v2417
    %2423 = vmatprep.subr.mxu0 0.0
    %2424 = vmatpush1.xpose.msra.mxu0 %v2419
    %2425 = vmatprep.subr.mxu0 0.0
    %2426 = vmatpush1.xpose.msra.mxu0 0.0
    %2427 = vmatprep.subr.mxu0 0.0
    %2428 = vmatpush1.xpose.msra.mxu0 0.0
    %2429 = vmatprep.subr.mxu0 0.0
    %2430 = vmatpush1.xpose.msra.mxu0 0.0
    %2431 = vmatprep.subr.mxu0 0.0
    %2432 = vmatpush1.xpose.msra.mxu0 0.0
    %2433 = vmatprep.subr.mxu0 0.0
    %2434 = vmatpush1.xpose.msra.mxu0 0.0
    %2435 = vmatprep.subr.mxu0 0.0
    %2436 = vmatpush1.xpose.msra.mxu0 0.0
    %2437 = vmatprep.subr.mxu0 0.0
    %2438 = vmatpush1.xpose.msra.mxu0 0.0
    %2439 = vmatprep.subr.mxu0 0.0
    %2440 = vmatpush1.xpose.msra.mxu0 0.0
    %2441 = vmatprep.subr.mxu0 0.0
    %2442 = vmatpush1.xpose.msra.mxu0 0.0
    %2443 = vmatprep.subr.mxu0 0.0
    %2444 = vmatpush1.xpose.msra.mxu0 0.0
    %2445 = vmatprep.subr.mxu0 0.0
    %2446 = vmatpush1.xpose.msra.mxu0 0.0
    %2447 = vmatprep.subr.mxu0 0.0
    %2448 = vmatpush1.xpose.msra.mxu0 0.0
    %2449 = vmatprep.subr.mxu0 0.0
    %2450 = vmatpush1.xpose.msra.mxu0 0.0
    %2451 = vmatprep.subr.mxu0 0.0
    %2452 = vmatpush1.xpose.msra.mxu0 0.0
    %2453 = vmatprep.subr.mxu0 0.0
    %2454 = vmatpush1.xpose.msra.mxu0 0.0
    %2455 = vmatprep.subr.mxu0 0.0
    %2456 = vmatpush1.xpose.msra.mxu0 0.0
    %2457 = vmatprep.subr.mxu0 0.0
    %2458 = vmatpush1.xpose.msra.mxu0 0.0
    %2459 = vmatprep.subr.mxu0 0.0
    %2460 = vmatpush1.xpose.msra.mxu0 0.0
    %2461 = vmatprep.subr.mxu0 0.0
    %2462 = vmatpush1.xpose.msra.mxu0 0.0
    %2463 = vmatprep.subr.mxu0 0.0
    %2464 = vmatpush1.xpose.msra.mxu0 0.0
    %2465 = vmatprep.subr.mxu0 0.0
    %2466 = vmatpush1.xpose.msra.mxu0 0.0
    %2467 = vmatprep.subr.mxu0 0.0
    %2468 = vmatpush1.xpose.msra.mxu0 0.0
    %2469 = vmatprep.subr.mxu0 0.0
    %2470 = vmatpush1.xpose.msra.mxu0 0.0
    %2471 = vmatprep.subr.mxu0 0.0
    %2472 = vmatpush1.xpose.msra.mxu0 0.0
    %2473 = vmatprep.subr.mxu0 0.0
    %2474 = vmatpush1.xpose.msra.mxu0 0.0
    %2475 = vmatprep.subr.mxu0 0.0
    %2476 = vmatpush1.xpose.msra.mxu0 0.0
    %2477 = vmatprep.subr.mxu0 0.0
    %2478 = vmatpush1.xpose.msra.mxu0 0.0
    %2479 = vmatprep.subr.mxu0 0.0
    %2480 = vmatpush1.xpose.msra.mxu0 0.0
    %2481 = vmatprep.subr.mxu0 0.0
    %2482 = vmatpush1.xpose.msra.mxu0 0.0
    %2483 = vmatprep.subr.mxu0 0.0
    %2484 = vmatpush1.xpose.msra.mxu0 0.0
    %2485 = vmatprep.mubr.f32.mxu0 0.0
    %2486 = vmatmul.mubr.f32.gmra.mrb[0].mxu0 %v2413
    %v2487 = vpop.f32.mrb[0].mxu0
    %v2488 = vadd.f32 0.0, %v2487
    %v2489 = vpop.f32.mrb[0].mxu0
    %2490 = vmatprep.mubr.f32.mxu0 0.0
    %2491 = vmatmul.mubr.f32.gmra.mrb[0].mxu0 %v2415
    %v2492 = vpop.f32.mrb[0].mxu0
    %v2493 = vadd.f32 0.0, %v2492
    %v2494 = vpop.f32.mrb[0].mxu0
    %2495 = vdwg.mxu0
    %v2496 = vmul.f32 %v2488, 0.25
    %v2497 = vmul.f32 %v2493, 0.25
    %v2498 = vsel %vm1565, %v2496, -inf
    %2499 = vmax.xlane.f32.xlu0 %v2498
    %v2500 = vpop.xlane.xlu0 %2499
    %v2501 = vsel %vm1565, %v2497, -inf
    %2502 = vmax.xlane.f32.xlu0 %v2501
    %v2503 = vpop.xlane.xlu0 %2502
    %v2504 = vsub.f32 %v2496, %v2500
    %v2505 = vsub.f32 %v2497, %v2503
    %v2506 = vmul.f32 %v2504, 1.442695
    %v2507 = vpow.pop %v2506
    %v2508 = vmul.f32 %v2505, 1.442695
    %v2509 = vpow.pop %v2508
    %v2510 = vsel %vm1565, %v2507, 0.0
    %2511 = vadd.xlane.f32.xlu0 %v2510
    %v2512 = vpop.xlane.xlu0 %2511
    %v2513 = vsel %vm1565, %v2509, 0.0
    %2514 = vadd.xlane.f32.xlu0 %v2513
    %v2515 = vpop.xlane.xlu0 %2514
    %v2516 = vrcp.pop %v2512
    %v2517 = vrcp.pop %v2515
    %v2518 = vmul.f32 %v2507, %v2516
    %v2519 = vmul.f32 %v2509, %v2517
    %2520 = vrot.lane.b32.xlu0 %v1531, 80
    %v2521 = vpop.permute.xlu0 %2520
    %2522 = vrot.lane.b32.xlu0 %v1537, 80
    %v2523 = vpop.permute.xlu0 %2522
    %v2527 = vsel %vm1565, %v2518, 0
    %v2530 = vsel %vm1565, %v2519, 0
    %2532 = vmatprep.subr.mxu0 0.0
    %2533 = vmatpush1.msra.mxu0 %v2521
    %2534 = vmatprep.subr.mxu0 0.0
    %2535 = vmatpush1.msra.mxu0 %v2523
    %2536 = vmatprep.subr.mxu0 0.0
    %2537 = vmatpush1.msra.mxu0 0.0
    %2538 = vmatprep.subr.mxu0 0.0
    %2539 = vmatpush1.msra.mxu0 0.0
    %2540 = vmatprep.subr.mxu0 0.0
    %2541 = vmatpush1.msra.mxu0 0.0
    %2542 = vmatprep.subr.mxu0 0.0
    %2543 = vmatpush1.msra.mxu0 0.0
    %2544 = vmatprep.subr.mxu0 0.0
    %2545 = vmatpush1.msra.mxu0 0.0
    %2546 = vmatprep.subr.mxu0 0.0
    %2547 = vmatpush1.msra.mxu0 0.0
    %2548 = vmatprep.subr.mxu0 0.0
    %2549 = vmatpush1.msra.mxu0 0.0
    %2550 = vmatprep.subr.mxu0 0.0
    %2551 = vmatpush1.msra.mxu0 0.0
    %2552 = vmatprep.subr.mxu0 0.0
    %2553 = vmatpush1.msra.mxu0 0.0
    %2554 = vmatprep.subr.mxu0 0.0
    %2555 = vmatpush1.msra.mxu0 0.0
    %2556 = vmatprep.subr.mxu0 0.0
    %2557 = vmatpush1.msra.mxu0 0.0
    %2558 = vmatprep.subr.mxu0 0.0
    %2559 = vmatpush1.msra.mxu0 0.0
    %2560 = vmatprep.subr.mxu0 0.0
    %2561 = vmatpush1.msra.mxu0 0.0
    %2562 = vmatprep.subr.mxu0 0.0
    %2563 = vmatpush1.msra.mxu0 0.0
    %2564 = vmatprep.subr.mxu0 0.0
    %2565 = vmatpush1.msra.mxu0 0.0
    %2566 = vmatprep.subr.mxu0 0.0
    %2567 = vmatpush1.msra.mxu0 0.0
    %2568 = vmatprep.subr.mxu0 0.0
    %2569 = vmatpush1.msra.mxu0 0.0
    %2570 = vmatprep.subr.mxu0 0.0
    %2571 = vmatpush1.msra.mxu0 0.0
    %2572 = vmatprep.subr.mxu0 0.0
    %2573 = vmatpush1.msra.mxu0 0.0
    %2574 = vmatprep.subr.mxu0 0.0
    %2575 = vmatpush1.msra.mxu0 0.0
    %2576 = vmatprep.subr.mxu0 0.0
    %2577 = vmatpush1.msra.mxu0 0.0
    %2578 = vmatprep.subr.mxu0 0.0
    %2579 = vmatpush1.msra.mxu0 0.0
    %2580 = vmatprep.subr.mxu0 0.0
    %2581 = vmatpush1.msra.mxu0 0.0
    %2582 = vmatprep.subr.mxu0 0.0
    %2583 = vmatpush1.msra.mxu0 0.0
    %2584 = vmatprep.subr.mxu0 0.0
    %2585 = vmatpush1.msra.mxu0 0.0
    %2586 = vmatprep.subr.mxu0 0.0
    %2587 = vmatpush1.msra.mxu0 0.0
    %2588 = vmatprep.subr.mxu0 0.0
    %2589 = vmatpush1.msra.mxu0 0.0
    %2590 = vmatprep.subr.mxu0 0.0
    %2591 = vmatpush1.msra.mxu0 0.0
    %2592 = vmatprep.subr.mxu0 0.0
    %2593 = vmatpush1.msra.mxu0 0.0
    %2594 = vmatprep.subr.mxu0 0.0
    %2595 = vmatpush1.msra.mxu0 0.0
    %2596 = vmatprep.mubr.f32.mxu0 0.0
    %2597 = vmatmul.mubr.f32.gmra.mrb[0].mxu0 %v2527
    %v2598 = vpop.f32.mrb[0].mxu0
    %v2599 = vadd.f32 0.0, %v2598
    %v2600 = vpop.f32.mrb[0].mxu0
    %2601 = vmatprep.mubr.f32.mxu0 0.0
    %2602 = vmatmul.mubr.f32.gmra.mrb[0].mxu0 %v2530
    %v2603 = vpop.f32.mrb[0].mxu0
    %v2604 = vadd.f32 0.0, %v2603
    %v2605 = vpop.f32.mrb[0].mxu0
    %2606 = vdwg.mxu0
    %v2608 = vsel %vm1565, %v2599, 0
    %v2611 = vsel %vm1565, %v2604, 0
    %2613 = vmatprep.subr.mxu0 0.0
    %2614 = vmatpush1.msra.mxu0 %v1557
    %2615 = vmatprep.subr.mxu0 0.0
    %2616 = vmatpush1.msra.mxu0 %v1558
    %2617 = vmatprep.subr.mxu0 0.0
    %2618 = vmatpush1.msra.mxu0 0.0
    %2619 = vmatprep.subr.mxu0 0.0
    %2620 = vmatpush1.msra.mxu0 0.0
    %2621 = vmatprep.subr.mxu0 0.0
    %2622 = vmatpush1.msra.mxu0 0.0
    %2623 = vmatprep.subr.mxu0 0.0
    %2624 = vmatpush1.msra.mxu0 0.0
    %2625 = vmatprep.subr.mxu0 0.0
    %2626 = vmatpush1.msra.mxu0 0.0
    %2627 = vmatprep.subr.mxu0 0.0
    %2628 = vmatpush1.msra.mxu0 0.0
    %2629 = vmatprep.subr.mxu0 0.0
    %2630 = vmatpush1.msra.mxu0 0.0
    %2631 = vmatprep.subr.mxu0 0.0
    %2632 = vmatpush1.msra.mxu0 0.0
    %2633 = vmatprep.subr.mxu0 0.0
    %2634 = vmatpush1.msra.mxu0 0.0
    %2635 = vmatprep.subr.mxu0 0.0
    %2636 = vmatpush1.msra.mxu0 0.0
    %2637 = vmatprep.subr.mxu0 0.0
    %2638 = vmatpush1.msra.mxu0 0.0
    %2639 = vmatprep.subr.mxu0 0.0
    %2640 = vmatpush1.msra.mxu0 0.0
    %2641 = vmatprep.subr.mxu0 0.0
    %2642 = vmatpush1.msra.mxu0 0.0
    %2643 = vmatprep.subr.mxu0 0.0
    %2644 = vmatpush1.msra.mxu0 0.0
    %2645 = vmatprep.subr.mxu0 0.0
    %2646 = vmatpush1.msra.mxu0 0.0
    %2647 = vmatprep.subr.mxu0 0.0
    %2648 = vmatpush1.msra.mxu0 0.0
    %2649 = vmatprep.subr.mxu0 0.0
    %2650 = vmatpush1.msra.mxu0 0.0
    %2651 = vmatprep.subr.mxu0 0.0
    %2652 = vmatpush1.msra.mxu0 0.0
    %2653 = vmatprep.subr.mxu0 0.0
    %2654 = vmatpush1.msra.mxu0 0.0
    %2655 = vmatprep.subr.mxu0 0.0
    %2656 = vmatpush1.msra.mxu0 0.0
    %2657 = vmatprep.subr.mxu0 0.0
    %2658 = vmatpush1.msra.mxu0 0.0
    %2659 = vmatprep.subr.mxu0 0.0
    %2660 = vmatpush1.msra.mxu0 0.0
    %2661 = vmatprep.subr.mxu0 0.0
    %2662 = vmatpush1.msra.mxu0 0.0
    %2663 = vmatprep.subr.mxu0 0.0
    %2664 = vmatpush1.msra.mxu0 0.0
    %2665 = vmatprep.subr.mxu0 0.0
    %2666 = vmatpush1.msra.mxu0 0.0
    %2667 = vmatprep.subr.mxu0 0.0
    %2668 = vmatpush1.msra.mxu0 0.0
    %2669 = vmatprep.subr.mxu0 0.0
    %2670 = vmatpush1.msra.mxu0 0.0
    %2671 = vmatprep.subr.mxu0 0.0
    %2672 = vmatpush1.msra.mxu0 0.0
    %2673 = vmatprep.subr.mxu0 0.0
    %2674 = vmatpush1.msra.mxu0 0.0
    %2675 = vmatprep.subr.mxu0 0.0
    %2676 = vmatpush1.msra.mxu0 0.0
    %2677 = vmatprep.mubr.f32.mxu0 0.0
    %2678 = vmatmul.mubr.f32.gmra.mrb[0].mxu0 %v2608
    %v2679 = vpop.f32.mrb[0].mxu0
    %v2680 = vadd.f32 0.0, %v2679
    %v2681 = vpop.f32.mrb[0].mxu0
    %2682 = vmatprep.mubr.f32.mxu0 0.0
    %2683 = vmatmul.mubr.f32.gmra.mrb[0].mxu0 %v2611
    %v2684 = vpop.f32.mrb[0].mxu0
    %v2685 = vadd.f32 0.0, %v2684
    %v2686 = vpop.f32.mrb[0].mxu0
    %2687 = vdwg.mxu0
    %v2688 = vadd.f32 %v2403, %v2680
    %v2689 = vadd.f32 %v2404, %v2685
    %2692 = vrot.lane.b32.xlu0 %v1541, 64
    %v2693 = vpop.permute.xlu0 %2692
    %2694 = vrot.lane.b32.xlu0 %v1547, 64
    %v2695 = vpop.permute.xlu0 %2694
    %v2696 = vsel %vm1565, %v1541, 0
    %v2698 = vsel %vm1565, %v1547, 0
    %v2700 = vsel %vm1565, %v2693, 0
    %v2702 = vsel %vm1565, %v2695, 0
    %2704 = vmatprep.subr.mxu0 0.0
    %2705 = vmatpush1.xpose.msra.mxu0 %v2700
    %2706 = vmatprep.subr.mxu0 0.0
    %2707 = vmatpush1.xpose.msra.mxu0 %v2702
    %2708 = vmatprep.subr.mxu0 0.0
    %2709 = vmatpush1.xpose.msra.mxu0 0.0
    %2710 = vmatprep.subr.mxu0 0.0
    %2711 = vmatpush1.xpose.msra.mxu0 0.0
    %2712 = vmatprep.subr.mxu0 0.0
    %2713 = vmatpush1.xpose.msra.mxu0 0.0
    %2714 = vmatprep.subr.mxu0 0.0
    %2715 = vmatpush1.xpose.msra.mxu0 0.0
    %2716 = vmatprep.subr.mxu0 0.0
    %2717 = vmatpush1.xpose.msra.mxu0 0.0
    %2718 = vmatprep.subr.mxu0 0.0
    %2719 = vmatpush1.xpose.msra.mxu0 0.0
    %2720 = vmatprep.subr.mxu0 0.0
    %2721 = vmatpush1.xpose.msra.mxu0 0.0
    %2722 = vmatprep.subr.mxu0 0.0
    %2723 = vmatpush1.xpose.msra.mxu0 0.0
    %2724 = vmatprep.subr.mxu0 0.0
    %2725 = vmatpush1.xpose.msra.mxu0 0.0
    %2726 = vmatprep.subr.mxu0 0.0
    %2727 = vmatpush1.xpose.msra.mxu0 0.0
    %2728 = vmatprep.subr.mxu0 0.0
    %2729 = vmatpush1.xpose.msra.mxu0 0.0
    %2730 = vmatprep.subr.mxu0 0.0
    %2731 = vmatpush1.xpose.msra.mxu0 0.0
    %2732 = vmatprep.subr.mxu0 0.0
    %2733 = vmatpush1.xpose.msra.mxu0 0.0
    %2734 = vmatprep.subr.mxu0 0.0
    %2735 = vmatpush1.xpose.msra.mxu0 0.0
    %2736 = vmatprep.subr.mxu0 0.0
    %2737 = vmatpush1.xpose.msra.mxu0 0.0
    %2738 = vmatprep.subr.mxu0 0.0
    %2739 = vmatpush1.xpose.msra.mxu0 0.0
    %2740 = vmatprep.subr.mxu0 0.0
    %2741 = vmatpush1.xpose.msra.mxu0 0.0
    %2742 = vmatprep.subr.mxu0 0.0
    %2743 = vmatpush1.xpose.msra.mxu0 0.0
    %2744 = vmatprep.subr.mxu0 0.0
    %2745 = vmatpush1.xpose.msra.mxu0 0.0
    %2746 = vmatprep.subr.mxu0 0.0
    %2747 = vmatpush1.xpose.msra.mxu0 0.0
    %2748 = vmatprep.subr.mxu0 0.0
    %2749 = vmatpush1.xpose.msra.mxu0 0.0
    %2750 = vmatprep.subr.mxu0 0.0
    %2751 = vmatpush1.xpose.msra.mxu0 0.0
    %2752 = vmatprep.subr.mxu0 0.0
    %2753 = vmatpush1.xpose.msra.mxu0 0.0
    %2754 = vmatprep.subr.mxu0 0.0
    %2755 = vmatpush1.xpose.msra.mxu0 0.0
    %2756 = vmatprep.subr.mxu0 0.0
    %2757 = vmatpush1.xpose.msra.mxu0 0.0
    %2758 = vmatprep.subr.mxu0 0.0
    %2759 = vmatpush1.xpose.msra.mxu0 0.0
    %2760 = vmatprep.subr.mxu0 0.0
    %2761 = vmatpush1.xpose.msra.mxu0 0.0
    %2762 = vmatprep.subr.mxu0 0.0
    %2763 = vmatpush1.xpose.msra.mxu0 0.0
    %2764 = vmatprep.subr.mxu0 0.0
    %2765 = vmatpush1.xpose.msra.mxu0 0.0
    %2766 = vmatprep.subr.mxu0 0.0
    %2767 = vmatpush1.xpose.msra.mxu0 0.0
    %2768 = vmatprep.mubr.f32.mxu0 0.0
    %2769 = vmatmul.mubr.f32.gmra.mrb[0].mxu0 %v2696
    %v2770 = vpop.f32.mrb[0].mxu0
    %v2771 = vadd.f32 0.0, %v2770
    %v2772 = vpop.f32.mrb[0].mxu0
    %2773 = vmatprep.mubr.f32.mxu0 0.0
    %2774 = vmatmul.mubr.f32.gmra.mrb[0].mxu0 %v2698
    %v2775 = vpop.f32.mrb[0].mxu0
    %v2776 = vadd.f32 0.0, %v2775
    %v2777 = vpop.f32.mrb[0].mxu0
    %2778 = vdwg.mxu0
    %v2779 = vmul.f32 %v2771, 0.25
    %v2780 = vmul.f32 %v2776, 0.25
    %v2781 = vsel %vm1565, %v2779, -inf
    %2782 = vmax.xlane.f32.xlu0 %v2781
    %v2783 = vpop.xlane.xlu0 %2782
    %v2784 = vsel %vm1565, %v2780, -inf
    %2785 = vmax.xlane.f32.xlu0 %v2784
    %v2786 = vpop.xlane.xlu0 %2785
    %v2787 = vsub.f32 %v2779, %v2783
    %v2788 = vsub.f32 %v2780, %v2786
    %v2789 = vmul.f32 %v2787, 1.442695
    %v2790 = vpow.pop %v2789
    %v2791 = vmul.f32 %v2788, 1.442695
    %v2792 = vpow.pop %v2791
    %v2793 = vsel %vm1565, %v2790, 0.0
    %2794 = vadd.xlane.f32.xlu0 %v2793
    %v2795 = vpop.xlane.xlu0 %2794
    %v2796 = vsel %vm1565, %v2792, 0.0
    %2797 = vadd.xlane.f32.xlu0 %v2796
    %v2798 = vpop.xlane.xlu0 %2797
    %v2799 = vrcp.pop %v2795
    %v2800 = vrcp.pop %v2798
    %v2801 = vmul.f32 %v2790, %v2799
    %v2802 = vmul.f32 %v2792, %v2800
    %v2804 = vsel %vm1565, %v2801, 0
    %v2807 = vsel %vm1565, %v2802, 0
    %2809 = vmatprep.subr.mxu0 0.0
    %2810 = vmatpush1.msra.mxu0 %v1543
    %2811 = vmatprep.subr.mxu0 0.0
    %2812 = vmatpush1.msra.mxu0 %v1549
    %2813 = vmatprep.subr.mxu0 0.0
    %2814 = vmatpush1.msra.mxu0 0.0
    %2815 = vmatprep.subr.mxu0 0.0
    %2816 = vmatpush1.msra.mxu0 0.0
    %2817 = vmatprep.subr.mxu0 0.0
    %2818 = vmatpush1.msra.mxu0 0.0
    %2819 = vmatprep.subr.mxu0 0.0
    %2820 = vmatpush1.msra.mxu0 0.0
    %2821 = vmatprep.subr.mxu0 0.0
    %2822 = vmatpush1.msra.mxu0 0.0
    %2823 = vmatprep.subr.mxu0 0.0
    %2824 = vmatpush1.msra.mxu0 0.0
    %2825 = vmatprep.subr.mxu0 0.0
    %2826 = vmatpush1.msra.mxu0 0.0
    %2827 = vmatprep.subr.mxu0 0.0
    %2828 = vmatpush1.msra.mxu0 0.0
    %2829 = vmatprep.subr.mxu0 0.0
    %2830 = vmatpush1.msra.mxu0 0.0
    %2831 = vmatprep.subr.mxu0 0.0
    %2832 = vmatpush1.msra.mxu0 0.0
    %2833 = vmatprep.subr.mxu0 0.0
    %2834 = vmatpush1.msra.mxu0 0.0
    %2835 = vmatprep.subr.mxu0 0.0
    %2836 = vmatpush1.msra.mxu0 0.0
    %2837 = vmatprep.subr.mxu0 0.0
    %2838 = vmatpush1.msra.mxu0 0.0
    %2839 = vmatprep.subr.mxu0 0.0
    %2840 = vmatpush1.msra.mxu0 0.0
    %2841 = vmatprep.subr.mxu0 0.0
    %2842 = vmatpush1.msra.mxu0 0.0
    %2843 = vmatprep.subr.mxu0 0.0
    %2844 = vmatpush1.msra.mxu0 0.0
    %2845 = vmatprep.subr.mxu0 0.0
    %2846 = vmatpush1.msra.mxu0 0.0
    %2847 = vmatprep.subr.mxu0 0.0
    %2848 = vmatpush1.msra.mxu0 0.0
    %2849 = vmatprep.subr.mxu0 0.0
    %2850 = vmatpush1.msra.mxu0 0.0
    %2851 = vmatprep.subr.mxu0 0.0
    %2852 = vmatpush1.msra.mxu0 0.0
    %2853 = vmatprep.subr.mxu0 0.0
    %2854 = vmatpush1.msra.mxu0 0.0
    %2855 = vmatprep.subr.mxu0 0.0
    %2856 = vmatpush1.msra.mxu0 0.0
    %2857 = vmatprep.subr.mxu0 0.0
    %2858 = vmatpush1.msra.mxu0 0.0
    %2859 = vmatprep.subr.mxu0 0.0
    %2860 = vmatpush1.msra.mxu0 0.0
    %2861 = vmatprep.subr.mxu0 0.0
    %2862 = vmatpush1.msra.mxu0 0.0
    %2863 = vmatprep.subr.mxu0 0.0
    %2864 = vmatpush1.msra.mxu0 0.0
    %2865 = vmatprep.subr.mxu0 0.0
    %2866 = vmatpush1.msra.mxu0 0.0
    %2867 = vmatprep.subr.mxu0 0.0
    %2868 = vmatpush1.msra.mxu0 0.0
    %2869 = vmatprep.subr.mxu0 0.0
    %2870 = vmatpush1.msra.mxu0 0.0
    %2871 = vmatprep.subr.mxu0 0.0
    %2872 = vmatpush1.msra.mxu0 0.0
    %2873 = vmatprep.mubr.f32.mxu0 0.0
    %2874 = vmatmul.mubr.f32.gmra.mrb[0].mxu0 %v2804
    %v2875 = vpop.f32.mrb[0].mxu0
    %v2876 = vadd.f32 0.0, %v2875
    %v2877 = vpop.f32.mrb[0].mxu0
    %2878 = vmatprep.mubr.f32.mxu0 0.0
    %2879 = vmatmul.mubr.f32.gmra.mrb[0].mxu0 %v2807
    %v2880 = vpop.f32.mrb[0].mxu0
    %v2881 = vadd.f32 0.0, %v2880
    %v2882 = vpop.f32.mrb[0].mxu0
    %2883 = vdwg.mxu0
    %2884 = vrot.lane.b32.xlu0 %v1541, 112
    %v2885 = vpop.permute.xlu0 %2884
    %2886 = vrot.lane.b32.xlu0 %v1547, 112
    %v2887 = vpop.permute.xlu0 %2886
    %2888 = vrot.lane.b32.xlu0 %v1541, 48
    %v2889 = vpop.permute.xlu0 %2888
    %2890 = vrot.lane.b32.xlu0 %v1547, 48
    %v2891 = vpop.permute.xlu0 %2890
    %v2892 = vsel %vm1565, %v2885, 0
    %v2894 = vsel %vm1565, %v2887, 0
    %v2896 = vsel %vm1565, %v2889, 0
    %v2898 = vsel %vm1565, %v2891, 0
    %2900 = vmatprep.subr.mxu0 0.0
    %2901 = vmatpush1.xpose.msra.mxu0 %v2896
    %2902 = vmatprep.subr.mxu0 0.0
    %2903 = vmatpush1.xpose.msra.mxu0 %v2898
    %2904 = vmatprep.subr.mxu0 0.0
    %2905 = vmatpush1.xpose.msra.mxu0 0.0
    %2906 = vmatprep.subr.mxu0 0.0
    %2907 = vmatpush1.xpose.msra.mxu0 0.0
    %2908 = vmatprep.subr.mxu0 0.0
    %2909 = vmatpush1.xpose.msra.mxu0 0.0
    %2910 = vmatprep.subr.mxu0 0.0
    %2911 = vmatpush1.xpose.msra.mxu0 0.0
    %2912 = vmatprep.subr.mxu0 0.0
    %2913 = vmatpush1.xpose.msra.mxu0 0.0
    %2914 = vmatprep.subr.mxu0 0.0
    %2915 = vmatpush1.xpose.msra.mxu0 0.0
    %2916 = vmatprep.subr.mxu0 0.0
    %2917 = vmatpush1.xpose.msra.mxu0 0.0
    %2918 = vmatprep.subr.mxu0 0.0
    %2919 = vmatpush1.xpose.msra.mxu0 0.0
    %2920 = vmatprep.subr.mxu0 0.0
    %2921 = vmatpush1.xpose.msra.mxu0 0.0
    %2922 = vmatprep.subr.mxu0 0.0
    %2923 = vmatpush1.xpose.msra.mxu0 0.0
    %2924 = vmatprep.subr.mxu0 0.0
    %2925 = vmatpush1.xpose.msra.mxu0 0.0
    %2926 = vmatprep.subr.mxu0 0.0
    %2927 = vmatpush1.xpose.msra.mxu0 0.0
    %2928 = vmatprep.subr.mxu0 0.0
    %2929 = vmatpush1.xpose.msra.mxu0 0.0
    %2930 = vmatprep.subr.mxu0 0.0
    %2931 = vmatpush1.xpose.msra.mxu0 0.0
    %2932 = vmatprep.subr.mxu0 0.0
    %2933 = vmatpush1.xpose.msra.mxu0 0.0
    %2934 = vmatprep.subr.mxu0 0.0
    %2935 = vmatpush1.xpose.msra.mxu0 0.0
    %2936 = vmatprep.subr.mxu0 0.0
    %2937 = vmatpush1.xpose.msra.mxu0 0.0
    %2938 = vmatprep.subr.mxu0 0.0
    %2939 = vmatpush1.xpose.msra.mxu0 0.0
    %2940 = vmatprep.subr.mxu0 0.0
    %2941 = vmatpush1.xpose.msra.mxu0 0.0
    %2942 = vmatprep.subr.mxu0 0.0
    %2943 = vmatpush1.xpose.msra.mxu0 0.0
    %2944 = vmatprep.subr.mxu0 0.0
    %2945 = vmatpush1.xpose.msra.mxu0 0.0
    %2946 = vmatprep.subr.mxu0 0.0
    %2947 = vmatpush1.xpose.msra.mxu0 0.0
    %2948 = vmatprep.subr.mxu0 0.0
    %2949 = vmatpush1.xpose.msra.mxu0 0.0
    %2950 = vmatprep.subr.mxu0 0.0
    %2951 = vmatpush1.xpose.msra.mxu0 0.0
    %2952 = vmatprep.subr.mxu0 0.0
    %2953 = vmatpush1.xpose.msra.mxu0 0.0
    %2954 = vmatprep.subr.mxu0 0.0
    %2955 = vmatpush1.xpose.msra.mxu0 0.0
    %2956 = vmatprep.subr.mxu0 0.0
    %2957 = vmatpush1.xpose.msra.mxu0 0.0
    %2958 = vmatprep.subr.mxu0 0.0
    %2959 = vmatpush1.xpose.msra.mxu0 0.0
    %2960 = vmatprep.subr.mxu0 0.0
    %2961 = vmatpush1.xpose.msra.mxu0 0.0
    %2962 = vmatprep.subr.mxu0 0.0
    %2963 = vmatpush1.xpose.msra.mxu0 0.0
    %2964 = vmatprep.mubr.f32.mxu0 0.0
    %2965 = vmatmul.mubr.f32.gmra.mrb[0].mxu0 %v2892
    %v2966 = vpop.f32.mrb[0].mxu0
    %v2967 = vadd.f32 0.0, %v2966
    %v2968 = vpop.f32.mrb[0].mxu0
    %2969 = vmatprep.mubr.f32.mxu0 0.0
    %2970 = vmatmul.mubr.f32.gmra.mrb[0].mxu0 %v2894
    %v2971 = vpop.f32.mrb[0].mxu0
    %v2972 = vadd.f32 0.0, %v2971
    %v2973 = vpop.f32.mrb[0].mxu0
    %2974 = vdwg.mxu0
    %v2975 = vmul.f32 %v2967, 0.25
    %v2976 = vmul.f32 %v2972, 0.25
    %v2977 = vsel %vm1565, %v2975, -inf
    %2978 = vmax.xlane.f32.xlu0 %v2977
    %v2979 = vpop.xlane.xlu0 %2978
    %v2980 = vsel %vm1565, %v2976, -inf
    %2981 = vmax.xlane.f32.xlu0 %v2980
    %v2982 = vpop.xlane.xlu0 %2981
    %v2983 = vsub.f32 %v2975, %v2979
    %v2984 = vsub.f32 %v2976, %v2982
    %v2985 = vmul.f32 %v2983, 1.442695
    %v2986 = vpow.pop %v2985
    %v2987 = vmul.f32 %v2984, 1.442695
    %v2988 = vpow.pop %v2987
    %v2989 = vsel %vm1565, %v2986, 0.0
    %2990 = vadd.xlane.f32.xlu0 %v2989
    %v2991 = vpop.xlane.xlu0 %2990
    %v2992 = vsel %vm1565, %v2988, 0.0
    %2993 = vadd.xlane.f32.xlu0 %v2992
    %v2994 = vpop.xlane.xlu0 %2993
    %v2995 = vrcp.pop %v2991
    %v2996 = vrcp.pop %v2994
    %v2997 = vmul.f32 %v2986, %v2995
    %v2998 = vmul.f32 %v2988, %v2996
    %3001 = vrot.lane.b32.xlu0 %v1543, 112
    %v3002 = vpop.permute.xlu0 %3001
    %3003 = vrot.lane.b32.xlu0 %v1549, 112
    %v3004 = vpop.permute.xlu0 %3003
    %v3008 = vsel %vm1565, %v2997, 0
    %v3011 = vsel %vm1565, %v2998, 0
    %3013 = vmatprep.subr.mxu0 0.0
    %3014 = vmatpush1.msra.mxu0 %v3002
    %3015 = vmatprep.subr.mxu0 0.0
    %3016 = vmatpush1.msra.mxu0 %v3004
    %3017 = vmatprep.subr.mxu0 0.0
    %3018 = vmatpush1.msra.mxu0 0.0
    %3019 = vmatprep.subr.mxu0 0.0
    %3020 = vmatpush1.msra.mxu0 0.0
    %3021 = vmatprep.subr.mxu0 0.0
    %3022 = vmatpush1.msra.mxu0 0.0
    %3023 = vmatprep.subr.mxu0 0.0
    %3024 = vmatpush1.msra.mxu0 0.0
    %3025 = vmatprep.subr.mxu0 0.0
    %3026 = vmatpush1.msra.mxu0 0.0
    %3027 = vmatprep.subr.mxu0 0.0
    %3028 = vmatpush1.msra.mxu0 0.0
    %3029 = vmatprep.subr.mxu0 0.0
    %3030 = vmatpush1.msra.mxu0 0.0
    %3031 = vmatprep.subr.mxu0 0.0
    %3032 = vmatpush1.msra.mxu0 0.0
    %3033 = vmatprep.subr.mxu0 0.0
    %3034 = vmatpush1.msra.mxu0 0.0
    %3035 = vmatprep.subr.mxu0 0.0
    %3036 = vmatpush1.msra.mxu0 0.0
    %3037 = vmatprep.subr.mxu0 0.0
    %3038 = vmatpush1.msra.mxu0 0.0
    %3039 = vmatprep.subr.mxu0 0.0
    %3040 = vmatpush1.msra.mxu0 0.0
    %3041 = vmatprep.subr.mxu0 0.0
    %3042 = vmatpush1.msra.mxu0 0.0
    %3043 = vmatprep.subr.mxu0 0.0
    %3044 = vmatpush1.msra.mxu0 0.0
    %3045 = vmatprep.subr.mxu0 0.0
    %3046 = vmatpush1.msra.mxu0 0.0
    %3047 = vmatprep.subr.mxu0 0.0
    %3048 = vmatpush1.msra.mxu0 0.0
    %3049 = vmatprep.subr.mxu0 0.0
    %3050 = vmatpush1.msra.mxu0 0.0
    %3051 = vmatprep.subr.mxu0 0.0
    %3052 = vmatpush1.msra.mxu0 0.0
    %3053 = vmatprep.subr.mxu0 0.0
    %3054 = vmatpush1.msra.mxu0 0.0
    %3055 = vmatprep.subr.mxu0 0.0
    %3056 = vmatpush1.msra.mxu0 0.0
    %3057 = vmatprep.subr.mxu0 0.0
    %3058 = vmatpush1.msra.mxu0 0.0
    %3059 = vmatprep.subr.mxu0 0.0
    %3060 = vmatpush1.msra.mxu0 0.0
    %3061 = vmatprep.subr.mxu0 0.0
    %3062 = vmatpush1.msra.mxu0 0.0
    %3063 = vmatprep.subr.mxu0 0.0
    %3064 = vmatpush1.msra.mxu0 0.0
    %3065 = vmatprep.subr.mxu0 0.0
    %3066 = vmatpush1.msra.mxu0 0.0
    %3067 = vmatprep.subr.mxu0 0.0
    %3068 = vmatpush1.msra.mxu0 0.0
    %3069 = vmatprep.subr.mxu0 0.0
    %3070 = vmatpush1.msra.mxu0 0.0
    %3071 = vmatprep.subr.mxu0 0.0
    %3072 = vmatpush1.msra.mxu0 0.0
    %3073 = vmatprep.subr.mxu0 0.0
    %3074 = vmatpush1.msra.mxu0 0.0
    %3075 = vmatprep.subr.mxu0 0.0
    %3076 = vmatpush1.msra.mxu0 0.0
    %3077 = vmatprep.mubr.f32.mxu0 0.0
    %3078 = vmatmul.mubr.f32.gmra.mrb[0].mxu0 %v3008
    %v3079 = vpop.f32.mrb[0].mxu0
    %v3080 = vadd.f32 0.0, %v3079
    %v3081 = vpop.f32.mrb[0].mxu0
    %3082 = vmatprep.mubr.f32.mxu0 0.0
    %3083 = vmatmul.mubr.f32.gmra.mrb[0].mxu0 %v3011
    %v3084 = vpop.f32.mrb[0].mxu0
    %v3085 = vadd.f32 0.0, %v3084
    %v3086 = vpop.f32.mrb[0].mxu0
    %3087 = vdwg.mxu0
    %v3089 = vsel %vm1565, %v3080, 0
    %v3092 = vsel %vm1565, %v3085, 0
    %3094 = vmatprep.subr.mxu0 0.0
    %3095 = vmatpush1.msra.mxu0 %v1553
    %3096 = vmatprep.subr.mxu0 0.0
    %3097 = vmatpush1.msra.mxu0 %v1554
    %3098 = vmatprep.subr.mxu0 0.0
    %3099 = vmatpush1.msra.mxu0 0.0
    %3100 = vmatprep.subr.mxu0 0.0
    %3101 = vmatpush1.msra.mxu0 0.0
    %3102 = vmatprep.subr.mxu0 0.0
    %3103 = vmatpush1.msra.mxu0 0.0
    %3104 = vmatprep.subr.mxu0 0.0
    %3105 = vmatpush1.msra.mxu0 0.0
    %3106 = vmatprep.subr.mxu0 0.0
    %3107 = vmatpush1.msra.mxu0 0.0
    %3108 = vmatprep.subr.mxu0 0.0
    %3109 = vmatpush1.msra.mxu0 0.0
    %3110 = vmatprep.subr.mxu0 0.0
    %3111 = vmatpush1.msra.mxu0 0.0
    %3112 = vmatprep.subr.mxu0 0.0
    %3113 = vmatpush1.msra.mxu0 0.0
    %3114 = vmatprep.subr.mxu0 0.0
    %3115 = vmatpush1.msra.mxu0 0.0
    %3116 = vmatprep.subr.mxu0 0.0
    %3117 = vmatpush1.msra.mxu0 0.0
    %3118 = vmatprep.subr.mxu0 0.0
    %3119 = vmatpush1.msra.mxu0 0.0
    %3120 = vmatprep.subr.mxu0 0.0
    %3121 = vmatpush1.msra.mxu0 0.0
    %3122 = vmatprep.subr.mxu0 0.0
    %3123 = vmatpush1.msra.mxu0 0.0
    %3124 = vmatprep.subr.mxu0 0.0
    %3125 = vmatpush1.msra.mxu0 0.0
    %3126 = vmatprep.subr.mxu0 0.0
    %3127 = vmatpush1.msra.mxu0 0.0
    %3128 = vmatprep.subr.mxu0 0.0
    %3129 = vmatpush1.msra.mxu0 0.0
    %3130 = vmatprep.subr.mxu0 0.0
    %3131 = vmatpush1.msra.mxu0 0.0
    %3132 = vmatprep.subr.mxu0 0.0
    %3133 = vmatpush1.msra.mxu0 0.0
    %3134 = vmatprep.subr.mxu0 0.0
    %3135 = vmatpush1.msra.mxu0 0.0
    %3136 = vmatprep.subr.mxu0 0.0
    %3137 = vmatpush1.msra.mxu0 0.0
    %3138 = vmatprep.subr.mxu0 0.0
    %3139 = vmatpush1.msra.mxu0 0.0
    %3140 = vmatprep.subr.mxu0 0.0
    %3141 = vmatpush1.msra.mxu0 0.0
    %3142 = vmatprep.subr.mxu0 0.0
    %3143 = vmatpush1.msra.mxu0 0.0
    %3144 = vmatprep.subr.mxu0 0.0
    %3145 = vmatpush1.msra.mxu0 0.0
    %3146 = vmatprep.subr.mxu0 0.0
    %3147 = vmatpush1.msra.mxu0 0.0
    %3148 = vmatprep.subr.mxu0 0.0
    %3149 = vmatpush1.msra.mxu0 0.0
    %3150 = vmatprep.subr.mxu0 0.0
    %3151 = vmatpush1.msra.mxu0 0.0
    %3152 = vmatprep.subr.mxu0 0.0
    %3153 = vmatpush1.msra.mxu0 0.0
    %3154 = vmatprep.subr.mxu0 0.0
    %3155 = vmatpush1.msra.mxu0 0.0
    %3156 = vmatprep.subr.mxu0 0.0
    %3157 = vmatpush1.msra.mxu0 0.0
    %3158 = vmatprep.mubr.f32.mxu0 0.0
    %3159 = vmatmul.mubr.f32.gmra.mrb[0].mxu0 %v3089
    %v3160 = vpop.f32.mrb[0].mxu0
    %v3161 = vadd.f32 0.0, %v3160
    %v3162 = vpop.f32.mrb[0].mxu0
    %3163 = vmatprep.mubr.f32.mxu0 0.0
    %3164 = vmatmul.mubr.f32.gmra.mrb[0].mxu0 %v3092
    %v3165 = vpop.f32.mrb[0].mxu0
    %v3166 = vadd.f32 0.0, %v3165
    %v3167 = vpop.f32.mrb[0].mxu0
    %3168 = vdwg.mxu0
    %v3170 = vsel %vm1565, %v2876, 0
    %v3173 = vsel %vm1565, %v2881, 0
    %3175 = vmatprep.subr.mxu0 0.0
    %3176 = vmatpush1.msra.mxu0 %v1551
    %3177 = vmatprep.subr.mxu0 0.0
    %3178 = vmatpush1.msra.mxu0 %v1552
    %3179 = vmatprep.subr.mxu0 0.0
    %3180 = vmatpush1.msra.mxu0 0.0
    %3181 = vmatprep.subr.mxu0 0.0
    %3182 = vmatpush1.msra.mxu0 0.0
    %3183 = vmatprep.subr.mxu0 0.0
    %3184 = vmatpush1.msra.mxu0 0.0
    %3185 = vmatprep.subr.mxu0 0.0
    %3186 = vmatpush1.msra.mxu0 0.0
    %3187 = vmatprep.subr.mxu0 0.0
    %3188 = vmatpush1.msra.mxu0 0.0
    %3189 = vmatprep.subr.mxu0 0.0
    %3190 = vmatpush1.msra.mxu0 0.0
    %3191 = vmatprep.subr.mxu0 0.0
    %3192 = vmatpush1.msra.mxu0 0.0
    %3193 = vmatprep.subr.mxu0 0.0
    %3194 = vmatpush1.msra.mxu0 0.0
    %3195 = vmatprep.subr.mxu0 0.0
    %3196 = vmatpush1.msra.mxu0 0.0
    %3197 = vmatprep.subr.mxu0 0.0
    %3198 = vmatpush1.msra.mxu0 0.0
    %3199 = vmatprep.subr.mxu0 0.0
    %3200 = vmatpush1.msra.mxu0 0.0
    %3201 = vmatprep.subr.mxu0 0.0
    %3202 = vmatpush1.msra.mxu0 0.0
    %3203 = vmatprep.subr.mxu0 0.0
    %3204 = vmatpush1.msra.mxu0 0.0
    %3205 = vmatprep.subr.mxu0 0.0
    %3206 = vmatpush1.msra.mxu0 0.0
    %3207 = vmatprep.subr.mxu0 0.0
    %3208 = vmatpush1.msra.mxu0 0.0
    %3209 = vmatprep.subr.mxu0 0.0
    %3210 = vmatpush1.msra.mxu0 0.0
    %3211 = vmatprep.subr.mxu0 0.0
    %3212 = vmatpush1.msra.mxu0 0.0
    %3213 = vmatprep.subr.mxu0 0.0
    %3214 = vmatpush1.msra.mxu0 0.0
    %3215 = vmatprep.subr.mxu0 0.0
    %3216 = vmatpush1.msra.mxu0 0.0
    %3217 = vmatprep.subr.mxu0 0.0
    %3218 = vmatpush1.msra.mxu0 0.0
    %3219 = vmatprep.subr.mxu0 0.0
    %3220 = vmatpush1.msra.mxu0 0.0
    %3221 = vmatprep.subr.mxu0 0.0
    %3222 = vmatpush1.msra.mxu0 0.0
    %3223 = vmatprep.subr.mxu0 0.0
    %3224 = vmatpush1.msra.mxu0 0.0
    %3225 = vmatprep.subr.mxu0 0.0
    %3226 = vmatpush1.msra.mxu0 0.0
    %3227 = vmatprep.subr.mxu0 0.0
    %3228 = vmatpush1.msra.mxu0 0.0
    %3229 = vmatprep.subr.mxu0 0.0
    %3230 = vmatpush1.msra.mxu0 0.0
    %3231 = vmatprep.subr.mxu0 0.0
    %3232 = vmatpush1.msra.mxu0 0.0
    %3233 = vmatprep.subr.mxu0 0.0
    %3234 = vmatpush1.msra.mxu0 0.0
    %3235 = vmatprep.subr.mxu0 0.0
    %3236 = vmatpush1.msra.mxu0 0.0
    %3237 = vmatprep.subr.mxu0 0.0
    %3238 = vmatpush1.msra.mxu0 0.0
    %3239 = vmatprep.mubr.f32.mxu0 0.0
    %3240 = vmatmul.mubr.f32.gmra.mrb[0].mxu0 %v3170
    %v3241 = vpop.f32.mrb[0].mxu0
    %v3242 = vadd.f32 %v3161, %v3241
    %v3243 = vpop.f32.mrb[0].mxu0
    %3244 = vmatprep.mubr.f32.mxu0 0.0
    %3245 = vmatmul.mubr.f32.gmra.mrb[0].mxu0 %v3173
    %v3246 = vpop.f32.mrb[0].mxu0
    %v3247 = vadd.f32 %v3166, %v3246
    %v3248 = vpop.f32.mrb[0].mxu0
    %3249 = vdwg.mxu0
    %3250 = vrot.lane.b32.xlu0 %v1541, 96
    %v3251 = vpop.permute.xlu0 %3250
    %3252 = vrot.lane.b32.xlu0 %v1547, 96
    %v3253 = vpop.permute.xlu0 %3252
    %3254 = vrot.lane.b32.xlu0 %v1541, 32
    %v3255 = vpop.permute.xlu0 %3254
    %3256 = vrot.lane.b32.xlu0 %v1547, 32
    %v3257 = vpop.permute.xlu0 %3256
    %v3258 = vsel %vm1565, %v3251, 0
    %v3260 = vsel %vm1565, %v3253, 0
    %v3262 = vsel %vm1565, %v3255, 0
    %v3264 = vsel %vm1565, %v3257, 0
    %3266 = vmatprep.subr.mxu0 0.0
    %3267 = vmatpush1.xpose.msra.mxu0 %v3262
    %3268 = vmatprep.subr.mxu0 0.0
    %3269 = vmatpush1.xpose.msra.mxu0 %v3264
    %3270 = vmatprep.subr.mxu0 0.0
    %3271 = vmatpush1.xpose.msra.mxu0 0.0
    %3272 = vmatprep.subr.mxu0 0.0
    %3273 = vmatpush1.xpose.msra.mxu0 0.0
    %3274 = vmatprep.subr.mxu0 0.0
    %3275 = vmatpush1.xpose.msra.mxu0 0.0
    %3276 = vmatprep.subr.mxu0 0.0
    %3277 = vmatpush1.xpose.msra.mxu0 0.0
    %3278 = vmatprep.subr.mxu0 0.0
    %3279 = vmatpush1.xpose.msra.mxu0 0.0
    %3280 = vmatprep.subr.mxu0 0.0
    %3281 = vmatpush1.xpose.msra.mxu0 0.0
    %3282 = vmatprep.subr.mxu0 0.0
    %3283 = vmatpush1.xpose.msra.mxu0 0.0
    %3284 = vmatprep.subr.mxu0 0.0
    %3285 = vmatpush1.xpose.msra.mxu0 0.0
    %3286 = vmatprep.subr.mxu0 0.0
    %3287 = vmatpush1.xpose.msra.mxu0 0.0
    %3288 = vmatprep.subr.mxu0 0.0
    %3289 = vmatpush1.xpose.msra.mxu0 0.0
    %3290 = vmatprep.subr.mxu0 0.0
    %3291 = vmatpush1.xpose.msra.mxu0 0.0
    %3292 = vmatprep.subr.mxu0 0.0
    %3293 = vmatpush1.xpose.msra.mxu0 0.0
    %3294 = vmatprep.subr.mxu0 0.0
    %3295 = vmatpush1.xpose.msra.mxu0 0.0
    %3296 = vmatprep.subr.mxu0 0.0
    %3297 = vmatpush1.xpose.msra.mxu0 0.0
    %3298 = vmatprep.subr.mxu0 0.0
    %3299 = vmatpush1.xpose.msra.mxu0 0.0
    %3300 = vmatprep.subr.mxu0 0.0
    %3301 = vmatpush1.xpose.msra.mxu0 0.0
    %3302 = vmatprep.subr.mxu0 0.0
    %3303 = vmatpush1.xpose.msra.mxu0 0.0
    %3304 = vmatprep.subr.mxu0 0.0
    %3305 = vmatpush1.xpose.msra.mxu0 0.0
    %3306 = vmatprep.subr.mxu0 0.0
    %3307 = vmatpush1.xpose.msra.mxu0 0.0
    %3308 = vmatprep.subr.mxu0 0.0
    %3309 = vmatpush1.xpose.msra.mxu0 0.0
    %3310 = vmatprep.subr.mxu0 0.0
    %3311 = vmatpush1.xpose.msra.mxu0 0.0
    %3312 = vmatprep.subr.mxu0 0.0
    %3313 = vmatpush1.xpose.msra.mxu0 0.0
    %3314 = vmatprep.subr.mxu0 0.0
    %3315 = vmatpush1.xpose.msra.mxu0 0.0
    %3316 = vmatprep.subr.mxu0 0.0
    %3317 = vmatpush1.xpose.msra.mxu0 0.0
    %3318 = vmatprep.subr.mxu0 0.0
    %3319 = vmatpush1.xpose.msra.mxu0 0.0
    %3320 = vmatprep.subr.mxu0 0.0
    %3321 = vmatpush1.xpose.msra.mxu0 0.0
    %3322 = vmatprep.subr.mxu0 0.0
    %3323 = vmatpush1.xpose.msra.mxu0 0.0
    %3324 = vmatprep.subr.mxu0 0.0
    %3325 = vmatpush1.xpose.msra.mxu0 0.0
    %3326 = vmatprep.subr.mxu0 0.0
    %3327 = vmatpush1.xpose.msra.mxu0 0.0
    %3328 = vmatprep.subr.mxu0 0.0
    %3329 = vmatpush1.xpose.msra.mxu0 0.0
    %3330 = vmatprep.mubr.f32.mxu0 0.0
    %3331 = vmatmul.mubr.f32.gmra.mrb[0].mxu0 %v3258
    %v3332 = vpop.f32.mrb[0].mxu0
    %v3333 = vadd.f32 0.0, %v3332
    %v3334 = vpop.f32.mrb[0].mxu0
    %3335 = vmatprep.mubr.f32.mxu0 0.0
    %3336 = vmatmul.mubr.f32.gmra.mrb[0].mxu0 %v3260
    %v3337 = vpop.f32.mrb[0].mxu0
    %v3338 = vadd.f32 0.0, %v3337
    %v3339 = vpop.f32.mrb[0].mxu0
    %3340 = vdwg.mxu0
    %v3341 = vmul.f32 %v3333, 0.25
    %v3342 = vmul.f32 %v3338, 0.25
    %v3343 = vsel %vm1565, %v3341, -inf
    %3344 = vmax.xlane.f32.xlu0 %v3343
    %v3345 = vpop.xlane.xlu0 %3344
    %v3346 = vsel %vm1565, %v3342, -inf
    %3347 = vmax.xlane.f32.xlu0 %v3346
    %v3348 = vpop.xlane.xlu0 %3347
    %v3349 = vsub.f32 %v3341, %v3345
    %v3350 = vsub.f32 %v3342, %v3348
    %v3351 = vmul.f32 %v3349, 1.442695
    %v3352 = vpow.pop %v3351
    %v3353 = vmul.f32 %v3350, 1.442695
    %v3354 = vpow.pop %v3353
    %v3355 = vsel %vm1565, %v3352, 0.0
    %3356 = vadd.xlane.f32.xlu0 %v3355
    %v3357 = vpop.xlane.xlu0 %3356
    %v3358 = vsel %vm1565, %v3354, 0.0
    %3359 = vadd.xlane.f32.xlu0 %v3358
    %v3360 = vpop.xlane.xlu0 %3359
    %v3361 = vrcp.pop %v3357
    %v3362 = vrcp.pop %v3360
    %v3363 = vmul.f32 %v3352, %v3361
    %v3364 = vmul.f32 %v3354, %v3362
    %3365 = vrot.lane.b32.xlu0 %v1543, 96
    %v3366 = vpop.permute.xlu0 %3365
    %3367 = vrot.lane.b32.xlu0 %v1549, 96
    %v3368 = vpop.permute.xlu0 %3367
    %v3372 = vsel %vm1565, %v3363, 0
    %v3375 = vsel %vm1565, %v3364, 0
    %3377 = vmatprep.subr.mxu0 0.0
    %3378 = vmatpush1.msra.mxu0 %v3366
    %3379 = vmatprep.subr.mxu0 0.0
    %3380 = vmatpush1.msra.mxu0 %v3368
    %3381 = vmatprep.subr.mxu0 0.0
    %3382 = vmatpush1.msra.mxu0 0.0
    %3383 = vmatprep.subr.mxu0 0.0
    %3384 = vmatpush1.msra.mxu0 0.0
    %3385 = vmatprep.subr.mxu0 0.0
    %3386 = vmatpush1.msra.mxu0 0.0
    %3387 = vmatprep.subr.mxu0 0.0
    %3388 = vmatpush1.msra.mxu0 0.0
    %3389 = vmatprep.subr.mxu0 0.0
    %3390 = vmatpush1.msra.mxu0 0.0
    %3391 = vmatprep.subr.mxu0 0.0
    %3392 = vmatpush1.msra.mxu0 0.0
    %3393 = vmatprep.subr.mxu0 0.0
    %3394 = vmatpush1.msra.mxu0 0.0
    %3395 = vmatprep.subr.mxu0 0.0
    %3396 = vmatpush1.msra.mxu0 0.0
    %3397 = vmatprep.subr.mxu0 0.0
    %3398 = vmatpush1.msra.mxu0 0.0
    %3399 = vmatprep.subr.mxu0 0.0
    %3400 = vmatpush1.msra.mxu0 0.0
    %3401 = vmatprep.subr.mxu0 0.0
    %3402 = vmatpush1.msra.mxu0 0.0
    %3403 = vmatprep.subr.mxu0 0.0
    %3404 = vmatpush1.msra.mxu0 0.0
    %3405 = vmatprep.subr.mxu0 0.0
    %3406 = vmatpush1.msra.mxu0 0.0
    %3407 = vmatprep.subr.mxu0 0.0
    %3408 = vmatpush1.msra.mxu0 0.0
    %3409 = vmatprep.subr.mxu0 0.0
    %3410 = vmatpush1.msra.mxu0 0.0
    %3411 = vmatprep.subr.mxu0 0.0
    %3412 = vmatpush1.msra.mxu0 0.0
    %3413 = vmatprep.subr.mxu0 0.0
    %3414 = vmatpush1.msra.mxu0 0.0
    %3415 = vmatprep.subr.mxu0 0.0
    %3416 = vmatpush1.msra.mxu0 0.0
    %3417 = vmatprep.subr.mxu0 0.0
    %3418 = vmatpush1.msra.mxu0 0.0
    %3419 = vmatprep.subr.mxu0 0.0
    %3420 = vmatpush1.msra.mxu0 0.0
    %3421 = vmatprep.subr.mxu0 0.0
    %3422 = vmatpush1.msra.mxu0 0.0
    %3423 = vmatprep.subr.mxu0 0.0
    %3424 = vmatpush1.msra.mxu0 0.0
    %3425 = vmatprep.subr.mxu0 0.0
    %3426 = vmatpush1.msra.mxu0 0.0
    %3427 = vmatprep.subr.mxu0 0.0
    %3428 = vmatpush1.msra.mxu0 0.0
    %3429 = vmatprep.subr.mxu0 0.0
    %3430 = vmatpush1.msra.mxu0 0.0
    %3431 = vmatprep.subr.mxu0 0.0
    %3432 = vmatpush1.msra.mxu0 0.0
    %3433 = vmatprep.subr.mxu0 0.0
    %3434 = vmatpush1.msra.mxu0 0.0
    %3435 = vmatprep.subr.mxu0 0.0
    %3436 = vmatpush1.msra.mxu0 0.0
    %3437 = vmatprep.subr.mxu0 0.0
    %3438 = vmatpush1.msra.mxu0 0.0
    %3439 = vmatprep.subr.mxu0 0.0
    %3440 = vmatpush1.msra.mxu0 0.0
    %3441 = vmatprep.mubr.f32.mxu0 0.0
    %3442 = vmatmul.mubr.f32.gmra.mrb[0].mxu0 %v3372
    %v3443 = vpop.f32.mrb[0].mxu0
    %v3444 = vadd.f32 0.0, %v3443
    %v3445 = vpop.f32.mrb[0].mxu0
    %3446 = vmatprep.mubr.f32.mxu0 0.0
    %3447 = vmatmul.mubr.f32.gmra.mrb[0].mxu0 %v3375
    %v3448 = vpop.f32.mrb[0].mxu0
    %v3449 = vadd.f32 0.0, %v3448
    %v3450 = vpop.f32.mrb[0].mxu0
    %3451 = vdwg.mxu0
    %v3453 = vsel %vm1565, %v3444, 0
    %v3456 = vsel %vm1565, %v3449, 0
    %3458 = vmatprep.subr.mxu0 0.0
    %3459 = vmatpush1.msra.mxu0 %v1555
    %3460 = vmatprep.subr.mxu0 0.0
    %3461 = vmatpush1.msra.mxu0 %v1556
    %3462 = vmatprep.subr.mxu0 0.0
    %3463 = vmatpush1.msra.mxu0 0.0
    %3464 = vmatprep.subr.mxu0 0.0
    %3465 = vmatpush1.msra.mxu0 0.0
    %3466 = vmatprep.subr.mxu0 0.0
    %3467 = vmatpush1.msra.mxu0 0.0
    %3468 = vmatprep.subr.mxu0 0.0
    %3469 = vmatpush1.msra.mxu0 0.0
    %3470 = vmatprep.subr.mxu0 0.0
    %3471 = vmatpush1.msra.mxu0 0.0
    %3472 = vmatprep.subr.mxu0 0.0
    %3473 = vmatpush1.msra.mxu0 0.0
    %3474 = vmatprep.subr.mxu0 0.0
    %3475 = vmatpush1.msra.mxu0 0.0
    %3476 = vmatprep.subr.mxu0 0.0
    %3477 = vmatpush1.msra.mxu0 0.0
    %3478 = vmatprep.subr.mxu0 0.0
    %3479 = vmatpush1.msra.mxu0 0.0
    %3480 = vmatprep.subr.mxu0 0.0
    %3481 = vmatpush1.msra.mxu0 0.0
    %3482 = vmatprep.subr.mxu0 0.0
    %3483 = vmatpush1.msra.mxu0 0.0
    %3484 = vmatprep.subr.mxu0 0.0
    %3485 = vmatpush1.msra.mxu0 0.0
    %3486 = vmatprep.subr.mxu0 0.0
    %3487 = vmatpush1.msra.mxu0 0.0
    %3488 = vmatprep.subr.mxu0 0.0
    %3489 = vmatpush1.msra.mxu0 0.0
    %3490 = vmatprep.subr.mxu0 0.0
    %3491 = vmatpush1.msra.mxu0 0.0
    %3492 = vmatprep.subr.mxu0 0.0
    %3493 = vmatpush1.msra.mxu0 0.0
    %3494 = vmatprep.subr.mxu0 0.0
    %3495 = vmatpush1.msra.mxu0 0.0
    %3496 = vmatprep.subr.mxu0 0.0
    %3497 = vmatpush1.msra.mxu0 0.0
    %3498 = vmatprep.subr.mxu0 0.0
    %3499 = vmatpush1.msra.mxu0 0.0
    %3500 = vmatprep.subr.mxu0 0.0
    %3501 = vmatpush1.msra.mxu0 0.0
    %3502 = vmatprep.subr.mxu0 0.0
    %3503 = vmatpush1.msra.mxu0 0.0
    %3504 = vmatprep.subr.mxu0 0.0
    %3505 = vmatpush1.msra.mxu0 0.0
    %3506 = vmatprep.subr.mxu0 0.0
    %3507 = vmatpush1.msra.mxu0 0.0
    %3508 = vmatprep.subr.mxu0 0.0
    %3509 = vmatpush1.msra.mxu0 0.0
    %3510 = vmatprep.subr.mxu0 0.0
    %3511 = vmatpush1.msra.mxu0 0.0
    %3512 = vmatprep.subr.mxu0 0.0
    %3513 = vmatpush1.msra.mxu0 0.0
    %3514 = vmatprep.subr.mxu0 0.0
    %3515 = vmatpush1.msra.mxu0 0.0
    %3516 = vmatprep.subr.mxu0 0.0
    %3517 = vmatpush1.msra.mxu0 0.0
    %3518 = vmatprep.subr.mxu0 0.0
    %3519 = vmatpush1.msra.mxu0 0.0
    %3520 = vmatprep.subr.mxu0 0.0
    %3521 = vmatpush1.msra.mxu0 0.0
    %3522 = vmatprep.mubr.f32.mxu0 0.0
    %3523 = vmatmul.mubr.f32.gmra.mrb[0].mxu0 %v3453
    %v3524 = vpop.f32.mrb[0].mxu0
    %v3525 = vadd.f32 0.0, %v3524
    %v3526 = vpop.f32.mrb[0].mxu0
    %3527 = vmatprep.mubr.f32.mxu0 0.0
    %3528 = vmatmul.mubr.f32.gmra.mrb[0].mxu0 %v3456
    %v3529 = vpop.f32.mrb[0].mxu0
    %v3530 = vadd.f32 0.0, %v3529
    %v3531 = vpop.f32.mrb[0].mxu0
    %3532 = vdwg.mxu0
    %v3533 = vadd.f32 %v3242, %v3525
    %v3534 = vadd.f32 %v3247, %v3530
    %3535 = vrot.lane.b32.xlu0 %v1541, 80
    %v3536 = vpop.permute.xlu0 %3535
    %3537 = vrot.lane.b32.xlu0 %v1547, 80
    %v3538 = vpop.permute.xlu0 %3537
    %3539 = vrot.lane.b32.xlu0 %v1541, 16
    %v3540 = vpop.permute.xlu0 %3539
    %3541 = vrot.lane.b32.xlu0 %v1547, 16
    %v3542 = vpop.permute.xlu0 %3541
    %v3543 = vsel %vm1565, %v3536, 0
    %v3545 = vsel %vm1565, %v3538, 0
    %v3547 = vsel %vm1565, %v3540, 0
    %v3549 = vsel %vm1565, %v3542, 0
    %3551 = vmatprep.subr.mxu0 0.0
    %3552 = vmatpush1.xpose.msra.mxu0 %v3547
    %3553 = vmatprep.subr.mxu0 0.0
    %3554 = vmatpush1.xpose.msra.mxu0 %v3549
    %3555 = vmatprep.subr.mxu0 0.0
    %3556 = vmatpush1.xpose.msra.mxu0 0.0
    %3557 = vmatprep.subr.mxu0 0.0
    %3558 = vmatpush1.xpose.msra.mxu0 0.0
    %3559 = vmatprep.subr.mxu0 0.0
    %3560 = vmatpush1.xpose.msra.mxu0 0.0
    %3561 = vmatprep.subr.mxu0 0.0
    %3562 = vmatpush1.xpose.msra.mxu0 0.0
    %3563 = vmatprep.subr.mxu0 0.0
    %3564 = vmatpush1.xpose.msra.mxu0 0.0
    %3565 = vmatprep.subr.mxu0 0.0
    %3566 = vmatpush1.xpose.msra.mxu0 0.0
    %3567 = vmatprep.subr.mxu0 0.0
    %3568 = vmatpush1.xpose.msra.mxu0 0.0
    %3569 = vmatprep.subr.mxu0 0.0
    %3570 = vmatpush1.xpose.msra.mxu0 0.0
    %3571 = vmatprep.subr.mxu0 0.0
    %3572 = vmatpush1.xpose.msra.mxu0 0.0
    %3573 = vmatprep.subr.mxu0 0.0
    %3574 = vmatpush1.xpose.msra.mxu0 0.0
    %3575 = vmatprep.subr.mxu0 0.0
    %3576 = vmatpush1.xpose.msra.mxu0 0.0
    %3577 = vmatprep.subr.mxu0 0.0
    %3578 = vmatpush1.xpose.msra.mxu0 0.0
    %3579 = vmatprep.subr.mxu0 0.0
    %3580 = vmatpush1.xpose.msra.mxu0 0.0
    %3581 = vmatprep.subr.mxu0 0.0
    %3582 = vmatpush1.xpose.msra.mxu0 0.0
    %3583 = vmatprep.subr.mxu0 0.0
    %3584 = vmatpush1.xpose.msra.mxu0 0.0
    %3585 = vmatprep.subr.mxu0 0.0
    %3586 = vmatpush1.xpose.msra.mxu0 0.0
    %3587 = vmatprep.subr.mxu0 0.0
    %3588 = vmatpush1.xpose.msra.mxu0 0.0
    %3589 = vmatprep.subr.mxu0 0.0
    %3590 = vmatpush1.xpose.msra.mxu0 0.0
    %3591 = vmatprep.subr.mxu0 0.0
    %3592 = vmatpush1.xpose.msra.mxu0 0.0
    %3593 = vmatprep.subr.mxu0 0.0
    %3594 = vmatpush1.xpose.msra.mxu0 0.0
    %3595 = vmatprep.subr.mxu0 0.0
    %3596 = vmatpush1.xpose.msra.mxu0 0.0
    %3597 = vmatprep.subr.mxu0 0.0
    %3598 = vmatpush1.xpose.msra.mxu0 0.0
    %3599 = vmatprep.subr.mxu0 0.0
    %3600 = vmatpush1.xpose.msra.mxu0 0.0
    %3601 = vmatprep.subr.mxu0 0.0
    %3602 = vmatpush1.xpose.msra.mxu0 0.0
    %3603 = vmatprep.subr.mxu0 0.0
    %3604 = vmatpush1.xpose.msra.mxu0 0.0
    %3605 = vmatprep.subr.mxu0 0.0
    %3606 = vmatpush1.xpose.msra.mxu0 0.0
    %3607 = vmatprep.subr.mxu0 0.0
    %3608 = vmatpush1.xpose.msra.mxu0 0.0
    %3609 = vmatprep.subr.mxu0 0.0
    %3610 = vmatpush1.xpose.msra.mxu0 0.0
    %3611 = vmatprep.subr.mxu0 0.0
    %3612 = vmatpush1.xpose.msra.mxu0 0.0
    %3613 = vmatprep.subr.mxu0 0.0
    %3614 = vmatpush1.xpose.msra.mxu0 0.0
    %3615 = vmatprep.mubr.f32.mxu0 0.0
    %3616 = vmatmul.mubr.f32.gmra.mrb[0].mxu0 %v3543
    %v3617 = vpop.f32.mrb[0].mxu0
    %v3618 = vadd.f32 0.0, %v3617
    %v3619 = vpop.f32.mrb[0].mxu0
    %3620 = vmatprep.mubr.f32.mxu0 0.0
    %3621 = vmatmul.mubr.f32.gmra.mrb[0].mxu0 %v3545
    %v3622 = vpop.f32.mrb[0].mxu0
    %v3623 = vadd.f32 0.0, %v3622
    %v3624 = vpop.f32.mrb[0].mxu0
    %3625 = vdwg.mxu0
    %v3626 = vmul.f32 %v3618, 0.25
    %v3627 = vmul.f32 %v3623, 0.25
    %v3628 = vsel %vm1565, %v3626, -inf
    %3629 = vmax.xlane.f32.xlu0 %v3628
    %v3630 = vpop.xlane.xlu0 %3629
    %v3631 = vsel %vm1565, %v3627, -inf
    %3632 = vmax.xlane.f32.xlu0 %v3631
    %v3633 = vpop.xlane.xlu0 %3632
    %v3634 = vsub.f32 %v3626, %v3630
    %v3635 = vsub.f32 %v3627, %v3633
    %v3636 = vmul.f32 %v3634, 1.442695
    %v3637 = vpow.pop %v3636
    %v3638 = vmul.f32 %v3635, 1.442695
    %v3639 = vpow.pop %v3638
    %v3640 = vsel %vm1565, %v3637, 0.0
    %3641 = vadd.xlane.f32.xlu0 %v3640
    %v3642 = vpop.xlane.xlu0 %3641
    %v3643 = vsel %vm1565, %v3639, 0.0
    %3644 = vadd.xlane.f32.xlu0 %v3643
    %v3645 = vpop.xlane.xlu0 %3644
    %v3646 = vrcp.pop %v3642
    %v3647 = vrcp.pop %v3645
    %v3648 = vmul.f32 %v3637, %v3646
    %v3649 = vmul.f32 %v3639, %v3647
    %3650 = vrot.lane.b32.xlu0 %v1543, 80
    %v3651 = vpop.permute.xlu0 %3650
    %3652 = vrot.lane.b32.xlu0 %v1549, 80
    %v3653 = vpop.permute.xlu0 %3652
    %v3657 = vsel %vm1565, %v3648, 0
    %v3660 = vsel %vm1565, %v3649, 0
    %3662 = vmatprep.subr.mxu0 0.0
    %3663 = vmatpush1.msra.mxu0 %v3651
    %3664 = vmatprep.subr.mxu0 0.0
    %3665 = vmatpush1.msra.mxu0 %v3653
    %3666 = vmatprep.subr.mxu0 0.0
    %3667 = vmatpush1.msra.mxu0 0.0
    %3668 = vmatprep.subr.mxu0 0.0
    %3669 = vmatpush1.msra.mxu0 0.0
    %3670 = vmatprep.subr.mxu0 0.0
    %3671 = vmatpush1.msra.mxu0 0.0
    %3672 = vmatprep.subr.mxu0 0.0
    %3673 = vmatpush1.msra.mxu0 0.0
    %3674 = vmatprep.subr.mxu0 0.0
    %3675 = vmatpush1.msra.mxu0 0.0
    %3676 = vmatprep.subr.mxu0 0.0
    %3677 = vmatpush1.msra.mxu0 0.0
    %3678 = vmatprep.subr.mxu0 0.0
    %3679 = vmatpush1.msra.mxu0 0.0
    %3680 = vmatprep.subr.mxu0 0.0
    %3681 = vmatpush1.msra.mxu0 0.0
    %3682 = vmatprep.subr.mxu0 0.0
    %3683 = vmatpush1.msra.mxu0 0.0
    %3684 = vmatprep.subr.mxu0 0.0
    %3685 = vmatpush1.msra.mxu0 0.0
    %3686 = vmatprep.subr.mxu0 0.0
    %3687 = vmatpush1.msra.mxu0 0.0
    %3688 = vmatprep.subr.mxu0 0.0
    %3689 = vmatpush1.msra.mxu0 0.0
    %3690 = vmatprep.subr.mxu0 0.0
    %3691 = vmatpush1.msra.mxu0 0.0
    %3692 = vmatprep.subr.mxu0 0.0
    %3693 = vmatpush1.msra.mxu0 0.0
    %3694 = vmatprep.subr.mxu0 0.0
    %3695 = vmatpush1.msra.mxu0 0.0
    %3696 = vmatprep.subr.mxu0 0.0
    %3697 = vmatpush1.msra.mxu0 0.0
    %3698 = vmatprep.subr.mxu0 0.0
    %3699 = vmatpush1.msra.mxu0 0.0
    %3700 = vmatprep.subr.mxu0 0.0
    %3701 = vmatpush1.msra.mxu0 0.0
    %3702 = vmatprep.subr.mxu0 0.0
    %3703 = vmatpush1.msra.mxu0 0.0
    %3704 = vmatprep.subr.mxu0 0.0
    %3705 = vmatpush1.msra.mxu0 0.0
    %3706 = vmatprep.subr.mxu0 0.0
    %3707 = vmatpush1.msra.mxu0 0.0
    %3708 = vmatprep.subr.mxu0 0.0
    %3709 = vmatpush1.msra.mxu0 0.0
    %3710 = vmatprep.subr.mxu0 0.0
    %3711 = vmatpush1.msra.mxu0 0.0
    %3712 = vmatprep.subr.mxu0 0.0
    %3713 = vmatpush1.msra.mxu0 0.0
    %3714 = vmatprep.subr.mxu0 0.0
    %3715 = vmatpush1.msra.mxu0 0.0
    %3716 = vmatprep.subr.mxu0 0.0
    %3717 = vmatpush1.msra.mxu0 0.0
    %3718 = vmatprep.subr.mxu0 0.0
    %3719 = vmatpush1.msra.mxu0 0.0
    %3720 = vmatprep.subr.mxu0 0.0
    %3721 = vmatpush1.msra.mxu0 0.0
    %3722 = vmatprep.subr.mxu0 0.0
    %3723 = vmatpush1.msra.mxu0 0.0
    %3724 = vmatprep.subr.mxu0 0.0
    %3725 = vmatpush1.msra.mxu0 0.0
    %3726 = vmatprep.mubr.f32.mxu0 0.0
    %3727 = vmatmul.mubr.f32.gmra.mrb[0].mxu0 %v3657
    %v3728 = vpop.f32.mrb[0].mxu0
    %v3729 = vadd.f32 0.0, %v3728
    %v3730 = vpop.f32.mrb[0].mxu0
    %3731 = vmatprep.mubr.f32.mxu0 0.0
    %3732 = vmatmul.mubr.f32.gmra.mrb[0].mxu0 %v3660
    %v3733 = vpop.f32.mrb[0].mxu0
    %v3734 = vadd.f32 0.0, %v3733
    %v3735 = vpop.f32.mrb[0].mxu0
    %3736 = vdwg.mxu0
    %v3738 = vsel %vm1565, %v3729, 0
    %v3741 = vsel %vm1565, %v3734, 0
    %3743 = vmatprep.subr.mxu0 0.0
    %3744 = vmatpush1.msra.mxu0 %v1557
    %3745 = vmatprep.subr.mxu0 0.0
    %3746 = vmatpush1.msra.mxu0 %v1558
    %3747 = vmatprep.subr.mxu0 0.0
    %3748 = vmatpush1.msra.mxu0 0.0
    %3749 = vmatprep.subr.mxu0 0.0
    %3750 = vmatpush1.msra.mxu0 0.0
    %3751 = vmatprep.subr.mxu0 0.0
    %3752 = vmatpush1.msra.mxu0 0.0
    %3753 = vmatprep.subr.mxu0 0.0
    %3754 = vmatpush1.msra.mxu0 0.0
    %3755 = vmatprep.subr.mxu0 0.0
    %3756 = vmatpush1.msra.mxu0 0.0
    %3757 = vmatprep.subr.mxu0 0.0
    %3758 = vmatpush1.msra.mxu0 0.0
    %3759 = vmatprep.subr.mxu0 0.0
    %3760 = vmatpush1.msra.mxu0 0.0
    %3761 = vmatprep.subr.mxu0 0.0
    %3762 = vmatpush1.msra.mxu0 0.0
    %3763 = vmatprep.subr.mxu0 0.0
    %3764 = vmatpush1.msra.mxu0 0.0
    %3765 = vmatprep.subr.mxu0 0.0
    %3766 = vmatpush1.msra.mxu0 0.0
    %3767 = vmatprep.subr.mxu0 0.0
    %3768 = vmatpush1.msra.mxu0 0.0
    %3769 = vmatprep.subr.mxu0 0.0
    %3770 = vmatpush1.msra.mxu0 0.0
    %3771 = vmatprep.subr.mxu0 0.0
    %3772 = vmatpush1.msra.mxu0 0.0
    %3773 = vmatprep.subr.mxu0 0.0
    %3774 = vmatpush1.msra.mxu0 0.0
    %3775 = vmatprep.subr.mxu0 0.0
    %3776 = vmatpush1.msra.mxu0 0.0
    %3777 = vmatprep.subr.mxu0 0.0
    %3778 = vmatpush1.msra.mxu0 0.0
    %3779 = vmatprep.subr.mxu0 0.0
    %3780 = vmatpush1.msra.mxu0 0.0
    %3781 = vmatprep.subr.mxu0 0.0
    %3782 = vmatpush1.msra.mxu0 0.0
    %3783 = vmatprep.subr.mxu0 0.0
    %3784 = vmatpush1.msra.mxu0 0.0
    %3785 = vmatprep.subr.mxu0 0.0
    %3786 = vmatpush1.msra.mxu0 0.0
    %3787 = vmatprep.subr.mxu0 0.0
    %3788 = vmatpush1.msra.mxu0 0.0
    %3789 = vmatprep.subr.mxu0 0.0
    %3790 = vmatpush1.msra.mxu0 0.0
    %3791 = vmatprep.subr.mxu0 0.0
    %3792 = vmatpush1.msra.mxu0 0.0
    %3793 = vmatprep.subr.mxu0 0.0
    %3794 = vmatpush1.msra.mxu0 0.0
    %3795 = vmatprep.subr.mxu0 0.0
    %3796 = vmatpush1.msra.mxu0 0.0
    %3797 = vmatprep.subr.mxu0 0.0
    %3798 = vmatpush1.msra.mxu0 0.0
    %3799 = vmatprep.subr.mxu0 0.0
    %3800 = vmatpush1.msra.mxu0 0.0
    %3801 = vmatprep.subr.mxu0 0.0
    %3802 = vmatpush1.msra.mxu0 0.0
    %3803 = vmatprep.subr.mxu0 0.0
    %3804 = vmatpush1.msra.mxu0 0.0
    %3805 = vmatprep.subr.mxu0 0.0
    %3806 = vmatpush1.msra.mxu0 0.0
    %3807 = vmatprep.mubr.f32.mxu0 0.0
    %3808 = vmatmul.mubr.f32.gmra.mrb[0].mxu0 %v3738
    %v3809 = vpop.f32.mrb[0].mxu0
    %v3810 = vadd.f32 0.0, %v3809
    %v3811 = vpop.f32.mrb[0].mxu0
    %3812 = vmatprep.mubr.f32.mxu0 0.0
    %3813 = vmatmul.mubr.f32.gmra.mrb[0].mxu0 %v3741
    %v3814 = vpop.f32.mrb[0].mxu0
    %v3815 = vadd.f32 0.0, %v3814
    %v3816 = vpop.f32.mrb[0].mxu0
    %3817 = vdwg.mxu0
    %v3818 = vadd.f32 %v3533, %v3810
    %v3819 = vadd.f32 %v3534, %v3815
    %v3820 = vadd.f32 %v1355, %v2688
    %v3821 = vadd.f32 %v1356, %v2689
    %v3822 = vadd.f32 %v1357, %v3818
    %v3823 = vadd.f32 %v1358, %v3819
    %v3824 = vld [vmem:[%s1 + $0x23] ss:$0 sm:$0xff]
    %v3825 = vadd.f32 %v3820, %v3824
    %v3826 = vadd.f32 %v3821, %v3824
    %v3827 = vadd.f32 %v3822, %v3824
    %v3828 = vadd.f32 %v3823, %v3824
    %v3829 = vsel %vm25, %v3825, 0.0
    %3830 = vadd.xlane.f32.xlu0 %v3829
    %v3831 = vpop.xlane.xlu0 %3830
    %v3832 = vsel %vm25, %v3826, 0.0
    %3833 = vadd.xlane.f32.xlu0 %v3832
    %v3834 = vpop.xlane.xlu0 %3833
    %v3835 = vsel %vm25, %v3827, 0.0
    %3836 = vadd.xlane.f32.xlu0 %v3835
    %v3837 = vpop.xlane.xlu0 %3836
    %v3838 = vsel %vm25, %v3828, 0.0
    %3839 = vadd.xlane.f32.xlu0 %v3838
    %v3840 = vpop.xlane.xlu0 %3839
    %v3841 = vmul.f32 %v3831, %v38
    %v3842 = vmul.f32 %v3834, %v38
    %v3843 = vmul.f32 %v3837, %v38
    %v3844 = vmul.f32 %v3840, %v38
    %v3845 = vsub.f32 %v3825, %v3841
    %v3846 = vsub.f32 %v3826, %v3842
    %v3847 = vsub.f32 %v3827, %v3843
    %v3848 = vsub.f32 %v3828, %v3844
    %v3849 = vmul.f32 %v3845, %v3845
    %v3850 = vmul.f32 %v3846, %v3846
    %v3851 = vmul.f32 %v3847, %v3847
    %v3852 = vmul.f32 %v3848, %v3848
    %v3853 = vsel %vm25, %v3849, 0.0
    %3854 = vadd.xlane.f32.xlu0 %v3853
    %v3855 = vpop.xlane.xlu0 %3854
    %v3856 = vsel %vm25, %v3850, 0.0
    %3857 = vadd.xlane.f32.xlu0 %v3856
    %v3858 = vpop.xlane.xlu0 %3857
    %v3859 = vsel %vm25, %v3851, 0.0
    %3860 = vadd.xlane.f32.xlu0 %v3859
    %v3861 = vpop.xlane.xlu0 %3860
    %v3862 = vsel %vm25, %v3852, 0.0
    %3863 = vadd.xlane.f32.xlu0 %v3862
    %v3864 = vpop.xlane.xlu0 %3863
    %v3865 = vmul.f32 %v3855, %v38
    %v3866 = vmul.f32 %v3858, %v38
    %v3867 = vmul.f32 %v3861, %v38
    %v3868 = vmul.f32 %v3864, %v38
    %v3869 = vadd.f32 %v3865, 1e-05
    %v3870 = vadd.f32 %v3866, 1e-05
    %v3871 = vadd.f32 %v3867, 1e-05
    %v3872 = vadd.f32 %v3868, 1e-05
    %v3873 = vrsqrt.pop %v3869
    %v3874 = vrsqrt.pop %v3870
    %v3875 = vrsqrt.pop %v3871
    %v3876 = vrsqrt.pop %v3872
    %v3877 = vmul.f32 %v3845, %v3873
    %v3878 = vmul.f32 %v3846, %v3874
    %v3879 = vmul.f32 %v3847, %v3875
    %v3880 = vmul.f32 %v3848, %v3876
    %v3881 = vld [vmem:[%s1 + $0x4] ss:$0 sm:$0xff]
    %v3882 = vmul.f32 %v3877, %v3881
    %v3883 = vmul.f32 %v3878, %v3881
    %v3884 = vmul.f32 %v3879, %v3881
    %v3885 = vmul.f32 %v3880, %v3881
    %v3886 = vld [vmem:[%s1 + $0x5] ss:$0 sm:$0xff]
    %v3887 = vadd.f32 %v3882, %v3886
    %v3888 = vadd.f32 %v3883, %v3886
    %v3889 = vadd.f32 %v3884, %v3886
    %v3890 = vadd.f32 %v3885, %v3886
    %v3891 = vld [vmem:[%s2 + $0x10] sm:$0xff]
    %v3892 = vld [vmem:[%s2 + $0x18] sm:$0xff]
    %v3893 = vld [vmem:[%s2 + $0x40] sm:$0xff]
    %v3894 = vld [vmem:[%s2 + $0x48] sm:$0xff]
    %v3895 = vld [vmem:[%s2 + $0x70] sm:$0xff]
    %v3896 = vld [vmem:[%s2 + $0x78] sm:$0xff]
    %v3897 = vld [vmem:[%s2 + $0xa0] sm:$0xff]
    %v3898 = vld [vmem:[%s2 + $0xa8] sm:$0xff]
    %v3899 = vld [vmem:[%s2 + $0xd0] sm:$0xff]
    %v3900 = vld [vmem:[%s2 + $0xd8] sm:$0xff]
    %v3901 = vld [vmem:[%s2 + $0x100] sm:$0xff]
    %v3902 = vld [vmem:[%s2 + $0x108] sm:$0xff]
    %v3903 = vld [vmem:[%s2 + $0x130] sm:$0xff]
    %v3904 = vld [vmem:[%s2 + $0x138] sm:$0xff]
    %v3905 = vld [vmem:[%s2 + $0x160] sm:$0xff]
    %v3906 = vld [vmem:[%s2 + $0x168] sm:$0xff]
    %s3907 = scalar_lea.vmem %s1, 6
    %v3908 = vld [vmem:[%s3907] ss:$8 sm:$0x3]
    %v3910 = vlaneseq
    %v3911 = vshrl.u32 %v3910, 7
    %v3912 = vsub.s32 0, %v3911
    %v3913 = vrot.slane %v3908, %v3912
    %v3914 = vlaneseq
    %v3915 = vshrl.u32 %v3914, 7
    %v3916 = vsub.s32 1, %v3915
    %v3917 = vrot.slane %v3908, %v3916
    %v3921 = vsel %vm25, %v3887, 0
    %v3924 = vsel %vm25, %v3888, 0
    %v3927 = vsel %vm25, %v3889, 0
    %v3930 = vsel %vm25, %v3890, 0
    %3932 = vmatprep.subr.mxu0 %v3892
    %3933 = vmatpush1.msra.mxu0 %v3891
    %3934 = vmatprep.subr.mxu0 %v3894
    %3935 = vmatpush1.msra.mxu0 %v3893
    %3936 = vmatprep.subr.mxu0 %v3896
    %3937 = vmatpush1.msra.mxu0 %v3895
    %3938 = vmatprep.subr.mxu0 %v3898
    %3939 = vmatpush1.msra.mxu0 %v3897
    %3940 = vmatprep.subr.mxu0 %v3900
    %3941 = vmatpush1.msra.mxu0 %v3899
    %3942 = vmatprep.subr.mxu0 %v3902
    %3943 = vmatpush1.msra.mxu0 %v3901
    %3944 = vmatprep.subr.mxu0 %v3904
    %3945 = vmatpush1.msra.mxu0 %v3903
    %3946 = vmatprep.subr.mxu0 %v3906
    %3947 = vmatpush1.msra.mxu0 %v3905
    %3948 = vmatprep.subr.mxu0 0.0
    %3949 = vmatpush1.msra.mxu0 0.0
    %3950 = vmatprep.subr.mxu0 0.0
    %3951 = vmatpush1.msra.mxu0 0.0
    %3952 = vmatprep.subr.mxu0 0.0
    %3953 = vmatpush1.msra.mxu0 0.0
    %3954 = vmatprep.subr.mxu0 0.0
    %3955 = vmatpush1.msra.mxu0 0.0
    %3956 = vmatprep.subr.mxu0 0.0
    %3957 = vmatpush1.msra.mxu0 0.0
    %3958 = vmatprep.subr.mxu0 0.0
    %3959 = vmatpush1.msra.mxu0 0.0
    %3960 = vmatprep.subr.mxu0 0.0
    %3961 = vmatpush1.msra.mxu0 0.0
    %3962 = vmatprep.subr.mxu0 0.0
    %3963 = vmatpush1.msra.mxu0 0.0
    %3964 = vmatprep.subr.mxu0 0.0
    %3965 = vmatpush1.msra.mxu0 0.0
    %3966 = vmatprep.subr.mxu0 0.0
    %3967 = vmatpush1.msra.mxu0 0.0
    %3968 = vmatprep.subr.mxu0 0.0
    %3969 = vmatpush1.msra.mxu0 0.0
    %3970 = vmatprep.subr.mxu0 0.0
    %3971 = vmatpush1.msra.mxu0 0.0
    %3972 = vmatprep.subr.mxu0 0.0
    %3973 = vmatpush1.msra.mxu0 0.0
    %3974 = vmatprep.subr.mxu0 0.0
    %3975 = vmatpush1.msra.mxu0 0.0
    %3976 = vmatprep.subr.mxu0 0.0
    %3977 = vmatpush1.msra.mxu0 0.0
    %3978 = vmatprep.subr.mxu0 0.0
    %3979 = vmatpush1.msra.mxu0 0.0
    %3980 = vmatprep.subr.mxu0 0.0
    %3981 = vmatpush1.msra.mxu0 0.0
    %3982 = vmatprep.subr.mxu0 0.0
    %3983 = vmatpush1.msra.mxu0 0.0
    %3984 = vmatprep.subr.mxu0 0.0
    %3985 = vmatpush1.msra.mxu0 0.0
    %3986 = vmatprep.subr.mxu0 0.0
    %3987 = vmatpush1.msra.mxu0 0.0
    %3988 = vmatprep.subr.mxu0 0.0
    %3989 = vmatpush1.msra.mxu0 0.0
    %3990 = vmatprep.subr.mxu0 0.0
    %3991 = vmatpush1.msra.mxu0 0.0
    %3992 = vmatprep.subr.mxu0 0.0
    %3993 = vmatpush1.msra.mxu0 0.0
    %3994 = vmatprep.subr.mxu0 0.0
    %3995 = vmatpush1.msra.mxu0 0.0
    %3996 = vmatprep.mubr.f32.mxu0 0.0
    %3997 = vmatmul.mubr.f32.gmra.mrb[0].mxu0 %v3921
    %v3998 = vpop.f32.mrb[0].mxu0
    %v3999 = vadd.f32 %v3913, %v3998
    %v4000 = vpop.f32.mrb[0].mxu0
    %v4001 = vadd.f32 %v3917, %v4000
    %4002 = vmatprep.mubr.f32.mxu0 0.0
    %4003 = vmatmul.mubr.f32.gmra.mrb[0].mxu0 %v3924
    %v4004 = vpop.f32.mrb[0].mxu0
    %v4005 = vadd.f32 %v3913, %v4004
    %v4006 = vpop.f32.mrb[0].mxu0
    %v4007 = vadd.f32 %v3917, %v4006
    %4008 = vmatprep.mubr.f32.mxu0 0.0
    %4009 = vmatmul.mubr.f32.gmra.mrb[0].mxu0 %v3927
    %v4010 = vpop.f32.mrb[0].mxu0
    %v4011 = vadd.f32 %v3913, %v4010
    %v4012 = vpop.f32.mrb[0].mxu0
    %v4013 = vadd.f32 %v3917, %v4012
    %4014 = vmatprep.mubr.f32.mxu0 0.0
    %4015 = vmatmul.mubr.f32.gmra.mrb[0].mxu0 %v3930
    %v4016 = vpop.f32.mrb[0].mxu0
    %v4017 = vadd.f32 %v3913, %v4016
    %v4018 = vpop.f32.mrb[0].mxu0
    %v4019 = vadd.f32 %v3917, %v4018
    %4020 = vdwg.mxu0
    %v4021 = vxor.u32 %v3999, 2147483648
    %v4022 = vxor.u32 %v4001, 2147483648
    %v4023 = vxor.u32 %v4005, 2147483648
    %v4024 = vxor.u32 %v4007, 2147483648
    %v4025 = vxor.u32 %v4011, 2147483648
    %v4026 = vxor.u32 %v4013, 2147483648
    %v4027 = vxor.u32 %v4017, 2147483648
    %v4028 = vxor.u32 %v4019, 2147483648
    %v4029 = vmul.f32 %v4021, 1.442695
    %v4030 = vpow.pop %v4029
    %v4031 = vmul.f32 %v4022, 1.442695
    %v4032 = vpow.pop %v4031
    %v4033 = vmul.f32 %v4023, 1.442695
    %v4034 = vpow.pop %v4033
    %v4035 = vmul.f32 %v4024, 1.442695
    %v4036 = vpow.pop %v4035
    %v4037 = vmul.f32 %v4025, 1.442695
    %v4038 = vpow.pop %v4037
    %v4039 = vmul.f32 %v4026, 1.442695
    %v4040 = vpow.pop %v4039
    %v4041 = vmul.f32 %v4027, 1.442695
    %v4042 = vpow.pop %v4041
    %v4043 = vmul.f32 %v4028, 1.442695
    %v4044 = vpow.pop %v4043
    %v4045 = vadd.f32 %v4030, 1.0
    %v4046 = vadd.f32 %v4032, 1.0
    %v4047 = vadd.f32 %v4034, 1.0
    %v4048 = vadd.f32 %v4036, 1.0
    %v4049 = vadd.f32 %v4038, 1.0
    %v4050 = vadd.f32 %v4040, 1.0
    %v4051 = vadd.f32 %v4042, 1.0
    %v4052 = vadd.f32 %v4044, 1.0
    %v4053 = vrcp.pop %v4045
    %v4054 = vmul.f32 1.0, %v4053
    %v4055 = vrcp.pop %v4046
    %v4056 = vmul.f32 1.0, %v4055
    %v4057 = vrcp.pop %v4047
    %v4058 = vmul.f32 1.0, %v4057
    %v4059 = vrcp.pop %v4048
    %v4060 = vmul.f32 1.0, %v4059
    %v4061 = vrcp.pop %v4049
    %v4062 = vmul.f32 1.0, %v4061
    %v4063 = vrcp.pop %v4050
    %v4064 = vmul.f32 1.0, %v4063
    %v4065 = vrcp.pop %v4051
    %v4066 = vmul.f32 1.0, %v4065
    %v4067 = vrcp.pop %v4052
    %v4068 = vmul.f32 1.0, %v4067
    %v4069 = vmul.f32 %v3999, %v4054
    %v4070 = vmul.f32 %v4001, %v4056
    %v4071 = vmul.f32 %v4005, %v4058
    %v4072 = vmul.f32 %v4007, %v4060
    %v4073 = vmul.f32 %v4011, %v4062
    %v4074 = vmul.f32 %v4013, %v4064
    %v4075 = vmul.f32 %v4017, %v4066
    %v4076 = vmul.f32 %v4019, %v4068
    %v4077 = vld [vmem:[%s3 + $0x100] sm:$0xff]
    %v4078 = vld [vmem:[%s3 + $0x108] sm:$0xff]
    %v4079 = vld [vmem:[%s3 + $0x110] sm:$0xff]
    %v4080 = vld [vmem:[%s3 + $0x118] sm:$0xff]
    %v4081 = vld [vmem:[%s3 + $0x120] sm:$0xff]
    %v4082 = vld [vmem:[%s3 + $0x128] sm:$0xff]
    %v4083 = vld [vmem:[%s3 + $0x130] sm:$0xff]
    %v4084 = vld [vmem:[%s3 + $0x138] sm:$0xff]
    %v4085 = vld [vmem:[%s3 + $0x140] sm:$0xff]
    %v4086 = vld [vmem:[%s3 + $0x148] sm:$0xff]
    %v4087 = vld [vmem:[%s3 + $0x150] sm:$0xff]
    %v4088 = vld [vmem:[%s3 + $0x158] sm:$0xff]
    %v4089 = vld [vmem:[%s3 + $0x160] sm:$0xff]
    %v4090 = vld [vmem:[%s3 + $0x168] sm:$0xff]
    %v4091 = vld [vmem:[%s3 + $0x170] sm:$0xff]
    %v4092 = vld [vmem:[%s3 + $0x178] sm:$0xff]
    %v4093 = vld [vmem:[%s3 + $0x180] sm:$0xff]
    %v4094 = vld [vmem:[%s3 + $0x188] sm:$0xff]
    %v4095 = vld [vmem:[%s3 + $0x190] sm:$0xff]
    %v4096 = vld [vmem:[%s3 + $0x198] sm:$0xff]
    %v4097 = vld [vmem:[%s3 + $0x1a0] sm:$0xff]
    %v4098 = vld [vmem:[%s3 + $0x1a8] sm:$0xff]
    %v4099 = vld [vmem:[%s3 + $0x1b0] sm:$0xff]
    %v4100 = vld [vmem:[%s3 + $0x1b8] sm:$0xff]
    %v4101 = vld [vmem:[%s3 + $0x1c0] sm:$0xff]
    %v4102 = vld [vmem:[%s3 + $0x1c8] sm:$0xff]
    %v4103 = vld [vmem:[%s3 + $0x1d0] sm:$0xff]
    %v4104 = vld [vmem:[%s3 + $0x1d8] sm:$0xff]
    %v4105 = vld [vmem:[%s3 + $0x1e0] sm:$0xff]
    %v4106 = vld [vmem:[%s3 + $0x1e8] sm:$0xff]
    %v4107 = vld [vmem:[%s3 + $0x1f0] sm:$0xff]
    %v4108 = vld [vmem:[%s3 + $0x1f8] sm:$0xff]
    %v4109 = vld [vmem:[%s1 + $0x7] ss:$0 sm:$0xff]
    %4110 = vmatprep.subr.mxu0 0.0
    %4111 = vmatpush1.msra.mxu0 %v4077
    %4112 = vmatprep.subr.mxu0 0.0
    %4113 = vmatpush1.msra.mxu0 %v4078
    %4114 = vmatprep.subr.mxu0 0.0
    %4115 = vmatpush1.msra.mxu0 %v4079
    %4116 = vmatprep.subr.mxu0 0.0
    %4117 = vmatpush1.msra.mxu0 %v4080
    %4118 = vmatprep.subr.mxu0 0.0
    %4119 = vmatpush1.msra.mxu0 %v4081
    %4120 = vmatprep.subr.mxu0 0.0
    %4121 = vmatpush1.msra.mxu0 %v4082
    %4122 = vmatprep.subr.mxu0 0.0
    %4123 = vmatpush1.msra.mxu0 %v4083
    %4124 = vmatprep.subr.mxu0 0.0
    %4125 = vmatpush1.msra.mxu0 %v4084
    %4126 = vmatprep.subr.mxu0 0.0
    %4127 = vmatpush1.msra.mxu0 %v4085
    %4128 = vmatprep.subr.mxu0 0.0
    %4129 = vmatpush1.msra.mxu0 %v4086
    %4130 = vmatprep.subr.mxu0 0.0
    %4131 = vmatpush1.msra.mxu0 %v4087
    %4132 = vmatprep.subr.mxu0 0.0
    %4133 = vmatpush1.msra.mxu0 %v4088
    %4134 = vmatprep.subr.mxu0 0.0
    %4135 = vmatpush1.msra.mxu0 %v4089
    %4136 = vmatprep.subr.mxu0 0.0
    %4137 = vmatpush1.msra.mxu0 %v4090
    %4138 = vmatprep.subr.mxu0 0.0
    %4139 = vmatpush1.msra.mxu0 %v4091
    %4140 = vmatprep.subr.mxu0 0.0
    %4141 = vmatpush1.msra.mxu0 %v4092
    %4142 = vmatprep.subr.mxu0 0.0
    %4143 = vmatpush1.msra.mxu0 %v4093
    %4144 = vmatprep.subr.mxu0 0.0
    %4145 = vmatpush1.msra.mxu0 %v4094
    %4146 = vmatprep.subr.mxu0 0.0
    %4147 = vmatpush1.msra.mxu0 %v4095
    %4148 = vmatprep.subr.mxu0 0.0
    %4149 = vmatpush1.msra.mxu0 %v4096
    %4150 = vmatprep.subr.mxu0 0.0
    %4151 = vmatpush1.msra.mxu0 %v4097
    %4152 = vmatprep.subr.mxu0 0.0
    %4153 = vmatpush1.msra.mxu0 %v4098
    %4154 = vmatprep.subr.mxu0 0.0
    %4155 = vmatpush1.msra.mxu0 %v4099
    %4156 = vmatprep.subr.mxu0 0.0
    %4157 = vmatpush1.msra.mxu0 %v4100
    %4158 = vmatprep.subr.mxu0 0.0
    %4159 = vmatpush1.msra.mxu0 %v4101
    %4160 = vmatprep.subr.mxu0 0.0
    %4161 = vmatpush1.msra.mxu0 %v4102
    %4162 = vmatprep.subr.mxu0 0.0
    %4163 = vmatpush1.msra.mxu0 %v4103
    %4164 = vmatprep.subr.mxu0 0.0
    %4165 = vmatpush1.msra.mxu0 %v4104
    %4166 = vmatprep.subr.mxu0 0.0
    %4167 = vmatpush1.msra.mxu0 %v4105
    %4168 = vmatprep.subr.mxu0 0.0
    %4169 = vmatpush1.msra.mxu0 %v4106
    %4170 = vmatprep.subr.mxu0 0.0
    %4171 = vmatpush1.msra.mxu0 %v4107
    %4172 = vmatprep.subr.mxu0 0.0
    %4173 = vmatpush1.msra.mxu0 %v4108
    %4174 = vmatprep.mubr.f32.mxu0 %v4070
    %4175 = vmatmul.mubr.f32.gmra.mrb[0].mxu0 %v4069
    %v4176 = vpop.f32.mrb[0].mxu0
    %v4177 = vadd.f32 %v4109, %v4176
    %v4178 = vpop.f32.mrb[0].mxu0
    %4179 = vmatprep.mubr.f32.mxu0 %v4072
    %4180 = vmatmul.mubr.f32.gmra.mrb[0].mxu0 %v4071
    %v4181 = vpop.f32.mrb[0].mxu0
    %v4182 = vadd.f32 %v4109, %v4181
    %v4183 = vpop.f32.mrb[0].mxu0
    %4184 = vmatprep.mubr.f32.mxu0 %v4074
    %4185 = vmatmul.mubr.f32.gmra.mrb[0].mxu0 %v4073
    %v4186 = vpop.f32.mrb[0].mxu0
    %v4187 = vadd.f32 %v4109, %v4186
    %v4188 = vpop.f32.mrb[0].mxu0
    %4189 = vmatprep.mubr.f32.mxu0 %v4076
    %4190 = vmatmul.mubr.f32.gmra.mrb[0].mxu0 %v4075
    %v4191 = vpop.f32.mrb[0].mxu0
    %v4192 = vadd.f32 %v4109, %v4191
    %v4193 = vpop.f32.mrb[0].mxu0
    %4194 = vdwg.mxu0
    %v4195 = vmul.f32 %v4177, 0.5
    %v4196 = vmul.f32 %v4182, 0.5
    %v4197 = vmul.f32 %v4187, 0.5
    %v4198 = vmul.f32 %v4192, 0.5
    %v4199 = vadd.f32 %v3825, %v4195
    %v4200 = vadd.f32 %v3826, %v4196
    %v4201 = vadd.f32 %v3827, %v4197
    %v4202 = vadd.f32 %v3828, %v4198
    %v4203 = vsel %vm25, %v4199, 0.0
    %4204 = vadd.xlane.f32.xlu0 %v4203
    %v4205 = vpop.xlane.xlu0 %4204
    %v4206 = vsel %vm25, %v4200, 0.0
    %4207 = vadd.xlane.f32.xlu0 %v4206
    %v4208 = vpop.xlane.xlu0 %4207
    %v4209 = vsel %vm25, %v4201, 0.0
    %4210 = vadd.xlane.f32.xlu0 %v4209
    %v4211 = vpop.xlane.xlu0 %4210
    %v4212 = vsel %vm25, %v4202, 0.0
    %4213 = vadd.xlane.f32.xlu0 %v4212
    %v4214 = vpop.xlane.xlu0 %4213
    %v4215 = vmul.f32 %v4205, %v38
    %v4216 = vmul.f32 %v4208, %v38
    %v4217 = vmul.f32 %v4211, %v38
    %v4218 = vmul.f32 %v4214, %v38
    %v4219 = vsub.f32 %v4199, %v4215
    %v4220 = vsub.f32 %v4200, %v4216
    %v4221 = vsub.f32 %v4201, %v4217
    %v4222 = vsub.f32 %v4202, %v4218
    %v4223 = vmul.f32 %v4219, %v4219
    %v4224 = vmul.f32 %v4220, %v4220
    %v4225 = vmul.f32 %v4221, %v4221
    %v4226 = vmul.f32 %v4222, %v4222
    %v4227 = vsel %vm25, %v4223, 0.0
    %4228 = vadd.xlane.f32.xlu0 %v4227
    %v4229 = vpop.xlane.xlu0 %4228
    %v4230 = vsel %vm25, %v4224, 0.0
    %4231 = vadd.xlane.f32.xlu0 %v4230
    %v4232 = vpop.xlane.xlu0 %4231
    %v4233 = vsel %vm25, %v4225, 0.0
    %4234 = vadd.xlane.f32.xlu0 %v4233
    %v4235 = vpop.xlane.xlu0 %4234
    %v4236 = vsel %vm25, %v4226, 0.0
    %4237 = vadd.xlane.f32.xlu0 %v4236
    %v4238 = vpop.xlane.xlu0 %4237
    %v4239 = vmul.f32 %v4229, %v38
    %v4240 = vmul.f32 %v4232, %v38
    %v4241 = vmul.f32 %v4235, %v38
    %v4242 = vmul.f32 %v4238, %v38
    %v4243 = vadd.f32 %v4239, 1e-05
    %v4244 = vadd.f32 %v4240, 1e-05
    %v4245 = vadd.f32 %v4241, 1e-05
    %v4246 = vadd.f32 %v4242, 1e-05
    %v4247 = vrsqrt.pop %v4243
    %v4248 = vrsqrt.pop %v4244
    %v4249 = vrsqrt.pop %v4245
    %v4250 = vrsqrt.pop %v4246
    %v4251 = vmul.f32 %v4219, %v4247
    %v4252 = vmul.f32 %v4220, %v4248
    %v4253 = vmul.f32 %v4221, %v4249
    %v4254 = vmul.f32 %v4222, %v4250
    %v4255 = vld [vmem:[%s1 + $0x24] ss:$0 sm:$0xff]
    %v4256 = vmul.f32 %v4251, %v4255
    %v4257 = vmul.f32 %v4252, %v4255
    %v4258 = vmul.f32 %v4253, %v4255
    %v4259 = vmul.f32 %v4254, %v4255
    %v4260 = vld [vmem:[%s1 + $0x25] ss:$0 sm:$0xff]
    %v4261 = vadd.f32 %v4256, %v4260
    %v4262 = vadd.f32 %v4257, %v4260
    %v4263 = vadd.f32 %v4258, %v4260
    %v4264 = vadd.f32 %v4259, %v4260
    %4265 = vst.msk [vmem:[#allocation2] sm:$0xff] %vm25, %v4261
    %4266 = vst.msk [vmem:[#allocation2 + $0x8] sm:$0xff] %vm25, %v4262
    %4267 = vst.msk [vmem:[#allocation2 + $0x10] sm:$0xff] %vm25, %v4263
    %4268 = vst.msk [vmem:[#allocation2 + $0x18] sm:$0xff] %vm25, %v4264
    // Predicated region
    $region22: #{conformer_layer_pallas.1} parent=1 // pred_check
      _
    $region23: #{conformer_layer_pallas.1} parent=1 // pred_check_branch
      %4270 = sbr.rel (0) target = $region25
    $region24: #{conformer_layer_pallas.1} parent=1 // pred_region
      %s4272 = ssub.s32 512, 512
      %4273 = vsyncadd [#allocation3], %s4272
      %s4274 = sshll.u32 [#allocation2], 4
      %s4275 = int_to_ptr.vmem [resolvable:$true] %s4274
      %4280 = dma.vmem_to_hbm [thread:$0]  %s4275, 512, %s5, [#allocation3], 128, 128, 8
    $region25: #{conformer_layer_pallas.1} parent=1 // pred_fallthru
      _
    // Predicated region
    $region26: #{conformer_layer_pallas.1} parent=1 // pred_check
      _
    $region27: #{conformer_layer_pallas.1} parent=1 // pred_check_branch
      %4282 = sbr.rel (0) target = $region29
    $region28: #{conformer_layer_pallas.1} parent=1 // pred_region
      %4283 = dma.done [#allocation3], 512
    $region29: #{conformer_layer_pallas.1} parent=1 // pred_fallthru
      _
    %4284 = vsyncpa [#allocation3], 1

</llo_original>
